<compile_context>
chip_gen: v6e
topology: v6e:2x2x1
jax: 0.10.0
libtpu: 0.0.40
codegen_flags: <defaults>
</compile_context>

<pallas_src>
import numpy as np
import jax
import jax.numpy as jnp
from jax import lax
from jax.experimental import pallas as pl
from jax.experimental.pallas import tpu as pltpu

EPS = 1e-5
KSIZE = 3
STRIDE = 2
NUM_LAYERS = 4


# ------------------------- Pallas kernel (whole network) -------------------------

def _fused_net_kernel(p1_ref, w1_ref, w234_ref, s2_ref, s3_ref, s4_ref, bn_ref, o_ref):
    """Fully fused 4x (conv -> BN(batch stats) -> ReLU), all VMEM-resident.

    p1_ref   : (9*C0, M1)      layer-1 im2col patches, transposed (lanes = M1 = 512)
    w1_ref   : (C, 9*C0)       layer-1 weight matrix
    w234_ref : (3, C, 9*C)     layer-2..4 weight matrices
    s2/3/4   : (9, Min, Mout)  per-tap 0/1 patch-selection matrices (im2col as matmul)
    bn_ref   : (C, 8)          columns [g1, b1, g2, b2, g3, b3, g4, b4]
    o_ref    : (C, M4)         final activations, (channels, pixels)
    """
    def bn_relu(z, layer):
        # Training-mode (biased) batch statistics over the M (lane) axis.
        gamma = bn_ref[:, 2 * layer:2 * layer + 1]           # (C, 1)
        beta = bn_ref[:, 2 * layer + 1:2 * layer + 2]        # (C, 1)
        inv_m = 1.0 / z.shape[1]
        mean = jnp.sum(z, axis=1, keepdims=True) * inv_m
        cen = z - mean
        var = jnp.sum(cen * cen, axis=1, keepdims=True) * inv_m
        scale = gamma * lax.rsqrt(var + EPS)                 # rsqrt -> EUP slot
        return jnp.maximum(cen * scale + beta, 0.0)

    # ---- layer 1: conv as one MXU matmul on pre-extracted patches ----
    z = jnp.dot(w1_ref[...], p1_ref[...], preferred_element_type=jnp.float32)  # (C, M1)
    act = bn_relu(z, 0)

    # ---- layers 2..4: in-kernel im2col via constant selection matmuls ----
    for layer, s_ref in ((1, s2_ref), (2, s3_ref), (3, s4_ref)):
        # q[t][c, m_out] = activation at the input pixel that tap t contributes to m_out
        q = [jnp.dot(act, s_ref[t], preferred_element_type=jnp.float32)
             for t in range(KSIZE * KSIZE)]
        qcat = jnp.concatenate(q, axis=0)                    # (9*C, M_out), rows (tap, c)
        z = jnp.dot(w234_ref[layer - 1], qcat, preferred_element_type=jnp.float32)
        act = bn_relu(z, layer)

    o_ref[...] = act                                         # (C, M4)


def _full_spec(shape):
    return pl.BlockSpec(shape, lambda i: (0,) * len(shape))


def fused_net_call(p1T, w1, w234, s2, s3, s4, bn):
    C = w1.shape[0]
    Mf = s4.shape[2]
    return pl.pallas_call(
        _fused_net_kernel,
        out_shape=jax.ShapeDtypeStruct((C, Mf), jnp.float32),
        grid=(1,),
        in_specs=[_full_spec(a.shape) for a in (p1T, w1, w234, s2, s3, s4, bn)],
        out_specs=_full_spec((C, Mf)),
        compiler_params=pltpu.CompilerParams(dimension_semantics=("arbitrary",)),
    )(p1T, w1, w234, s2, s3, s4, bn)


# ------------------------- JAX / host-side glue -------------------------

def _im2col_T(x_nhwc, ksize=KSIZE, stride=STRIDE):
    """(N,H,W,C) -> (ksize*ksize*C, N*Ho*Wo); rows (ky,kx,c), columns (n,yo,xo)."""
    N, H, W, C = x_nhwc.shape
    Ho = (H - ksize) // stride + 1
    Wo = (W - ksize) // stride + 1
    rows = []
    for ky in range(ksize):
        for kx in range(ksize):
            sl = lax.slice(
                x_nhwc,
                (0, ky, kx, 0),
                (N, ky + stride * (Ho - 1) + 1, kx + stride * (Wo - 1) + 1, C),
                (1, stride, stride, 1),
            )                                                # (N, Ho, Wo, C)
            rows.append(jnp.transpose(sl, (3, 0, 1, 2)).reshape(C, N * Ho * Wo))
    return jnp.concatenate(rows, axis=0), (Ho, Wo)


def _build_selection(n, h_in, w_in, h_out, w_out, ksize=KSIZE, stride=STRIDE):
    """Constant 0/1 matrices turning im2col into MXU matmuls.

    S[t, m_in, m_out] == 1 iff input pixel (img, stride*yo+ky, stride*xo+kx)
    feeds output pixel (img, yo, xo) for tap t = ky*ksize + kx.
    """
    S = np.zeros((ksize * ksize, n * h_in * w_in, n * h_out * w_out), np.float32)
    for ky in range(ksize):
        for kx in range(ksize):
            t = ky * ksize + kx
            for img in range(n):
                for yo in range(h_out):
                    for xo in range(w_out):
                        m_out = (img * h_out + yo) * w_out + xo
                        m_in = (img * h_in + stride * yo + ky) * w_in + (stride * xo + kx)
                        S[t, m_in, m_out] = 1.0
    return S


def _weight_matrix(w_oihw):
    """(Cout, Cin, kh, kw) -> (Cout, kh*kw*Cin); columns ordered (ky, kx, cin)."""
    cout = w_oihw.shape[0]
    return jnp.transpose(w_oihw, (0, 2, 3, 1)).reshape(cout, -1)


def conv_module_forward(x_nchw, params):
    """Forward pass of `conv_module` using ONE fused Pallas kernel for all 4 layers."""
    N = x_nchw.shape[0]
    x_nhwc = jnp.transpose(x_nchw, (0, 2, 3, 1))
    p1T, (h, w) = _im2col_T(x_nhwc)

    # Static output spatial sizes of every layer.
    dims = [(h, w)]
    for _ in range(NUM_LAYERS - 1):
        h = (h - KSIZE) // STRIDE + 1
        w = (w - KSIZE) // STRIDE + 1
        dims.append((h, w))

    w1 = _weight_matrix(params[0][0])
    w234 = jnp.stack([_weight_matrix(p[0]) for p in params[1:]], axis=0)
    # Per-tap patch-selection constants for the in-kernel im2col of layers 2..4.
    sels = [jnp.asarray(_build_selection(N, *dims[i], *dims[i + 1]))
            for i in range(NUM_LAYERS - 1)]
    # gamma/beta of all 4 BN layers packed into one (C, 8) input (single DMA).
    bn = jnp.stack([p[idx] for p in params for idx in (2, 3)], axis=1)
    # NOTE: conv biases params[i][1] are intentionally unused: training-mode
    # BatchNorm subtracts the per-channel batch mean, which cancels them exactly.

    outT = fused_net_call(p1T, w1, w234, *sels, bn)          # (C, N*Hf*Wf)

    cout = w1.shape[0]
    hf, wf = dims[-1]
    # flatten in NCHW order to exactly match torch's x.view(N, -1)
    return outT.reshape(cout, N, hf, wf).transpose(1, 0, 2, 3).reshape(N, -1)


# ------------------------- pure-JAX reference (sanity check) -------------------------

def ref_forward(x, params):
    for (w, b, g, be) in params:
        x = lax.conv_general_dilated(
            x, w, (STRIDE, STRIDE), "VALID", dimension_numbers=("NCHW", "OIHW", "NCHW")
        ) + b[None, :, None, None]
        mean = jnp.mean(x, axis=(0, 2, 3), keepdims=True)
        var = jnp.var(x, axis=(0, 2, 3), keepdims=True)
        x = (x - mean) / jnp.sqrt(var + EPS) * g[None, :, None, None] + be[None, :, None, None]
        x = jnp.maximum(x, 0.0)
    return x.reshape(x.shape[0], -1)


# ------------------------- main -------------------------

if __name__ == "__main__":
    key = jax.random.PRNGKey(0)
    k_x, k1, k2, k3, k4, kb1, kb2, kb3, kb4 = jax.random.split(key, 9)

    # input: N=2, C=16, H=W=33  ->  spatial 16 -> 7 -> 3 -> 1, final output (2, 32)
    x = jax.random.normal(k_x, (2, 16, 33, 33), dtype=jnp.float32)

    def conv_params(kw, kb, cin, cout):
        w = 0.1 * jax.random.normal(kw, (cout, cin, 3, 3), dtype=jnp.float32)
        b = 0.1 * jax.random.normal(kb, (cout,), dtype=jnp.float32)
        # BatchNorm2d default init: weight=1, bias=0
        gamma = jnp.ones((cout,), jnp.float32)
        beta = jnp.zeros((cout,), jnp.float32)
        return (w, b, gamma, beta)

    params = [
        conv_params(k1, kb1, 16, 32),
        conv_params(k2, kb2, 32, 32),
        conv_params(k3, kb3, 32, 32),
        conv_params(k4, kb4, 32, 32),
    ]

    out = jax.jit(conv_module_forward)(x, params)
    out = jax.block_until_ready(out)

    # Reference keeps the conv bias; the fused kernel drops it (training-mode BN cancels it).
    # Tolerance allows for MXU f32 multi-pass rounding and layer-4 BN over only 2 samples.
    ref = ref_forward(x, params)
    assert out.shape == (2, 32), out.shape
    assert jnp.allclose(out, ref, atol=5e-4, rtol=5e-4), (
        float(jnp.max(jnp.abs(out - ref)))
    )

    print("KERNEL_OK")
</pallas_src>

<mosaic_0001>
module attributes {stable_mosaic.version = 11 : i64} {
  func.func @_fused_net_kernel(%arg0: i32, %arg1: memref<144x512xf32, #tpu.memory_space<vmem>>, %arg2: memref<32x144xf32, #tpu.memory_space<vmem>>, %arg3: memref<3x32x288xf32, #tpu.memory_space<vmem>>, %arg4: memref<9x512x98xf32, #tpu.memory_space<vmem>>, %arg5: memref<9x98x18xf32, #tpu.memory_space<vmem>>, %arg6: memref<9x18x2xf32, #tpu.memory_space<vmem>>, %arg7: memref<32x8xf32, #tpu.memory_space<vmem>>, %arg8: memref<32x2xf32, #tpu.memory_space<vmem>>) attributes {dimension_semantics = [#tpu.dimension_semantics<arbitrary>], iteration_bounds = array<i64: 1>, scalar_prefetch = 0 : i64, scratch_operands = 0 : i64, tpu.core_type = #tpu.core_type<tc>, window_params = [{pipeline_mode = #tpu.pipeline_mode<synchronous>, transform_indices = @transform_0, window_bounds = array<i64: 144, 512>}, {pipeline_mode = #tpu.pipeline_mode<synchronous>, transform_indices = @transform_1, window_bounds = array<i64: 32, 144>}, {pipeline_mode = #tpu.pipeline_mode<synchronous>, transform_indices = @transform_2, window_bounds = array<i64: 3, 32, 288>}, {pipeline_mode = #tpu.pipeline_mode<synchronous>, transform_indices = @transform_3, window_bounds = array<i64: 9, 512, 98>}, {pipeline_mode = #tpu.pipeline_mode<synchronous>, transform_indices = @transform_4, window_bounds = array<i64: 9, 98, 18>}, {pipeline_mode = #tpu.pipeline_mode<synchronous>, transform_indices = @transform_5, window_bounds = array<i64: 9, 18, 2>}, {pipeline_mode = #tpu.pipeline_mode<synchronous>, transform_indices = @transform_6, window_bounds = array<i64: 32, 8>}, {pipeline_mode = #tpu.pipeline_mode<synchronous>, transform_indices = @transform_7, window_bounds = array<i64: 32, 2>}]} {
    %c0 = arith.constant 0 : index
    %c0_0 = arith.constant 0 : index
    %0 = vector.load %arg2[%c0, %c0_0] : memref<32x144xf32, #tpu.memory_space<vmem>>, vector<32x144xf32>
    %c0_1 = arith.constant 0 : index
    %c0_2 = arith.constant 0 : index
    %1 = vector.load %arg1[%c0_1, %c0_2] : memref<144x512xf32, #tpu.memory_space<vmem>>, vector<144x512xf32>
    %cst = arith.constant dense<0.000000e+00> : vector<32x512xf32>
    %2 = tpu.matmul %0, %1, %cst {dimension_numbers = #tpu.dot_dimension_numbers<[1], [0], [0], [1], [0, 0, 1, 1], [], []>} : vector<32x144xf32>, vector<144x512xf32>, vector<32x512xf32> -> vector<32x512xf32>
    %c0_3 = arith.constant 0 : index
    %c0_4 = arith.constant 0 : index
    %3 = vector.load %arg7[%c0_3, %c0_4] : memref<32x8xf32, #tpu.memory_space<vmem>>, vector<32x1xf32>
    %c0_5 = arith.constant 0 : index
    %c1 = arith.constant 1 : index
    %4 = vector.load %arg7[%c0_5, %c1] : memref<32x8xf32, #tpu.memory_space<vmem>>, vector<32x1xf32>
    %cst_6 = arith.constant dense<0.000000e+00> : vector<32xf32>
    %5 = vector.multi_reduction <add>, %2, %cst_6 [1] : vector<32x512xf32> to vector<32xf32>
    %6 = vector.shape_cast %5 : vector<32xf32> to vector<32x1xf32>
    %cst_7 = arith.constant 0.001953125 : f32
    %7 = vector.broadcast %cst_7 : f32 to vector<32x1xf32>
    %8 = arith.mulf %6, %7 : vector<32x1xf32>
    %9 = vector.broadcast %8 : vector<32x1xf32> to vector<32x512xf32>
    %10 = arith.subf %2, %9 : vector<32x512xf32>
    %11 = arith.mulf %10, %10 : vector<32x512xf32>
    %cst_8 = arith.constant dense<0.000000e+00> : vector<32xf32>
    %12 = vector.multi_reduction <add>, %11, %cst_8 [1] : vector<32x512xf32> to vector<32xf32>
    %13 = vector.shape_cast %12 : vector<32xf32> to vector<32x1xf32>
    %cst_9 = arith.constant 0.001953125 : f32
    %14 = vector.broadcast %cst_9 : f32 to vector<32x1xf32>
    %15 = arith.mulf %13, %14 : vector<32x1xf32>
    %cst_10 = arith.constant 9.99999974E-6 : f32
    %16 = vector.broadcast %cst_10 : f32 to vector<32x1xf32>
    %17 = arith.addf %15, %16 : vector<32x1xf32>
    %18 = math.rsqrt %17 : vector<32x1xf32>
    %19 = arith.mulf %3, %18 : vector<32x1xf32>
    %20 = vector.broadcast %19 : vector<32x1xf32> to vector<32x512xf32>
    %21 = arith.mulf %10, %20 : vector<32x512xf32>
    %22 = vector.broadcast %4 : vector<32x1xf32> to vector<32x512xf32>
    %23 = arith.addf %21, %22 : vector<32x512xf32>
    %cst_11 = arith.constant 0.000000e+00 : f32
    %24 = vector.broadcast %cst_11 : f32 to vector<32x512xf32>
    %25 = arith.maximumf %23, %24 : vector<32x512xf32>
    %c0_12 = arith.constant 0 : index
    %c0_13 = arith.constant 0 : index
    %c0_14 = arith.constant 0 : index
    %26 = vector.load %arg4[%c0_12, %c0_13, %c0_14] : memref<9x512x98xf32, #tpu.memory_space<vmem>>, vector<1x512x98xf32>
    %27 = vector.shape_cast %26 : vector<1x512x98xf32> to vector<512x98xf32>
    %cst_15 = arith.constant dense<0.000000e+00> : vector<32x98xf32>
    %28 = tpu.matmul %25, %27, %cst_15 {dimension_numbers = #tpu.dot_dimension_numbers<[1], [0], [0], [1], [0, 0, 1, 1], [], []>} : vector<32x512xf32>, vector<512x98xf32>, vector<32x98xf32> -> vector<32x98xf32>
    %c1_16 = arith.constant 1 : index
    %c0_17 = arith.constant 0 : index
    %c0_18 = arith.constant 0 : index
    %29 = vector.load %arg4[%c1_16, %c0_17, %c0_18] : memref<9x512x98xf32, #tpu.memory_space<vmem>>, vector<1x512x98xf32>
    %30 = vector.shape_cast %29 : vector<1x512x98xf32> to vector<512x98xf32>
    %cst_19 = arith.constant dense<0.000000e+00> : vector<32x98xf32>
    %31 = tpu.matmul %25, %30, %cst_19 {dimension_numbers = #tpu.dot_dimension_numbers<[1], [0], [0], [1], [0, 0, 1, 1], [], []>} : vector<32x512xf32>, vector<512x98xf32>, vector<32x98xf32> -> vector<32x98xf32>
    %c2 = arith.constant 2 : index
    %c0_20 = arith.constant 0 : index
    %c0_21 = arith.constant 0 : index
    %32 = vector.load %arg4[%c2, %c0_20, %c0_21] : memref<9x512x98xf32, #tpu.memory_space<vmem>>, vector<1x512x98xf32>
    %33 = vector.shape_cast %32 : vector<1x512x98xf32> to vector<512x98xf32>
    %cst_22 = arith.constant dense<0.000000e+00> : vector<32x98xf32>
    %34 = tpu.matmul %25, %33, %cst_22 {dimension_numbers = #tpu.dot_dimension_numbers<[1], [0], [0], [1], [0, 0, 1, 1], [], []>} : vector<32x512xf32>, vector<512x98xf32>, vector<32x98xf32> -> vector<32x98xf32>
    %c3 = arith.constant 3 : index
    %c0_23 = arith.constant 0 : index
    %c0_24 = arith.constant 0 : index
    %35 = vector.load %arg4[%c3, %c0_23, %c0_24] : memref<9x512x98xf32, #tpu.memory_space<vmem>>, vector<1x512x98xf32>
    %36 = vector.shape_cast %35 : vector<1x512x98xf32> to vector<512x98xf32>
    %cst_25 = arith.constant dense<0.000000e+00> : vector<32x98xf32>
    %37 = tpu.matmul %25, %36, %cst_25 {dimension_numbers = #tpu.dot_dimension_numbers<[1], [0], [0], [1], [0, 0, 1, 1], [], []>} : vector<32x512xf32>, vector<512x98xf32>, vector<32x98xf32> -> vector<32x98xf32>
    %c4 = arith.constant 4 : index
    %c0_26 = arith.constant 0 : index
    %c0_27 = arith.constant 0 : index
    %38 = vector.load %arg4[%c4, %c0_26, %c0_27] : memref<9x512x98xf32, #tpu.memory_space<vmem>>, vector<1x512x98xf32>
    %39 = vector.shape_cast %38 : vector<1x512x98xf32> to vector<512x98xf32>
    %cst_28 = arith.constant dense<0.000000e+00> : vector<32x98xf32>
    %40 = tpu.matmul %25, %39, %cst_28 {dimension_numbers = #tpu.dot_dimension_numbers<[1], [0], [0], [1], [0, 0, 1, 1], [], []>} : vector<32x512xf32>, vector<512x98xf32>, vector<32x98xf32> -> vector<32x98xf32>
    %c5 = arith.constant 5 : index
    %c0_29 = arith.constant 0 : index
    %c0_30 = arith.constant 0 : index
    %41 = vector.load %arg4[%c5, %c0_29, %c0_30] : memref<9x512x98xf32, #tpu.memory_space<vmem>>, vector<1x512x98xf32>
    %42 = vector.shape_cast %41 : vector<1x512x98xf32> to vector<512x98xf32>
    %cst_31 = arith.constant dense<0.000000e+00> : vector<32x98xf32>
    %43 = tpu.matmul %25, %42, %cst_31 {dimension_numbers = #tpu.dot_dimension_numbers<[1], [0], [0], [1], [0, 0, 1, 1], [], []>} : vector<32x512xf32>, vector<512x98xf32>, vector<32x98xf32> -> vector<32x98xf32>
    %c6 = arith.constant 6 : index
    %c0_32 = arith.constant 0 : index
    %c0_33 = arith.constant 0 : index
    %44 = vector.load %arg4[%c6, %c0_32, %c0_33] : memref<9x512x98xf32, #tpu.memory_space<vmem>>, vector<1x512x98xf32>
    %45 = vector.shape_cast %44 : vector<1x512x98xf32> to vector<512x98xf32>
    %cst_34 = arith.constant dense<0.000000e+00> : vector<32x98xf32>
    %46 = tpu.matmul %25, %45, %cst_34 {dimension_numbers = #tpu.dot_dimension_numbers<[1], [0], [0], [1], [0, 0, 1, 1], [], []>} : vector<32x512xf32>, vector<512x98xf32>, vector<32x98xf32> -> vector<32x98xf32>
    %c7 = arith.constant 7 : index
    %c0_35 = arith.constant 0 : index
    %c0_36 = arith.constant 0 : index
    %47 = vector.load %arg4[%c7, %c0_35, %c0_36] : memref<9x512x98xf32, #tpu.memory_space<vmem>>, vector<1x512x98xf32>
    %48 = vector.shape_cast %47 : vector<1x512x98xf32> to vector<512x98xf32>
    %cst_37 = arith.constant dense<0.000000e+00> : vector<32x98xf32>
    %49 = tpu.matmul %25, %48, %cst_37 {dimension_numbers = #tpu.dot_dimension_numbers<[1], [0], [0], [1], [0, 0, 1, 1], [], []>} : vector<32x512xf32>, vector<512x98xf32>, vector<32x98xf32> -> vector<32x98xf32>
    %c8 = arith.constant 8 : index
    %c0_38 = arith.constant 0 : index
    %c0_39 = arith.constant 0 : index
    %50 = vector.load %arg4[%c8, %c0_38, %c0_39] : memref<9x512x98xf32, #tpu.memory_space<vmem>>, vector<1x512x98xf32>
    %51 = vector.shape_cast %50 : vector<1x512x98xf32> to vector<512x98xf32>
    %cst_40 = arith.constant dense<0.000000e+00> : vector<32x98xf32>
    %52 = tpu.matmul %25, %51, %cst_40 {dimension_numbers = #tpu.dot_dimension_numbers<[1], [0], [0], [1], [0, 0, 1, 1], [], []>} : vector<32x512xf32>, vector<512x98xf32>, vector<32x98xf32> -> vector<32x98xf32>
    %53 = tpu.concatenate %28, %31, %34, %37, %40, %43, %46, %49, %52 in 0 : vector<32x98xf32>, vector<32x98xf32>, vector<32x98xf32>, vector<32x98xf32>, vector<32x98xf32>, vector<32x98xf32>, vector<32x98xf32>, vector<32x98xf32>, vector<32x98xf32> -> vector<288x98xf32>
    %c0_41 = arith.constant 0 : index
    %c0_42 = arith.constant 0 : index
    %c0_43 = arith.constant 0 : index
    %54 = vector.load %arg3[%c0_41, %c0_42, %c0_43] : memref<3x32x288xf32, #tpu.memory_space<vmem>>, vector<1x32x288xf32>
    %55 = vector.shape_cast %54 : vector<1x32x288xf32> to vector<32x288xf32>
    %cst_44 = arith.constant dense<0.000000e+00> : vector<32x98xf32>
    %56 = tpu.matmul %55, %53, %cst_44 {dimension_numbers = #tpu.dot_dimension_numbers<[1], [0], [0], [1], [0, 0, 1, 1], [], []>} : vector<32x288xf32>, vector<288x98xf32>, vector<32x98xf32> -> vector<32x98xf32>
    %c0_45 = arith.constant 0 : index
    %c2_46 = arith.constant 2 : index
    %57 = vector.load %arg7[%c0_45, %c2_46] : memref<32x8xf32, #tpu.memory_space<vmem>>, vector<32x1xf32>
    %c0_47 = arith.constant 0 : index
    %c3_48 = arith.constant 3 : index
    %58 = vector.load %arg7[%c0_47, %c3_48] : memref<32x8xf32, #tpu.memory_space<vmem>>, vector<32x1xf32>
    %cst_49 = arith.constant dense<0.000000e+00> : vector<32xf32>
    %59 = vector.multi_reduction <add>, %56, %cst_49 [1] : vector<32x98xf32> to vector<32xf32>
    %60 = vector.shape_cast %59 : vector<32xf32> to vector<32x1xf32>
    %cst_50 = arith.constant 0.0102040814 : f32
    %61 = vector.broadcast %cst_50 : f32 to vector<32x1xf32>
    %62 = arith.mulf %60, %61 : vector<32x1xf32>
    %63 = vector.broadcast %62 : vector<32x1xf32> to vector<32x98xf32>
    %64 = arith.subf %56, %63 : vector<32x98xf32>
    %65 = arith.mulf %64, %64 : vector<32x98xf32>
    %cst_51 = arith.constant dense<0.000000e+00> : vector<32xf32>
    %66 = vector.multi_reduction <add>, %65, %cst_51 [1] : vector<32x98xf32> to vector<32xf32>
    %67 = vector.shape_cast %66 : vector<32xf32> to vector<32x1xf32>
    %cst_52 = arith.constant 0.0102040814 : f32
    %68 = vector.broadcast %cst_52 : f32 to vector<32x1xf32>
    %69 = arith.mulf %67, %68 : vector<32x1xf32>
    %cst_53 = arith.constant 9.99999974E-6 : f32
    %70 = vector.broadcast %cst_53 : f32 to vector<32x1xf32>
    %71 = arith.addf %69, %70 : vector<32x1xf32>
    %72 = math.rsqrt %71 : vector<32x1xf32>
    %73 = arith.mulf %57, %72 : vector<32x1xf32>
    %74 = vector.broadcast %73 : vector<32x1xf32> to vector<32x98xf32>
    %75 = arith.mulf %64, %74 : vector<32x98xf32>
    %76 = vector.broadcast %58 : vector<32x1xf32> to vector<32x98xf32>
    %77 = arith.addf %75, %76 : vector<32x98xf32>
    %cst_54 = arith.constant 0.000000e+00 : f32
    %78 = vector.broadcast %cst_54 : f32 to vector<32x98xf32>
    %79 = arith.maximumf %77, %78 : vector<32x98xf32>
    %c0_55 = arith.constant 0 : index
    %c0_56 = arith.constant 0 : index
    %c0_57 = arith.constant 0 : index
    %80 = vector.load %arg5[%c0_55, %c0_56, %c0_57] : memref<9x98x18xf32, #tpu.memory_space<vmem>>, vector<1x98x18xf32>
    %81 = vector.shape_cast %80 : vector<1x98x18xf32> to vector<98x18xf32>
    %cst_58 = arith.constant dense<0.000000e+00> : vector<32x18xf32>
    %82 = tpu.matmul %79, %81, %cst_58 {dimension_numbers = #tpu.dot_dimension_numbers<[1], [0], [0], [1], [0, 0, 1, 1], [], []>} : vector<32x98xf32>, vector<98x18xf32>, vector<32x18xf32> -> vector<32x18xf32>
    %c1_59 = arith.constant 1 : index
    %c0_60 = arith.constant 0 : index
    %c0_61 = arith.constant 0 : index
    %83 = vector.load %arg5[%c1_59, %c0_60, %c0_61] : memref<9x98x18xf32, #tpu.memory_space<vmem>>, vector<1x98x18xf32>
    %84 = vector.shape_cast %83 : vector<1x98x18xf32> to vector<98x18xf32>
    %cst_62 = arith.constant dense<0.000000e+00> : vector<32x18xf32>
    %85 = tpu.matmul %79, %84, %cst_62 {dimension_numbers = #tpu.dot_dimension_numbers<[1], [0], [0], [1], [0, 0, 1, 1], [], []>} : vector<32x98xf32>, vector<98x18xf32>, vector<32x18xf32> -> vector<32x18xf32>
    %c2_63 = arith.constant 2 : index
    %c0_64 = arith.constant 0 : index
    %c0_65 = arith.constant 0 : index
    %86 = vector.load %arg5[%c2_63, %c0_64, %c0_65] : memref<9x98x18xf32, #tpu.memory_space<vmem>>, vector<1x98x18xf32>
    %87 = vector.shape_cast %86 : vector<1x98x18xf32> to vector<98x18xf32>
    %cst_66 = arith.constant dense<0.000000e+00> : vector<32x18xf32>
    %88 = tpu.matmul %79, %87, %cst_66 {dimension_numbers = #tpu.dot_dimension_numbers<[1], [0], [0], [1], [0, 0, 1, 1], [], []>} : vector<32x98xf32>, vector<98x18xf32>, vector<32x18xf32> -> vector<32x18xf32>
    %c3_67 = arith.constant 3 : index
    %c0_68 = arith.constant 0 : index
    %c0_69 = arith.constant 0 : index
    %89 = vector.load %arg5[%c3_67, %c0_68, %c0_69] : memref<9x98x18xf32, #tpu.memory_space<vmem>>, vector<1x98x18xf32>
    %90 = vector.shape_cast %89 : vector<1x98x18xf32> to vector<98x18xf32>
    %cst_70 = arith.constant dense<0.000000e+00> : vector<32x18xf32>
    %91 = tpu.matmul %79, %90, %cst_70 {dimension_numbers = #tpu.dot_dimension_numbers<[1], [0], [0], [1], [0, 0, 1, 1], [], []>} : vector<32x98xf32>, vector<98x18xf32>, vector<32x18xf32> -> vector<32x18xf32>
    %c4_71 = arith.constant 4 : index
    %c0_72 = arith.constant 0 : index
    %c0_73 = arith.constant 0 : index
    %92 = vector.load %arg5[%c4_71, %c0_72, %c0_73] : memref<9x98x18xf32, #tpu.memory_space<vmem>>, vector<1x98x18xf32>
    %93 = vector.shape_cast %92 : vector<1x98x18xf32> to vector<98x18xf32>
    %cst_74 = arith.constant dense<0.000000e+00> : vector<32x18xf32>
    %94 = tpu.matmul %79, %93, %cst_74 {dimension_numbers = #tpu.dot_dimension_numbers<[1], [0], [0], [1], [0, 0, 1, 1], [], []>} : vector<32x98xf32>, vector<98x18xf32>, vector<32x18xf32> -> vector<32x18xf32>
    %c5_75 = arith.constant 5 : index
    %c0_76 = arith.constant 0 : index
    %c0_77 = arith.constant 0 : index
    %95 = vector.load %arg5[%c5_75, %c0_76, %c0_77] : memref<9x98x18xf32, #tpu.memory_space<vmem>>, vector<1x98x18xf32>
    %96 = vector.shape_cast %95 : vector<1x98x18xf32> to vector<98x18xf32>
    %cst_78 = arith.constant dense<0.000000e+00> : vector<32x18xf32>
    %97 = tpu.matmul %79, %96, %cst_78 {dimension_numbers = #tpu.dot_dimension_numbers<[1], [0], [0], [1], [0, 0, 1, 1], [], []>} : vector<32x98xf32>, vector<98x18xf32>, vector<32x18xf32> -> vector<32x18xf32>
    %c6_79 = arith.constant 6 : index
    %c0_80 = arith.constant 0 : index
    %c0_81 = arith.constant 0 : index
    %98 = vector.load %arg5[%c6_79, %c0_80, %c0_81] : memref<9x98x18xf32, #tpu.memory_space<vmem>>, vector<1x98x18xf32>
    %99 = vector.shape_cast %98 : vector<1x98x18xf32> to vector<98x18xf32>
    %cst_82 = arith.constant dense<0.000000e+00> : vector<32x18xf32>
    %100 = tpu.matmul %79, %99, %cst_82 {dimension_numbers = #tpu.dot_dimension_numbers<[1], [0], [0], [1], [0, 0, 1, 1], [], []>} : vector<32x98xf32>, vector<98x18xf32>, vector<32x18xf32> -> vector<32x18xf32>
    %c7_83 = arith.constant 7 : index
    %c0_84 = arith.constant 0 : index
    %c0_85 = arith.constant 0 : index
    %101 = vector.load %arg5[%c7_83, %c0_84, %c0_85] : memref<9x98x18xf32, #tpu.memory_space<vmem>>, vector<1x98x18xf32>
    %102 = vector.shape_cast %101 : vector<1x98x18xf32> to vector<98x18xf32>
    %cst_86 = arith.constant dense<0.000000e+00> : vector<32x18xf32>
    %103 = tpu.matmul %79, %102, %cst_86 {dimension_numbers = #tpu.dot_dimension_numbers<[1], [0], [0], [1], [0, 0, 1, 1], [], []>} : vector<32x98xf32>, vector<98x18xf32>, vector<32x18xf32> -> vector<32x18xf32>
    %c8_87 = arith.constant 8 : index
    %c0_88 = arith.constant 0 : index
    %c0_89 = arith.constant 0 : index
    %104 = vector.load %arg5[%c8_87, %c0_88, %c0_89] : memref<9x98x18xf32, #tpu.memory_space<vmem>>, vector<1x98x18xf32>
    %105 = vector.shape_cast %104 : vector<1x98x18xf32> to vector<98x18xf32>
    %cst_90 = arith.constant dense<0.000000e+00> : vector<32x18xf32>
    %106 = tpu.matmul %79, %105, %cst_90 {dimension_numbers = #tpu.dot_dimension_numbers<[1], [0], [0], [1], [0, 0, 1, 1], [], []>} : vector<32x98xf32>, vector<98x18xf32>, vector<32x18xf32> -> vector<32x18xf32>
    %107 = tpu.concatenate %82, %85, %88, %91, %94, %97, %100, %103, %106 in 0 : vector<32x18xf32>, vector<32x18xf32>, vector<32x18xf32>, vector<32x18xf32>, vector<32x18xf32>, vector<32x18xf32>, vector<32x18xf32>, vector<32x18xf32>, vector<32x18xf32> -> vector<288x18xf32>
    %c1_91 = arith.constant 1 : index
    %c0_92 = arith.constant 0 : index
    %c0_93 = arith.constant 0 : index
    %108 = vector.load %arg3[%c1_91, %c0_92, %c0_93] : memref<3x32x288xf32, #tpu.memory_space<vmem>>, vector<1x32x288xf32>
    %109 = vector.shape_cast %108 : vector<1x32x288xf32> to vector<32x288xf32>
    %cst_94 = arith.constant dense<0.000000e+00> : vector<32x18xf32>
    %110 = tpu.matmul %109, %107, %cst_94 {dimension_numbers = #tpu.dot_dimension_numbers<[1], [0], [0], [1], [0, 0, 1, 1], [], []>} : vector<32x288xf32>, vector<288x18xf32>, vector<32x18xf32> -> vector<32x18xf32>
    %c0_95 = arith.constant 0 : index
    %c4_96 = arith.constant 4 : index
    %111 = vector.load %arg7[%c0_95, %c4_96] : memref<32x8xf32, #tpu.memory_space<vmem>>, vector<32x1xf32>
    %c0_97 = arith.constant 0 : index
    %c5_98 = arith.constant 5 : index
    %112 = vector.load %arg7[%c0_97, %c5_98] : memref<32x8xf32, #tpu.memory_space<vmem>>, vector<32x1xf32>
    %cst_99 = arith.constant dense<0.000000e+00> : vector<32xf32>
    %113 = vector.multi_reduction <add>, %110, %cst_99 [1] : vector<32x18xf32> to vector<32xf32>
    %114 = vector.shape_cast %113 : vector<32xf32> to vector<32x1xf32>
    %cst_100 = arith.constant 0.055555556 : f32
    %115 = vector.broadcast %cst_100 : f32 to vector<32x1xf32>
    %116 = arith.mulf %114, %115 : vector<32x1xf32>
    %117 = vector.broadcast %116 : vector<32x1xf32> to vector<32x18xf32>
    %118 = arith.subf %110, %117 : vector<32x18xf32>
    %119 = arith.mulf %118, %118 : vector<32x18xf32>
    %cst_101 = arith.constant dense<0.000000e+00> : vector<32xf32>
    %120 = vector.multi_reduction <add>, %119, %cst_101 [1] : vector<32x18xf32> to vector<32xf32>
    %121 = vector.shape_cast %120 : vector<32xf32> to vector<32x1xf32>
    %cst_102 = arith.constant 0.055555556 : f32
    %122 = vector.broadcast %cst_102 : f32 to vector<32x1xf32>
    %123 = arith.mulf %121, %122 : vector<32x1xf32>
    %cst_103 = arith.constant 9.99999974E-6 : f32
    %124 = vector.broadcast %cst_103 : f32 to vector<32x1xf32>
    %125 = arith.addf %123, %124 : vector<32x1xf32>
    %126 = math.rsqrt %125 : vector<32x1xf32>
    %127 = arith.mulf %111, %126 : vector<32x1xf32>
    %128 = vector.broadcast %127 : vector<32x1xf32> to vector<32x18xf32>
    %129 = arith.mulf %118, %128 : vector<32x18xf32>
    %130 = vector.broadcast %112 : vector<32x1xf32> to vector<32x18xf32>
    %131 = arith.addf %129, %130 : vector<32x18xf32>
    %cst_104 = arith.constant 0.000000e+00 : f32
    %132 = vector.broadcast %cst_104 : f32 to vector<32x18xf32>
    %133 = arith.maximumf %131, %132 : vector<32x18xf32>
    %c0_105 = arith.constant 0 : index
    %c0_106 = arith.constant 0 : index
    %c0_107 = arith.constant 0 : index
    %134 = vector.load %arg6[%c0_105, %c0_106, %c0_107] : memref<9x18x2xf32, #tpu.memory_space<vmem>>, vector<1x18x2xf32>
    %135 = vector.shape_cast %134 : vector<1x18x2xf32> to vector<18x2xf32>
    %cst_108 = arith.constant dense<0.000000e+00> : vector<32x2xf32>
    %136 = tpu.matmul %133, %135, %cst_108 {dimension_numbers = #tpu.dot_dimension_numbers<[1], [0], [0], [1], [0, 0, 1, 1], [], []>} : vector<32x18xf32>, vector<18x2xf32>, vector<32x2xf32> -> vector<32x2xf32>
    %c1_109 = arith.constant 1 : index
    %c0_110 = arith.constant 0 : index
    %c0_111 = arith.constant 0 : index
    %137 = vector.load %arg6[%c1_109, %c0_110, %c0_111] : memref<9x18x2xf32, #tpu.memory_space<vmem>>, vector<1x18x2xf32>
    %138 = vector.shape_cast %137 : vector<1x18x2xf32> to vector<18x2xf32>
    %cst_112 = arith.constant dense<0.000000e+00> : vector<32x2xf32>
    %139 = tpu.matmul %133, %138, %cst_112 {dimension_numbers = #tpu.dot_dimension_numbers<[1], [0], [0], [1], [0, 0, 1, 1], [], []>} : vector<32x18xf32>, vector<18x2xf32>, vector<32x2xf32> -> vector<32x2xf32>
    %c2_113 = arith.constant 2 : index
    %c0_114 = arith.constant 0 : index
    %c0_115 = arith.constant 0 : index
    %140 = vector.load %arg6[%c2_113, %c0_114, %c0_115] : memref<9x18x2xf32, #tpu.memory_space<vmem>>, vector<1x18x2xf32>
    %141 = vector.shape_cast %140 : vector<1x18x2xf32> to vector<18x2xf32>
    %cst_116 = arith.constant dense<0.000000e+00> : vector<32x2xf32>
    %142 = tpu.matmul %133, %141, %cst_116 {dimension_numbers = #tpu.dot_dimension_numbers<[1], [0], [0], [1], [0, 0, 1, 1], [], []>} : vector<32x18xf32>, vector<18x2xf32>, vector<32x2xf32> -> vector<32x2xf32>
    %c3_117 = arith.constant 3 : index
    %c0_118 = arith.constant 0 : index
    %c0_119 = arith.constant 0 : index
    %143 = vector.load %arg6[%c3_117, %c0_118, %c0_119] : memref<9x18x2xf32, #tpu.memory_space<vmem>>, vector<1x18x2xf32>
    %144 = vector.shape_cast %143 : vector<1x18x2xf32> to vector<18x2xf32>
    %cst_120 = arith.constant dense<0.000000e+00> : vector<32x2xf32>
    %145 = tpu.matmul %133, %144, %cst_120 {dimension_numbers = #tpu.dot_dimension_numbers<[1], [0], [0], [1], [0, 0, 1, 1], [], []>} : vector<32x18xf32>, vector<18x2xf32>, vector<32x2xf32> -> vector<32x2xf32>
    %c4_121 = arith.constant 4 : index
    %c0_122 = arith.constant 0 : index
    %c0_123 = arith.constant 0 : index
    %146 = vector.load %arg6[%c4_121, %c0_122, %c0_123] : memref<9x18x2xf32, #tpu.memory_space<vmem>>, vector<1x18x2xf32>
    %147 = vector.shape_cast %146 : vector<1x18x2xf32> to vector<18x2xf32>
    %cst_124 = arith.constant dense<0.000000e+00> : vector<32x2xf32>
    %148 = tpu.matmul %133, %147, %cst_124 {dimension_numbers = #tpu.dot_dimension_numbers<[1], [0], [0], [1], [0, 0, 1, 1], [], []>} : vector<32x18xf32>, vector<18x2xf32>, vector<32x2xf32> -> vector<32x2xf32>
    %c5_125 = arith.constant 5 : index
    %c0_126 = arith.constant 0 : index
    %c0_127 = arith.constant 0 : index
    %149 = vector.load %arg6[%c5_125, %c0_126, %c0_127] : memref<9x18x2xf32, #tpu.memory_space<vmem>>, vector<1x18x2xf32>
    %150 = vector.shape_cast %149 : vector<1x18x2xf32> to vector<18x2xf32>
    %cst_128 = arith.constant dense<0.000000e+00> : vector<32x2xf32>
    %151 = tpu.matmul %133, %150, %cst_128 {dimension_numbers = #tpu.dot_dimension_numbers<[1], [0], [0], [1], [0, 0, 1, 1], [], []>} : vector<32x18xf32>, vector<18x2xf32>, vector<32x2xf32> -> vector<32x2xf32>
    %c6_129 = arith.constant 6 : index
    %c0_130 = arith.constant 0 : index
    %c0_131 = arith.constant 0 : index
    %152 = vector.load %arg6[%c6_129, %c0_130, %c0_131] : memref<9x18x2xf32, #tpu.memory_space<vmem>>, vector<1x18x2xf32>
    %153 = vector.shape_cast %152 : vector<1x18x2xf32> to vector<18x2xf32>
    %cst_132 = arith.constant dense<0.000000e+00> : vector<32x2xf32>
    %154 = tpu.matmul %133, %153, %cst_132 {dimension_numbers = #tpu.dot_dimension_numbers<[1], [0], [0], [1], [0, 0, 1, 1], [], []>} : vector<32x18xf32>, vector<18x2xf32>, vector<32x2xf32> -> vector<32x2xf32>
    %c7_133 = arith.constant 7 : index
    %c0_134 = arith.constant 0 : index
    %c0_135 = arith.constant 0 : index
    %155 = vector.load %arg6[%c7_133, %c0_134, %c0_135] : memref<9x18x2xf32, #tpu.memory_space<vmem>>, vector<1x18x2xf32>
    %156 = vector.shape_cast %155 : vector<1x18x2xf32> to vector<18x2xf32>
    %cst_136 = arith.constant dense<0.000000e+00> : vector<32x2xf32>
    %157 = tpu.matmul %133, %156, %cst_136 {dimension_numbers = #tpu.dot_dimension_numbers<[1], [0], [0], [1], [0, 0, 1, 1], [], []>} : vector<32x18xf32>, vector<18x2xf32>, vector<32x2xf32> -> vector<32x2xf32>
    %c8_137 = arith.constant 8 : index
    %c0_138 = arith.constant 0 : index
    %c0_139 = arith.constant 0 : index
    %158 = vector.load %arg6[%c8_137, %c0_138, %c0_139] : memref<9x18x2xf32, #tpu.memory_space<vmem>>, vector<1x18x2xf32>
    %159 = vector.shape_cast %158 : vector<1x18x2xf32> to vector<18x2xf32>
    %cst_140 = arith.constant dense<0.000000e+00> : vector<32x2xf32>
    %160 = tpu.matmul %133, %159, %cst_140 {dimension_numbers = #tpu.dot_dimension_numbers<[1], [0], [0], [1], [0, 0, 1, 1], [], []>} : vector<32x18xf32>, vector<18x2xf32>, vector<32x2xf32> -> vector<32x2xf32>
    %161 = tpu.concatenate %136, %139, %142, %145, %148, %151, %154, %157, %160 in 0 : vector<32x2xf32>, vector<32x2xf32>, vector<32x2xf32>, vector<32x2xf32>, vector<32x2xf32>, vector<32x2xf32>, vector<32x2xf32>, vector<32x2xf32>, vector<32x2xf32> -> vector<288x2xf32>
    %c2_141 = arith.constant 2 : index
    %c0_142 = arith.constant 0 : index
    %c0_143 = arith.constant 0 : index
    %162 = vector.load %arg3[%c2_141, %c0_142, %c0_143] : memref<3x32x288xf32, #tpu.memory_space<vmem>>, vector<1x32x288xf32>
    %163 = vector.shape_cast %162 : vector<1x32x288xf32> to vector<32x288xf32>
    %cst_144 = arith.constant dense<0.000000e+00> : vector<32x2xf32>
    %164 = tpu.matmul %163, %161, %cst_144 {dimension_numbers = #tpu.dot_dimension_numbers<[1], [0], [0], [1], [0, 0, 1, 1], [], []>} : vector<32x288xf32>, vector<288x2xf32>, vector<32x2xf32> -> vector<32x2xf32>
    %c0_145 = arith.constant 0 : index
    %c6_146 = arith.constant 6 : index
    %165 = vector.load %arg7[%c0_145, %c6_146] : memref<32x8xf32, #tpu.memory_space<vmem>>, vector<32x1xf32>
    %c0_147 = arith.constant 0 : index
    %c7_148 = arith.constant 7 : index
    %166 = vector.load %arg7[%c0_147, %c7_148] : memref<32x8xf32, #tpu.memory_space<vmem>>, vector<32x1xf32>
    %cst_149 = arith.constant dense<0.000000e+00> : vector<32xf32>
    %167 = vector.multi_reduction <add>, %164, %cst_149 [1] : vector<32x2xf32> to vector<32xf32>
    %168 = vector.shape_cast %167 : vector<32xf32> to vector<32x1xf32>
    %cst_150 = arith.constant 5.000000e-01 : f32
    %169 = vector.broadcast %cst_150 : f32 to vector<32x1xf32>
    %170 = arith.mulf %168, %169 : vector<32x1xf32>
    %171 = vector.broadcast %170 : vector<32x1xf32> to vector<32x2xf32>
    %172 = arith.subf %164, %171 : vector<32x2xf32>
    %173 = arith.mulf %172, %172 : vector<32x2xf32>
    %cst_151 = arith.constant dense<0.000000e+00> : vector<32xf32>
    %174 = vector.multi_reduction <add>, %173, %cst_151 [1] : vector<32x2xf32> to vector<32xf32>
    %175 = vector.shape_cast %174 : vector<32xf32> to vector<32x1xf32>
    %cst_152 = arith.constant 5.000000e-01 : f32
    %176 = vector.broadcast %cst_152 : f32 to vector<32x1xf32>
    %177 = arith.mulf %175, %176 : vector<32x1xf32>
    %cst_153 = arith.constant 9.99999974E-6 : f32
    %178 = vector.broadcast %cst_153 : f32 to vector<32x1xf32>
    %179 = arith.addf %177, %178 : vector<32x1xf32>
    %180 = math.rsqrt %179 : vector<32x1xf32>
    %181 = arith.mulf %165, %180 : vector<32x1xf32>
    %182 = vector.broadcast %181 : vector<32x1xf32> to vector<32x2xf32>
    %183 = arith.mulf %172, %182 : vector<32x2xf32>
    %184 = vector.broadcast %166 : vector<32x1xf32> to vector<32x2xf32>
    %185 = arith.addf %183, %184 : vector<32x2xf32>
    %cst_154 = arith.constant 0.000000e+00 : f32
    %186 = vector.broadcast %cst_154 : f32 to vector<32x2xf32>
    %187 = arith.maximumf %185, %186 : vector<32x2xf32>
    %c0_155 = arith.constant 0 : index
    %c0_156 = arith.constant 0 : index
    %188 = vector.load %arg8[%c0_155, %c0_156] : memref<32x2xf32, #tpu.memory_space<vmem>>, vector<32x2xf32>
    tpu.vector_store %arg8[%c0_155, %c0_156], %187 {strides = array<i32>} : memref<32x2xf32, #tpu.memory_space<vmem>>, vector<32x2xf32>,
    return
  }
  func.func @transform_0(%arg0: i32) -> (i32, i32) {
    %c0_i32 = arith.constant 0 : i32
    %c0_i32_0 = arith.constant 0 : i32
    %c0_i32_1 = arith.constant 0 : i32
    return %c0_i32, %c0_i32_0 : i32, i32
  }
  func.func @transform_1(%arg0: i32) -> (i32, i32) {
    %c0_i32 = arith.constant 0 : i32
    %c0_i32_0 = arith.constant 0 : i32
    %c0_i32_1 = arith.constant 0 : i32
    return %c0_i32, %c0_i32_0 : i32, i32
  }
  func.func @transform_2(%arg0: i32) -> (i32, i32, i32) {
    %c0_i32 = arith.constant 0 : i32
    %c0_i32_0 = arith.constant 0 : i32
    %c0_i32_1 = arith.constant 0 : i32
    %c0_i32_2 = arith.constant 0 : i32
    return %c0_i32, %c0_i32_0, %c0_i32_1 : i32, i32, i32
  }
  func.func @transform_3(%arg0: i32) -> (i32, i32, i32) {
    %c0_i32 = arith.constant 0 : i32
    %c0_i32_0 = arith.constant 0 : i32
    %c0_i32_1 = arith.constant 0 : i32
    %c0_i32_2 = arith.constant 0 : i32
    return %c0_i32, %c0_i32_0, %c0_i32_1 : i32, i32, i32
  }
  func.func @transform_4(%arg0: i32) -> (i32, i32, i32) {
    %c0_i32 = arith.constant 0 : i32
    %c0_i32_0 = arith.constant 0 : i32
    %c0_i32_1 = arith.constant 0 : i32
    %c0_i32_2 = arith.constant 0 : i32
    return %c0_i32, %c0_i32_0, %c0_i32_1 : i32, i32, i32
  }
  func.func @transform_5(%arg0: i32) -> (i32, i32, i32) {
    %c0_i32 = arith.constant 0 : i32
    %c0_i32_0 = arith.constant 0 : i32
    %c0_i32_1 = arith.constant 0 : i32
    %c0_i32_2 = arith.constant 0 : i32
    return %c0_i32, %c0_i32_0, %c0_i32_1 : i32, i32, i32
  }
  func.func @transform_6(%arg0: i32) -> (i32, i32) {
    %c0_i32 = arith.constant 0 : i32
    %c0_i32_0 = arith.constant 0 : i32
    %c0_i32_1 = arith.constant 0 : i32
    return %c0_i32, %c0_i32_0 : i32, i32
  }
  func.func @transform_7(%arg0: i32) -> (i32, i32) {
    %c0_i32 = arith.constant 0 : i32
    %c0_i32_0 = arith.constant 0 : i32
    %c0_i32_1 = arith.constant 0 : i32
    return %c0_i32, %c0_i32_0 : i32, i32
  }
}

</mosaic_0001>

<llo_original>
// kernel: conv_module_forward.1
$region0: #{conv_module_forward.1}
  #allocation0 [shape = 'u32[]', space=smem, size = 0x4, offset = 0x4, fixed_abs, tag = 'smem constant byte address 0x4 - core index']
  #allocation1 [shape = 'u32[144,128]{1,0:T(1,128)}', space=vmem, size = 0x12000, scoped, tag = 'internal scratch']
  %s0 = inlined_call_operand.vmem [shape: f32[144,512], index: 0, kind: input, shape index: {}]
  %s1 = inlined_call_operand.vmem [shape: f32[32,144], index: 1, kind: input, shape index: {}]
  %s2 = inlined_call_operand.vmem [shape: f32[3,32,288], index: 2, kind: input, shape index: {}]
  %s3 = inlined_call_operand.vmem [shape: f32[9,512,98], index: 3, kind: input, shape index: {}]
  %s4 = inlined_call_operand.vmem [shape: f32[9,98,18], index: 4, kind: input, shape index: {}]
  %s5 = inlined_call_operand.vmem [shape: f32[9,18,2], index: 5, kind: input, shape index: {}]
  %s6 = inlined_call_operand.vmem [shape: f32[32,8], index: 6, kind: input, shape index: {}]
  %s7 = inlined_call_operand.vmem [shape: f32[32,2], index: 7, kind: output, shape index: {}]
  %s8 = sld [smem:[#allocation0]]
  $region38: #{conv_module_forward.1} parent=0
    _
  %s10 = ssub.s32 1, %s8
  %s11 = scalar_select 0, %s10, %s8
  // Predicated region
  $region2: #{conv_module_forward.1} parent=0 // pred_check
    _
  $region3: #{conv_module_forward.1} parent=0 // pred_check_branch
    %13 = sbr.rel (0) target = $region5
  $region4: #{conv_module_forward.1} parent=0 // pred_region
    _
  $region5: #{conv_module_forward.1} parent=0 // pred_fallthru
    _
  // Predicated region
  $region6: #{conv_module_forward.1} parent=0 // pred_check
    _
  $region7: #{conv_module_forward.1} parent=0 // pred_check_branch
    %15 = sbr.rel (0) target = $region9
  $region8: #{conv_module_forward.1} parent=0 // pred_region
    _
  $region9: #{conv_module_forward.1} parent=0 // pred_fallthru
    _
  // Predicated region
  $region10: #{conv_module_forward.1} parent=0 // pred_check
    _
  $region11: #{conv_module_forward.1} parent=0 // pred_check_branch
    %17 = sbr.rel (0) target = $region13
  $region12: #{conv_module_forward.1} parent=0 // pred_region
    _
  $region13: #{conv_module_forward.1} parent=0 // pred_fallthru
    _
  // Predicated region
  $region14: #{conv_module_forward.1} parent=0 // pred_check
    _
  $region15: #{conv_module_forward.1} parent=0 // pred_check_branch
    %19 = sbr.rel (0) target = $region17
  $region16: #{conv_module_forward.1} parent=0 // pred_region
    _
  $region17: #{conv_module_forward.1} parent=0 // pred_fallthru
    _
  // Predicated region
  $region18: #{conv_module_forward.1} parent=0 // pred_check
    _
  $region19: #{conv_module_forward.1} parent=0 // pred_check_branch
    %21 = sbr.rel (0) target = $region21
  $region20: #{conv_module_forward.1} parent=0 // pred_region
    _
  $region21: #{conv_module_forward.1} parent=0 // pred_fallthru
    _
  // Predicated region
  $region22: #{conv_module_forward.1} parent=0 // pred_check
    _
  $region23: #{conv_module_forward.1} parent=0 // pred_check_branch
    %23 = sbr.rel (0) target = $region25
  $region24: #{conv_module_forward.1} parent=0 // pred_region
    _
  $region25: #{conv_module_forward.1} parent=0 // pred_fallthru
    _
  // Predicated region
  $region26: #{conv_module_forward.1} parent=0 // pred_check
    _
  $region27: #{conv_module_forward.1} parent=0 // pred_check_branch
    %25 = sbr.rel (0) target = $region29
  $region28: #{conv_module_forward.1} parent=0 // pred_region
    _
  $region29: #{conv_module_forward.1} parent=0 // pred_fallthru
    _
  %v26 = vld [vmem:[%s1] sm:$0xff]
  %v27 = vld [vmem:[%s1 + $0x8] sm:$0xff]
  %v28 = vld [vmem:[%s1 + $0x10] sm:$0xff]
  %v29 = vld [vmem:[%s1 + $0x18] sm:$0xff]
  %v30 = vld [vmem:[%s1 + $0x20] sm:$0xff]
  %v31 = vld [vmem:[%s1 + $0x28] sm:$0xff]
  %v32 = vld [vmem:[%s1 + $0x30] sm:$0xff]
  %v33 = vld [vmem:[%s1 + $0x38] sm:$0xff]
  %v34 = vld [vmem:[%s0] sm:$0xff]
  %v35 = vld [vmem:[%s0 + $0x8] sm:$0xff]
  %v36 = vld [vmem:[%s0 + $0x10] sm:$0xff]
  %v37 = vld [vmem:[%s0 + $0x18] sm:$0xff]
  %v38 = vld [vmem:[%s0 + $0x20] sm:$0xff]
  %v39 = vld [vmem:[%s0 + $0x28] sm:$0xff]
  %v40 = vld [vmem:[%s0 + $0x30] sm:$0xff]
  %v41 = vld [vmem:[%s0 + $0x38] sm:$0xff]
  %v42 = vld [vmem:[%s0 + $0x40] sm:$0xff]
  %v43 = vld [vmem:[%s0 + $0x48] sm:$0xff]
  %v44 = vld [vmem:[%s0 + $0x50] sm:$0xff]
  %v45 = vld [vmem:[%s0 + $0x58] sm:$0xff]
  %v46 = vld [vmem:[%s0 + $0x60] sm:$0xff]
  %v47 = vld [vmem:[%s0 + $0x68] sm:$0xff]
  %v48 = vld [vmem:[%s0 + $0x70] sm:$0xff]
  %v49 = vld [vmem:[%s0 + $0x78] sm:$0xff]
  %v50 = vld [vmem:[%s0 + $0x80] sm:$0xff]
  %v51 = vld [vmem:[%s0 + $0x88] sm:$0xff]
  %v52 = vld [vmem:[%s0 + $0x90] sm:$0xff]
  %v53 = vld [vmem:[%s0 + $0x98] sm:$0xff]
  %v54 = vld [vmem:[%s0 + $0xa0] sm:$0xff]
  %v55 = vld [vmem:[%s0 + $0xa8] sm:$0xff]
  %v56 = vld [vmem:[%s0 + $0xb0] sm:$0xff]
  %v57 = vld [vmem:[%s0 + $0xb8] sm:$0xff]
  %v58 = vld [vmem:[%s0 + $0xc0] sm:$0xff]
  %v59 = vld [vmem:[%s0 + $0xc8] sm:$0xff]
  %v60 = vld [vmem:[%s0 + $0xd0] sm:$0xff]
  %v61 = vld [vmem:[%s0 + $0xd8] sm:$0xff]
  %v62 = vld [vmem:[%s0 + $0xe0] sm:$0xff]
  %v63 = vld [vmem:[%s0 + $0xe8] sm:$0xff]
  %v64 = vld [vmem:[%s0 + $0xf0] sm:$0xff]
  %v65 = vld [vmem:[%s0 + $0xf8] sm:$0xff]
  %v66 = vld [vmem:[%s0 + $0x100] sm:$0xff]
  %v67 = vld [vmem:[%s0 + $0x108] sm:$0xff]
  %v68 = vld [vmem:[%s0 + $0x110] sm:$0xff]
  %v69 = vld [vmem:[%s0 + $0x118] sm:$0xff]
  %v70 = vld [vmem:[%s0 + $0x120] sm:$0xff]
  %v71 = vld [vmem:[%s0 + $0x128] sm:$0xff]
  %v72 = vld [vmem:[%s0 + $0x130] sm:$0xff]
  %v73 = vld [vmem:[%s0 + $0x138] sm:$0xff]
  %v74 = vld [vmem:[%s0 + $0x140] sm:$0xff]
  %v75 = vld [vmem:[%s0 + $0x148] sm:$0xff]
  %v76 = vld [vmem:[%s0 + $0x150] sm:$0xff]
  %v77 = vld [vmem:[%s0 + $0x158] sm:$0xff]
  %v78 = vld [vmem:[%s0 + $0x160] sm:$0xff]
  %v79 = vld [vmem:[%s0 + $0x168] sm:$0xff]
  %v80 = vld [vmem:[%s0 + $0x170] sm:$0xff]
  %v81 = vld [vmem:[%s0 + $0x178] sm:$0xff]
  %v82 = vld [vmem:[%s0 + $0x180] sm:$0xff]
  %v83 = vld [vmem:[%s0 + $0x188] sm:$0xff]
  %v84 = vld [vmem:[%s0 + $0x190] sm:$0xff]
  %v85 = vld [vmem:[%s0 + $0x198] sm:$0xff]
  %v86 = vld [vmem:[%s0 + $0x1a0] sm:$0xff]
  %v87 = vld [vmem:[%s0 + $0x1a8] sm:$0xff]
  %v88 = vld [vmem:[%s0 + $0x1b0] sm:$0xff]
  %v89 = vld [vmem:[%s0 + $0x1b8] sm:$0xff]
  %v90 = vld [vmem:[%s0 + $0x1c0] sm:$0xff]
  %v91 = vld [vmem:[%s0 + $0x1c8] sm:$0xff]
  %v92 = vld [vmem:[%s0 + $0x1d0] sm:$0xff]
  %v93 = vld [vmem:[%s0 + $0x1d8] sm:$0xff]
  %v94 = vld [vmem:[%s0 + $0x1e0] sm:$0xff]
  %v95 = vld [vmem:[%s0 + $0x1e8] sm:$0xff]
  %v96 = vld [vmem:[%s0 + $0x1f0] sm:$0xff]
  %v97 = vld [vmem:[%s0 + $0x1f8] sm:$0xff]
  %v98 = vld [vmem:[%s0 + $0x200] sm:$0xff]
  %v99 = vld [vmem:[%s0 + $0x208] sm:$0xff]
  %v100 = vld [vmem:[%s0 + $0x210] sm:$0xff]
  %v101 = vld [vmem:[%s0 + $0x218] sm:$0xff]
  %v102 = vld [vmem:[%s0 + $0x220] sm:$0xff]
  %v103 = vld [vmem:[%s0 + $0x228] sm:$0xff]
  %v104 = vld [vmem:[%s0 + $0x230] sm:$0xff]
  %v105 = vld [vmem:[%s0 + $0x238] sm:$0xff]
  %vm106 = vcmask 130048
  %v108 = vsel %vm106, %v27, 0
  %v111 = vsel %vm106, %v29, 0
  %v114 = vsel %vm106, %v31, 0
  %v117 = vsel %vm106, %v33, 0
  %119 = vmatprep.subr.mxu0 %v95
  %120 = vmatpush1.msra.mxu0 %v94
  %121 = vmatprep.subr.mxu0 %v91
  %122 = vmatpush1.msra.mxu0 %v90
  %123 = vmatprep.subr.mxu0 %v87
  %124 = vmatpush1.msra.mxu0 %v86
  %125 = vmatprep.subr.mxu0 %v83
  %126 = vmatpush1.msra.mxu0 %v82
  %127 = vmatprep.subr.mxu0 %v79
  %128 = vmatpush1.msra.mxu0 %v78
  %129 = vmatprep.subr.mxu0 %v75
  %130 = vmatpush1.msra.mxu0 %v74
  %131 = vmatprep.subr.mxu0 %v71
  %132 = vmatpush1.msra.mxu0 %v70
  %133 = vmatprep.subr.mxu0 %v67
  %134 = vmatpush1.msra.mxu0 %v66
  %135 = vmatprep.subr.mxu0 %v63
  %136 = vmatpush1.msra.mxu0 %v62
  %137 = vmatprep.subr.mxu0 %v59
  %138 = vmatpush1.msra.mxu0 %v58
  %139 = vmatprep.subr.mxu0 %v55
  %140 = vmatpush1.msra.mxu0 %v54
  %141 = vmatprep.subr.mxu0 %v51
  %142 = vmatpush1.msra.mxu0 %v50
  %143 = vmatprep.subr.mxu0 %v47
  %144 = vmatpush1.msra.mxu0 %v46
  %145 = vmatprep.subr.mxu0 %v43
  %146 = vmatpush1.msra.mxu0 %v42
  %147 = vmatprep.subr.mxu0 %v39
  %148 = vmatpush1.msra.mxu0 %v38
  %149 = vmatprep.subr.mxu0 %v35
  %150 = vmatpush1.msra.mxu0 %v34
  %151 = vmatprep.subr.mxu0 0.0
  %152 = vmatpush2.msra.mxu0 0.0
  %153 = vmatprep.subr.mxu0 0.0
  %154 = vmatpush2.msra.mxu0 0.0
  %155 = vmatprep.subr.mxu0 0.0
  %156 = vmatpush2.msra.mxu0 0.0
  %157 = vmatprep.subr.mxu0 0.0
  %158 = vmatpush2.msra.mxu0 0.0
  %159 = vmatprep.subr.mxu0 0.0
  %160 = vmatpush2.msra.mxu0 0.0
  %161 = vmatprep.subr.mxu0 0.0
  %162 = vmatpush2.msra.mxu0 0.0
  %163 = vmatprep.subr.mxu0 0.0
  %164 = vmatpush2.msra.mxu0 0.0
  %165 = vmatprep.subr.mxu0 0.0
  %166 = vmatpush2.msra.mxu0 0.0
  %167 = vmatprep.subr.mxu0 0.0
  %168 = vmatpush2.msra.mxu0 0.0
  %169 = vmatprep.subr.mxu0 0.0
  %170 = vmatpush2.msra.mxu0 0.0
  %171 = vmatprep.subr.mxu0 0.0
  %172 = vmatpush2.msra.mxu0 0.0
  %173 = vmatprep.subr.mxu0 0.0
  %174 = vmatpush2.msra.mxu0 0.0
  %175 = vmatprep.subr.mxu0 0.0
  %176 = vmatpush2.msra.mxu0 0.0
  %177 = vmatprep.subr.mxu0 0.0
  %178 = vmatpush2.msra.mxu0 0.0
  %179 = vmatprep.subr.mxu0 %v103
  %180 = vmatpush2.msra.mxu0 %v102
  %181 = vmatprep.subr.mxu0 %v99
  %182 = vmatpush2.msra.mxu0 %v98
  %183 = vmatprep.mubr.f32.mxu0 %v108
  %184 = vmatmul.mubr.f32.gmra.mxu0 %v26
  %v185 = vpop.f32.mrf.mxu0
  %v186 = vadd.f32 0.0, %v185
  %v187 = vpop.f32.mrf.mxu0
  %v188 = vadd.f32 0.0, %v187
  %189 = vmatprep.mubr.f32.mxu0 %v111
  %190 = vmatmul.mubr.f32.gmra.mxu0 %v28
  %v191 = vpop.f32.mrf.mxu0
  %v192 = vadd.f32 0.0, %v191
  %v193 = vpop.f32.mrf.mxu0
  %v194 = vadd.f32 0.0, %v193
  %195 = vmatprep.mubr.f32.mxu0 %v114
  %196 = vmatmul.mubr.f32.gmra.mxu0 %v30
  %v197 = vpop.f32.mrf.mxu0
  %v198 = vadd.f32 0.0, %v197
  %v199 = vpop.f32.mrf.mxu0
  %v200 = vadd.f32 0.0, %v199
  %201 = vmatprep.mubr.f32.mxu0 %v117
  %202 = vmatmul.mubr.f32.gmra.mxu0 %v32
  %v203 = vpop.f32.mrf.mxu0
  %v204 = vadd.f32 0.0, %v203
  %v205 = vpop.f32.mrf.mxu0
  %v206 = vadd.f32 0.0, %v205
  %207 = vdwg.mxu0
  %208 = vmatprep.subr.mxu0 %v97
  %209 = vmatpush1.msra.mxu0 %v96
  %210 = vmatprep.subr.mxu0 %v93
  %211 = vmatpush1.msra.mxu0 %v92
  %212 = vmatprep.subr.mxu0 %v89
  %213 = vmatpush1.msra.mxu0 %v88
  %214 = vmatprep.subr.mxu0 %v85
  %215 = vmatpush1.msra.mxu0 %v84
  %216 = vmatprep.subr.mxu0 %v81
  %217 = vmatpush1.msra.mxu0 %v80
  %218 = vmatprep.subr.mxu0 %v77
  %219 = vmatpush1.msra.mxu0 %v76
  %220 = vmatprep.subr.mxu0 %v73
  %221 = vmatpush1.msra.mxu0 %v72
  %222 = vmatprep.subr.mxu0 %v69
  %223 = vmatpush1.msra.mxu0 %v68
  %224 = vmatprep.subr.mxu0 %v65
  %225 = vmatpush1.msra.mxu0 %v64
  %226 = vmatprep.subr.mxu0 %v61
  %227 = vmatpush1.msra.mxu0 %v60
  %228 = vmatprep.subr.mxu0 %v57
  %229 = vmatpush1.msra.mxu0 %v56
  %230 = vmatprep.subr.mxu0 %v53
  %231 = vmatpush1.msra.mxu0 %v52
  %232 = vmatprep.subr.mxu0 %v49
  %233 = vmatpush1.msra.mxu0 %v48
  %234 = vmatprep.subr.mxu0 %v45
  %235 = vmatpush1.msra.mxu0 %v44
  %236 = vmatprep.subr.mxu0 %v41
  %237 = vmatpush1.msra.mxu0 %v40
  %238 = vmatprep.subr.mxu0 %v37
  %239 = vmatpush1.msra.mxu0 %v36
  %240 = vmatprep.subr.mxu0 0.0
  %241 = vmatpush2.msra.mxu0 0.0
  %242 = vmatprep.subr.mxu0 0.0
  %243 = vmatpush2.msra.mxu0 0.0
  %244 = vmatprep.subr.mxu0 0.0
  %245 = vmatpush2.msra.mxu0 0.0
  %246 = vmatprep.subr.mxu0 0.0
  %247 = vmatpush2.msra.mxu0 0.0
  %248 = vmatprep.subr.mxu0 0.0
  %249 = vmatpush2.msra.mxu0 0.0
  %250 = vmatprep.subr.mxu0 0.0
  %251 = vmatpush2.msra.mxu0 0.0
  %252 = vmatprep.subr.mxu0 0.0
  %253 = vmatpush2.msra.mxu0 0.0
  %254 = vmatprep.subr.mxu0 0.0
  %255 = vmatpush2.msra.mxu0 0.0
  %256 = vmatprep.subr.mxu0 0.0
  %257 = vmatpush2.msra.mxu0 0.0
  %258 = vmatprep.subr.mxu0 0.0
  %259 = vmatpush2.msra.mxu0 0.0
  %260 = vmatprep.subr.mxu0 0.0
  %261 = vmatpush2.msra.mxu0 0.0
  %262 = vmatprep.subr.mxu0 0.0
  %263 = vmatpush2.msra.mxu0 0.0
  %264 = vmatprep.subr.mxu0 0.0
  %265 = vmatpush2.msra.mxu0 0.0
  %266 = vmatprep.subr.mxu0 0.0
  %267 = vmatpush2.msra.mxu0 0.0
  %268 = vmatprep.subr.mxu0 %v105
  %269 = vmatpush2.msra.mxu0 %v104
  %270 = vmatprep.subr.mxu0 %v101
  %271 = vmatpush2.msra.mxu0 %v100
  %272 = vmatprep.mubr.f32.mxu0 %v108
  %273 = vmatmul.mubr.f32.gmra.mxu0 %v26
  %v274 = vpop.f32.mrf.mxu0
  %v275 = vadd.f32 0.0, %v274
  %v276 = vpop.f32.mrf.mxu0
  %v277 = vadd.f32 0.0, %v276
  %278 = vmatprep.mubr.f32.mxu0 %v111
  %279 = vmatmul.mubr.f32.gmra.mxu0 %v28
  %v280 = vpop.f32.mrf.mxu0
  %v281 = vadd.f32 0.0, %v280
  %v282 = vpop.f32.mrf.mxu0
  %v283 = vadd.f32 0.0, %v282
  %284 = vmatprep.mubr.f32.mxu0 %v114
  %285 = vmatmul.mubr.f32.gmra.mxu0 %v30
  %v286 = vpop.f32.mrf.mxu0
  %v287 = vadd.f32 0.0, %v286
  %v288 = vpop.f32.mrf.mxu0
  %v289 = vadd.f32 0.0, %v288
  %290 = vmatprep.mubr.f32.mxu0 %v117
  %291 = vmatmul.mubr.f32.gmra.mxu0 %v32
  %v292 = vpop.f32.mrf.mxu0
  %v293 = vadd.f32 0.0, %v292
  %v294 = vpop.f32.mrf.mxu0
  %v295 = vadd.f32 0.0, %v294
  %296 = vdwg.mxu0
  %v297 = vld [vmem:[%s6] sm:$0xff]
  %v298 = vld [vmem:[%s6 + $0x8] sm:$0xff]
  %v299 = vld [vmem:[%s6 + $0x10] sm:$0xff]
  %v300 = vld [vmem:[%s6 + $0x18] sm:$0xff]
  %v301 = vadd.f32 %v186, %v188
  %v302 = vadd.f32 %v301, %v275
  %v303 = vadd.f32 %v302, %v277
  %304 = vadd.xlane.f32.xlu0 %v303
  %v305 = vpop.xlane.xlu0 %304
  %v306 = vadd.f32 %v192, %v194
  %v307 = vadd.f32 %v306, %v281
  %v308 = vadd.f32 %v307, %v283
  %309 = vadd.xlane.f32.xlu0 %v308
  %v310 = vpop.xlane.xlu0 %309
  %v311 = vadd.f32 %v198, %v200
  %v312 = vadd.f32 %v311, %v287
  %v313 = vadd.f32 %v312, %v289
  %314 = vadd.xlane.f32.xlu0 %v313
  %v315 = vpop.xlane.xlu0 %314
  %v316 = vadd.f32 %v204, %v206
  %v317 = vadd.f32 %v316, %v293
  %v318 = vadd.f32 %v317, %v295
  %319 = vadd.xlane.f32.xlu0 %v318
  %v320 = vpop.xlane.xlu0 %319
  %v321 = vmul.f32 %v305, 0.001953125
  %v322 = vmul.f32 %v310, 0.001953125
  %v323 = vmul.f32 %v315, 0.001953125
  %v324 = vmul.f32 %v320, 0.001953125
  %v325 = vsub.f32 %v186, %v321
  %v326 = vsub.f32 %v188, %v321
  %v327 = vsub.f32 %v275, %v321
  %v328 = vsub.f32 %v277, %v321
  %v329 = vsub.f32 %v192, %v322
  %v330 = vsub.f32 %v194, %v322
  %v331 = vsub.f32 %v281, %v322
  %v332 = vsub.f32 %v283, %v322
  %v333 = vsub.f32 %v198, %v323
  %v334 = vsub.f32 %v200, %v323
  %v335 = vsub.f32 %v287, %v323
  %v336 = vsub.f32 %v289, %v323
  %v337 = vsub.f32 %v204, %v324
  %v338 = vsub.f32 %v206, %v324
  %v339 = vsub.f32 %v293, %v324
  %v340 = vsub.f32 %v295, %v324
  %v341 = vmul.f32 %v325, %v325
  %v342 = vmul.f32 %v326, %v326
  %v343 = vmul.f32 %v327, %v327
  %v344 = vmul.f32 %v328, %v328
  %v345 = vmul.f32 %v329, %v329
  %v346 = vmul.f32 %v330, %v330
  %v347 = vmul.f32 %v331, %v331
  %v348 = vmul.f32 %v332, %v332
  %v349 = vmul.f32 %v333, %v333
  %v350 = vmul.f32 %v334, %v334
  %v351 = vmul.f32 %v335, %v335
  %v352 = vmul.f32 %v336, %v336
  %v353 = vmul.f32 %v337, %v337
  %v354 = vmul.f32 %v338, %v338
  %v355 = vmul.f32 %v339, %v339
  %v356 = vmul.f32 %v340, %v340
  %v357 = vadd.f32 %v341, %v342
  %v358 = vadd.f32 %v357, %v343
  %v359 = vadd.f32 %v358, %v344
  %360 = vadd.xlane.f32.xlu0 %v359
  %v361 = vpop.xlane.xlu0 %360
  %v362 = vadd.f32 %v345, %v346
  %v363 = vadd.f32 %v362, %v347
  %v364 = vadd.f32 %v363, %v348
  %365 = vadd.xlane.f32.xlu0 %v364
  %v366 = vpop.xlane.xlu0 %365
  %v367 = vadd.f32 %v349, %v350
  %v368 = vadd.f32 %v367, %v351
  %v369 = vadd.f32 %v368, %v352
  %370 = vadd.xlane.f32.xlu0 %v369
  %v371 = vpop.xlane.xlu0 %370
  %v372 = vadd.f32 %v353, %v354
  %v373 = vadd.f32 %v372, %v355
  %v374 = vadd.f32 %v373, %v356
  %375 = vadd.xlane.f32.xlu0 %v374
  %v376 = vpop.xlane.xlu0 %375
  %v377 = vmul.f32 %v361, 0.001953125
  %v378 = vmul.f32 %v366, 0.001953125
  %v379 = vmul.f32 %v371, 0.001953125
  %v380 = vmul.f32 %v376, 0.001953125
  %v381 = vadd.f32 %v377, 1e-05
  %v382 = vadd.f32 %v378, 1e-05
  %v383 = vadd.f32 %v379, 1e-05
  %v384 = vadd.f32 %v380, 1e-05
  %v385 = vrsqrt.pop %v381
  %v386 = vrsqrt.pop %v382
  %v387 = vrsqrt.pop %v383
  %v388 = vrsqrt.pop %v384
  %v389 = vmul.f32 %v297, %v385
  %v390 = vmul.f32 %v298, %v386
  %v391 = vmul.f32 %v299, %v387
  %v392 = vmul.f32 %v300, %v388
  %394 = vset.pattern.permute.xlu0 0
  %395 = vperm.xlu0 %394, %v389
  %v396 = vpop.permute.xlu0 %395
  %399 = vset.pattern.permute.xlu0 0
  %400 = vperm.xlu0 %399, %v390
  %v401 = vpop.permute.xlu0 %400
  %404 = vset.pattern.permute.xlu0 0
  %405 = vperm.xlu0 %404, %v391
  %v406 = vpop.permute.xlu0 %405
  %409 = vset.pattern.permute.xlu0 0
  %410 = vperm.xlu0 %409, %v392
  %v411 = vpop.permute.xlu0 %410
  %v413 = vmul.f32 %v325, %v396
  %v414 = vmul.f32 %v326, %v396
  %v415 = vmul.f32 %v327, %v396
  %v416 = vmul.f32 %v328, %v396
  %v417 = vmul.f32 %v329, %v401
  %v418 = vmul.f32 %v330, %v401
  %v419 = vmul.f32 %v331, %v401
  %v420 = vmul.f32 %v332, %v401
  %v421 = vmul.f32 %v333, %v406
  %v422 = vmul.f32 %v334, %v406
  %v423 = vmul.f32 %v335, %v406
  %v424 = vmul.f32 %v336, %v406
  %v425 = vmul.f32 %v337, %v411
  %v426 = vmul.f32 %v338, %v411
  %v427 = vmul.f32 %v339, %v411
  %v428 = vmul.f32 %v340, %v411
  %430 = vset.pattern.permute.xlu0 1
  %431 = vperm.xlu0 %430, %v297
  %v432 = vpop.permute.xlu0 %431
  %435 = vset.pattern.permute.xlu0 1
  %436 = vperm.xlu0 %435, %v298
  %v437 = vpop.permute.xlu0 %436
  %440 = vset.pattern.permute.xlu0 1
  %441 = vperm.xlu0 %440, %v299
  %v442 = vpop.permute.xlu0 %441
  %445 = vset.pattern.permute.xlu0 1
  %446 = vperm.xlu0 %445, %v300
  %v447 = vpop.permute.xlu0 %446
  %v449 = vadd.f32 %v413, %v432
  %v450 = vadd.f32 %v414, %v432
  %v451 = vadd.f32 %v415, %v432
  %v452 = vadd.f32 %v416, %v432
  %v453 = vadd.f32 %v417, %v437
  %v454 = vadd.f32 %v418, %v437
  %v455 = vadd.f32 %v419, %v437
  %v456 = vadd.f32 %v420, %v437
  %v457 = vadd.f32 %v421, %v442
  %v458 = vadd.f32 %v422, %v442
  %v459 = vadd.f32 %v423, %v442
  %v460 = vadd.f32 %v424, %v442
  %v461 = vadd.f32 %v425, %v447
  %v462 = vadd.f32 %v426, %v447
  %v463 = vadd.f32 %v427, %v447
  %v464 = vadd.f32 %v428, %v447
  %v465 = vmax.f32 %v449, 0.0
  %v466 = vmax.f32 %v450, 0.0
  %v467 = vmax.f32 %v451, 0.0
  %v468 = vmax.f32 %v452, 0.0
  %v469 = vmax.f32 %v453, 0.0
  %v470 = vmax.f32 %v454, 0.0
  %v471 = vmax.f32 %v455, 0.0
  %v472 = vmax.f32 %v456, 0.0
  %v473 = vmax.f32 %v457, 0.0
  %v474 = vmax.f32 %v458, 0.0
  %v475 = vmax.f32 %v459, 0.0
  %v476 = vmax.f32 %v460, 0.0
  %v477 = vmax.f32 %v461, 0.0
  %v478 = vmax.f32 %v462, 0.0
  %v479 = vmax.f32 %v463, 0.0
  %v480 = vmax.f32 %v464, 0.0
  %v481 = vld [vmem:[%s3] sm:$0xff]
  %v482 = vld [vmem:[%s3 + $0x8] sm:$0xff]
  %v483 = vld [vmem:[%s3 + $0x10] sm:$0xff]
  %v484 = vld [vmem:[%s3 + $0x18] sm:$0xff]
  %v485 = vld [vmem:[%s3 + $0x20] sm:$0xff]
  %v486 = vld [vmem:[%s3 + $0x28] sm:$0xff]
  %v487 = vld [vmem:[%s3 + $0x30] sm:$0xff]
  %v488 = vld [vmem:[%s3 + $0x38] sm:$0xff]
  %v489 = vld [vmem:[%s3 + $0x40] sm:$0xff]
  %v490 = vld [vmem:[%s3 + $0x48] sm:$0xff]
  %v491 = vld [vmem:[%s3 + $0x50] sm:$0xff]
  %v492 = vld [vmem:[%s3 + $0x58] sm:$0xff]
  %v493 = vld [vmem:[%s3 + $0x60] sm:$0xff]
  %v494 = vld [vmem:[%s3 + $0x68] sm:$0xff]
  %v495 = vld [vmem:[%s3 + $0x70] sm:$0xff]
  %v496 = vld [vmem:[%s3 + $0x78] sm:$0xff]
  %v497 = vld [vmem:[%s3 + $0x80] sm:$0xff]
  %v498 = vld [vmem:[%s3 + $0x88] sm:$0xff]
  %v499 = vld [vmem:[%s3 + $0x90] sm:$0xff]
  %v500 = vld [vmem:[%s3 + $0x98] sm:$0xff]
  %v501 = vld [vmem:[%s3 + $0xa0] sm:$0xff]
  %v502 = vld [vmem:[%s3 + $0xa8] sm:$0xff]
  %v503 = vld [vmem:[%s3 + $0xb0] sm:$0xff]
  %v504 = vld [vmem:[%s3 + $0xb8] sm:$0xff]
  %v505 = vld [vmem:[%s3 + $0xc0] sm:$0xff]
  %v506 = vld [vmem:[%s3 + $0xc8] sm:$0xff]
  %v507 = vld [vmem:[%s3 + $0xd0] sm:$0xff]
  %v508 = vld [vmem:[%s3 + $0xd8] sm:$0xff]
  %v509 = vld [vmem:[%s3 + $0xe0] sm:$0xff]
  %v510 = vld [vmem:[%s3 + $0xe8] sm:$0xff]
  %v511 = vld [vmem:[%s3 + $0xf0] sm:$0xff]
  %v512 = vld [vmem:[%s3 + $0xf8] sm:$0xff]
  %v513 = vld [vmem:[%s3 + $0x100] sm:$0xff]
  %v514 = vld [vmem:[%s3 + $0x108] sm:$0xff]
  %v515 = vld [vmem:[%s3 + $0x110] sm:$0xff]
  %v516 = vld [vmem:[%s3 + $0x118] sm:$0xff]
  %v517 = vld [vmem:[%s3 + $0x120] sm:$0xff]
  %v518 = vld [vmem:[%s3 + $0x128] sm:$0xff]
  %v519 = vld [vmem:[%s3 + $0x130] sm:$0xff]
  %v520 = vld [vmem:[%s3 + $0x138] sm:$0xff]
  %v521 = vld [vmem:[%s3 + $0x140] sm:$0xff]
  %v522 = vld [vmem:[%s3 + $0x148] sm:$0xff]
  %v523 = vld [vmem:[%s3 + $0x150] sm:$0xff]
  %v524 = vld [vmem:[%s3 + $0x158] sm:$0xff]
  %v525 = vld [vmem:[%s3 + $0x160] sm:$0xff]
  %v526 = vld [vmem:[%s3 + $0x168] sm:$0xff]
  %v527 = vld [vmem:[%s3 + $0x170] sm:$0xff]
  %v528 = vld [vmem:[%s3 + $0x178] sm:$0xff]
  %v529 = vld [vmem:[%s3 + $0x180] sm:$0xff]
  %v530 = vld [vmem:[%s3 + $0x188] sm:$0xff]
  %v531 = vld [vmem:[%s3 + $0x190] sm:$0xff]
  %v532 = vld [vmem:[%s3 + $0x198] sm:$0xff]
  %v533 = vld [vmem:[%s3 + $0x1a0] sm:$0xff]
  %v534 = vld [vmem:[%s3 + $0x1a8] sm:$0xff]
  %v535 = vld [vmem:[%s3 + $0x1b0] sm:$0xff]
  %v536 = vld [vmem:[%s3 + $0x1b8] sm:$0xff]
  %v537 = vld [vmem:[%s3 + $0x1c0] sm:$0xff]
  %v538 = vld [vmem:[%s3 + $0x1c8] sm:$0xff]
  %v539 = vld [vmem:[%s3 + $0x1d0] sm:$0xff]
  %v540 = vld [vmem:[%s3 + $0x1d8] sm:$0xff]
  %v541 = vld [vmem:[%s3 + $0x1e0] sm:$0xff]
  %v542 = vld [vmem:[%s3 + $0x1e8] sm:$0xff]
  %v543 = vld [vmem:[%s3 + $0x1f0] sm:$0xff]
  %v544 = vld [vmem:[%s3 + $0x1f8] sm:$0xff]
  %545 = vmatprep.subr.mxu0 0.0
  %546 = vmatpush1.msra.mxu0 %v496
  %547 = vmatprep.subr.mxu0 0.0
  %548 = vmatpush1.msra.mxu0 %v495
  %549 = vmatprep.subr.mxu0 0.0
  %550 = vmatpush1.msra.mxu0 %v494
  %551 = vmatprep.subr.mxu0 0.0
  %552 = vmatpush1.msra.mxu0 %v493
  %553 = vmatprep.subr.mxu0 0.0
  %554 = vmatpush1.msra.mxu0 %v492
  %555 = vmatprep.subr.mxu0 0.0
  %556 = vmatpush1.msra.mxu0 %v491
  %557 = vmatprep.subr.mxu0 0.0
  %558 = vmatpush1.msra.mxu0 %v490
  %559 = vmatprep.subr.mxu0 0.0
  %560 = vmatpush1.msra.mxu0 %v489
  %561 = vmatprep.subr.mxu0 0.0
  %562 = vmatpush1.msra.mxu0 %v488
  %563 = vmatprep.subr.mxu0 0.0
  %564 = vmatpush1.msra.mxu0 %v487
  %565 = vmatprep.subr.mxu0 0.0
  %566 = vmatpush1.msra.mxu0 %v486
  %567 = vmatprep.subr.mxu0 0.0
  %568 = vmatpush1.msra.mxu0 %v485
  %569 = vmatprep.subr.mxu0 0.0
  %570 = vmatpush1.msra.mxu0 %v484
  %571 = vmatprep.subr.mxu0 0.0
  %572 = vmatpush1.msra.mxu0 %v483
  %573 = vmatprep.subr.mxu0 0.0
  %574 = vmatpush1.msra.mxu0 %v482
  %575 = vmatprep.subr.mxu0 0.0
  %576 = vmatpush1.msra.mxu0 %v481
  %577 = vmatprep.subr.mxu0 0.0
  %578 = vmatpush2.msra.mxu0 %v512
  %579 = vmatprep.subr.mxu0 0.0
  %580 = vmatpush2.msra.mxu0 %v511
  %581 = vmatprep.subr.mxu0 0.0
  %582 = vmatpush2.msra.mxu0 %v510
  %583 = vmatprep.subr.mxu0 0.0
  %584 = vmatpush2.msra.mxu0 %v509
  %585 = vmatprep.subr.mxu0 0.0
  %586 = vmatpush2.msra.mxu0 %v508
  %587 = vmatprep.subr.mxu0 0.0
  %588 = vmatpush2.msra.mxu0 %v507
  %589 = vmatprep.subr.mxu0 0.0
  %590 = vmatpush2.msra.mxu0 %v506
  %591 = vmatprep.subr.mxu0 0.0
  %592 = vmatpush2.msra.mxu0 %v505
  %593 = vmatprep.subr.mxu0 0.0
  %594 = vmatpush2.msra.mxu0 %v504
  %595 = vmatprep.subr.mxu0 0.0
  %596 = vmatpush2.msra.mxu0 %v503
  %597 = vmatprep.subr.mxu0 0.0
  %598 = vmatpush2.msra.mxu0 %v502
  %599 = vmatprep.subr.mxu0 0.0
  %600 = vmatpush2.msra.mxu0 %v501
  %601 = vmatprep.subr.mxu0 0.0
  %602 = vmatpush2.msra.mxu0 %v500
  %603 = vmatprep.subr.mxu0 0.0
  %604 = vmatpush2.msra.mxu0 %v499
  %605 = vmatprep.subr.mxu0 0.0
  %606 = vmatpush2.msra.mxu0 %v498
  %607 = vmatprep.subr.mxu0 0.0
  %608 = vmatpush2.msra.mxu0 %v497
  %609 = vmatprep.mubr.f32.mxu0 %v466
  %610 = vmatmul.mubr.f32.gmra.mxu0 %v465
  %v611 = vpop.f32.mrf.mxu0
  %v612 = vadd.f32 0.0, %v611
  %v613 = vpop.f32.mrf.mxu0
  %614 = vmatprep.mubr.f32.mxu0 %v470
  %615 = vmatmul.mubr.f32.gmra.mxu0 %v469
  %v616 = vpop.f32.mrf.mxu0
  %v617 = vadd.f32 0.0, %v616
  %v618 = vpop.f32.mrf.mxu0
  %619 = vmatprep.mubr.f32.mxu0 %v474
  %620 = vmatmul.mubr.f32.gmra.mxu0 %v473
  %v621 = vpop.f32.mrf.mxu0
  %v622 = vadd.f32 0.0, %v621
  %v623 = vpop.f32.mrf.mxu0
  %624 = vmatprep.mubr.f32.mxu0 %v478
  %625 = vmatmul.mubr.f32.gmra.mxu0 %v477
  %v626 = vpop.f32.mrf.mxu0
  %v627 = vadd.f32 0.0, %v626
  %v628 = vpop.f32.mrf.mxu0
  %629 = vdwg.mxu0
  %630 = vmatprep.subr.mxu0 0.0
  %631 = vmatpush1.msra.mxu0 %v528
  %632 = vmatprep.subr.mxu0 0.0
  %633 = vmatpush1.msra.mxu0 %v527
  %634 = vmatprep.subr.mxu0 0.0
  %635 = vmatpush1.msra.mxu0 %v526
  %636 = vmatprep.subr.mxu0 0.0
  %637 = vmatpush1.msra.mxu0 %v525
  %638 = vmatprep.subr.mxu0 0.0
  %639 = vmatpush1.msra.mxu0 %v524
  %640 = vmatprep.subr.mxu0 0.0
  %641 = vmatpush1.msra.mxu0 %v523
  %642 = vmatprep.subr.mxu0 0.0
  %643 = vmatpush1.msra.mxu0 %v522
  %644 = vmatprep.subr.mxu0 0.0
  %645 = vmatpush1.msra.mxu0 %v521
  %646 = vmatprep.subr.mxu0 0.0
  %647 = vmatpush1.msra.mxu0 %v520
  %648 = vmatprep.subr.mxu0 0.0
  %649 = vmatpush1.msra.mxu0 %v519
  %650 = vmatprep.subr.mxu0 0.0
  %651 = vmatpush1.msra.mxu0 %v518
  %652 = vmatprep.subr.mxu0 0.0
  %653 = vmatpush1.msra.mxu0 %v517
  %654 = vmatprep.subr.mxu0 0.0
  %655 = vmatpush1.msra.mxu0 %v516
  %656 = vmatprep.subr.mxu0 0.0
  %657 = vmatpush1.msra.mxu0 %v515
  %658 = vmatprep.subr.mxu0 0.0
  %659 = vmatpush1.msra.mxu0 %v514
  %660 = vmatprep.subr.mxu0 0.0
  %661 = vmatpush1.msra.mxu0 %v513
  %662 = vmatprep.subr.mxu0 0.0
  %663 = vmatpush2.msra.mxu0 %v544
  %664 = vmatprep.subr.mxu0 0.0
  %665 = vmatpush2.msra.mxu0 %v543
  %666 = vmatprep.subr.mxu0 0.0
  %667 = vmatpush2.msra.mxu0 %v542
  %668 = vmatprep.subr.mxu0 0.0
  %669 = vmatpush2.msra.mxu0 %v541
  %670 = vmatprep.subr.mxu0 0.0
  %671 = vmatpush2.msra.mxu0 %v540
  %672 = vmatprep.subr.mxu0 0.0
  %673 = vmatpush2.msra.mxu0 %v539
  %674 = vmatprep.subr.mxu0 0.0
  %675 = vmatpush2.msra.mxu0 %v538
  %676 = vmatprep.subr.mxu0 0.0
  %677 = vmatpush2.msra.mxu0 %v537
  %678 = vmatprep.subr.mxu0 0.0
  %679 = vmatpush2.msra.mxu0 %v536
  %680 = vmatprep.subr.mxu0 0.0
  %681 = vmatpush2.msra.mxu0 %v535
  %682 = vmatprep.subr.mxu0 0.0
  %683 = vmatpush2.msra.mxu0 %v534
  %684 = vmatprep.subr.mxu0 0.0
  %685 = vmatpush2.msra.mxu0 %v533
  %686 = vmatprep.subr.mxu0 0.0
  %687 = vmatpush2.msra.mxu0 %v532
  %688 = vmatprep.subr.mxu0 0.0
  %689 = vmatpush2.msra.mxu0 %v531
  %690 = vmatprep.subr.mxu0 0.0
  %691 = vmatpush2.msra.mxu0 %v530
  %692 = vmatprep.subr.mxu0 0.0
  %693 = vmatpush2.msra.mxu0 %v529
  %694 = vmatprep.mubr.f32.mxu0 %v468
  %695 = vmatmul.mubr.f32.gmra.mxu0 %v467
  %v696 = vpop.f32.mrf.mxu0
  %v697 = vadd.f32 %v612, %v696
  %v698 = vpop.f32.mrf.mxu0
  %699 = vmatprep.mubr.f32.mxu0 %v472
  %700 = vmatmul.mubr.f32.gmra.mxu0 %v471
  %v701 = vpop.f32.mrf.mxu0
  %v702 = vadd.f32 %v617, %v701
  %v703 = vpop.f32.mrf.mxu0
  %704 = vmatprep.mubr.f32.mxu0 %v476
  %705 = vmatmul.mubr.f32.gmra.mxu0 %v475
  %v706 = vpop.f32.mrf.mxu0
  %v707 = vadd.f32 %v622, %v706
  %v708 = vpop.f32.mrf.mxu0
  %709 = vmatprep.mubr.f32.mxu0 %v480
  %710 = vmatmul.mubr.f32.gmra.mxu0 %v479
  %v711 = vpop.f32.mrf.mxu0
  %v712 = vadd.f32 %v627, %v711
  %v713 = vpop.f32.mrf.mxu0
  %714 = vdwg.mxu0
  %s715 = scalar_lea.vmem %s3, 512
  %v716 = vld [vmem:[%s715] sm:$0xff]
  %v717 = vld [vmem:[%s715 + $0x8] sm:$0xff]
  %v718 = vld [vmem:[%s715 + $0x10] sm:$0xff]
  %v719 = vld [vmem:[%s715 + $0x18] sm:$0xff]
  %v720 = vld [vmem:[%s715 + $0x20] sm:$0xff]
  %v721 = vld [vmem:[%s715 + $0x28] sm:$0xff]
  %v722 = vld [vmem:[%s715 + $0x30] sm:$0xff]
  %v723 = vld [vmem:[%s715 + $0x38] sm:$0xff]
  %v724 = vld [vmem:[%s715 + $0x40] sm:$0xff]
  %v725 = vld [vmem:[%s715 + $0x48] sm:$0xff]
  %v726 = vld [vmem:[%s715 + $0x50] sm:$0xff]
  %v727 = vld [vmem:[%s715 + $0x58] sm:$0xff]
  %v728 = vld [vmem:[%s715 + $0x60] sm:$0xff]
  %v729 = vld [vmem:[%s715 + $0x68] sm:$0xff]
  %v730 = vld [vmem:[%s715 + $0x70] sm:$0xff]
  %v731 = vld [vmem:[%s715 + $0x78] sm:$0xff]
  %v732 = vld [vmem:[%s715 + $0x80] sm:$0xff]
  %v733 = vld [vmem:[%s715 + $0x88] sm:$0xff]
  %v734 = vld [vmem:[%s715 + $0x90] sm:$0xff]
  %v735 = vld [vmem:[%s715 + $0x98] sm:$0xff]
  %v736 = vld [vmem:[%s715 + $0xa0] sm:$0xff]
  %v737 = vld [vmem:[%s715 + $0xa8] sm:$0xff]
  %v738 = vld [vmem:[%s715 + $0xb0] sm:$0xff]
  %v739 = vld [vmem:[%s715 + $0xb8] sm:$0xff]
  %v740 = vld [vmem:[%s715 + $0xc0] sm:$0xff]
  %v741 = vld [vmem:[%s715 + $0xc8] sm:$0xff]
  %v742 = vld [vmem:[%s715 + $0xd0] sm:$0xff]
  %v743 = vld [vmem:[%s715 + $0xd8] sm:$0xff]
  %v744 = vld [vmem:[%s715 + $0xe0] sm:$0xff]
  %v745 = vld [vmem:[%s715 + $0xe8] sm:$0xff]
  %v746 = vld [vmem:[%s715 + $0xf0] sm:$0xff]
  %v747 = vld [vmem:[%s715 + $0xf8] sm:$0xff]
  %v748 = vld [vmem:[%s715 + $0x100] sm:$0xff]
  %v749 = vld [vmem:[%s715 + $0x108] sm:$0xff]
  %v750 = vld [vmem:[%s715 + $0x110] sm:$0xff]
  %v751 = vld [vmem:[%s715 + $0x118] sm:$0xff]
  %v752 = vld [vmem:[%s715 + $0x120] sm:$0xff]
  %v753 = vld [vmem:[%s715 + $0x128] sm:$0xff]
  %v754 = vld [vmem:[%s715 + $0x130] sm:$0xff]
  %v755 = vld [vmem:[%s715 + $0x138] sm:$0xff]
  %v756 = vld [vmem:[%s715 + $0x140] sm:$0xff]
  %v757 = vld [vmem:[%s715 + $0x148] sm:$0xff]
  %v758 = vld [vmem:[%s715 + $0x150] sm:$0xff]
  %v759 = vld [vmem:[%s715 + $0x158] sm:$0xff]
  %v760 = vld [vmem:[%s715 + $0x160] sm:$0xff]
  %v761 = vld [vmem:[%s715 + $0x168] sm:$0xff]
  %v762 = vld [vmem:[%s715 + $0x170] sm:$0xff]
  %v763 = vld [vmem:[%s715 + $0x178] sm:$0xff]
  %v764 = vld [vmem:[%s715 + $0x180] sm:$0xff]
  %v765 = vld [vmem:[%s715 + $0x188] sm:$0xff]
  %v766 = vld [vmem:[%s715 + $0x190] sm:$0xff]
  %v767 = vld [vmem:[%s715 + $0x198] sm:$0xff]
  %v768 = vld [vmem:[%s715 + $0x1a0] sm:$0xff]
  %v769 = vld [vmem:[%s715 + $0x1a8] sm:$0xff]
  %v770 = vld [vmem:[%s715 + $0x1b0] sm:$0xff]
  %v771 = vld [vmem:[%s715 + $0x1b8] sm:$0xff]
  %v772 = vld [vmem:[%s715 + $0x1c0] sm:$0xff]
  %v773 = vld [vmem:[%s715 + $0x1c8] sm:$0xff]
  %v774 = vld [vmem:[%s715 + $0x1d0] sm:$0xff]
  %v775 = vld [vmem:[%s715 + $0x1d8] sm:$0xff]
  %v776 = vld [vmem:[%s715 + $0x1e0] sm:$0xff]
  %v777 = vld [vmem:[%s715 + $0x1e8] sm:$0xff]
  %v778 = vld [vmem:[%s715 + $0x1f0] sm:$0xff]
  %v779 = vld [vmem:[%s715 + $0x1f8] sm:$0xff]
  %780 = vmatprep.subr.mxu0 0.0
  %781 = vmatpush1.msra.mxu0 %v731
  %782 = vmatprep.subr.mxu0 0.0
  %783 = vmatpush1.msra.mxu0 %v730
  %784 = vmatprep.subr.mxu0 0.0
  %785 = vmatpush1.msra.mxu0 %v729
  %786 = vmatprep.subr.mxu0 0.0
  %787 = vmatpush1.msra.mxu0 %v728
  %788 = vmatprep.subr.mxu0 0.0
  %789 = vmatpush1.msra.mxu0 %v727
  %790 = vmatprep.subr.mxu0 0.0
  %791 = vmatpush1.msra.mxu0 %v726
  %792 = vmatprep.subr.mxu0 0.0
  %793 = vmatpush1.msra.mxu0 %v725
  %794 = vmatprep.subr.mxu0 0.0
  %795 = vmatpush1.msra.mxu0 %v724
  %796 = vmatprep.subr.mxu0 0.0
  %797 = vmatpush1.msra.mxu0 %v723
  %798 = vmatprep.subr.mxu0 0.0
  %799 = vmatpush1.msra.mxu0 %v722
  %800 = vmatprep.subr.mxu0 0.0
  %801 = vmatpush1.msra.mxu0 %v721
  %802 = vmatprep.subr.mxu0 0.0
  %803 = vmatpush1.msra.mxu0 %v720
  %804 = vmatprep.subr.mxu0 0.0
  %805 = vmatpush1.msra.mxu0 %v719
  %806 = vmatprep.subr.mxu0 0.0
  %807 = vmatpush1.msra.mxu0 %v718
  %808 = vmatprep.subr.mxu0 0.0
  %809 = vmatpush1.msra.mxu0 %v717
  %810 = vmatprep.subr.mxu0 0.0
  %811 = vmatpush1.msra.mxu0 %v716
  %812 = vmatprep.subr.mxu0 0.0
  %813 = vmatpush2.msra.mxu0 %v747
  %814 = vmatprep.subr.mxu0 0.0
  %815 = vmatpush2.msra.mxu0 %v746
  %816 = vmatprep.subr.mxu0 0.0
  %817 = vmatpush2.msra.mxu0 %v745
  %818 = vmatprep.subr.mxu0 0.0
  %819 = vmatpush2.msra.mxu0 %v744
  %820 = vmatprep.subr.mxu0 0.0
  %821 = vmatpush2.msra.mxu0 %v743
  %822 = vmatprep.subr.mxu0 0.0
  %823 = vmatpush2.msra.mxu0 %v742
  %824 = vmatprep.subr.mxu0 0.0
  %825 = vmatpush2.msra.mxu0 %v741
  %826 = vmatprep.subr.mxu0 0.0
  %827 = vmatpush2.msra.mxu0 %v740
  %828 = vmatprep.subr.mxu0 0.0
  %829 = vmatpush2.msra.mxu0 %v739
  %830 = vmatprep.subr.mxu0 0.0
  %831 = vmatpush2.msra.mxu0 %v738
  %832 = vmatprep.subr.mxu0 0.0
  %833 = vmatpush2.msra.mxu0 %v737
  %834 = vmatprep.subr.mxu0 0.0
  %835 = vmatpush2.msra.mxu0 %v736
  %836 = vmatprep.subr.mxu0 0.0
  %837 = vmatpush2.msra.mxu0 %v735
  %838 = vmatprep.subr.mxu0 0.0
  %839 = vmatpush2.msra.mxu0 %v734
  %840 = vmatprep.subr.mxu0 0.0
  %841 = vmatpush2.msra.mxu0 %v733
  %842 = vmatprep.subr.mxu0 0.0
  %843 = vmatpush2.msra.mxu0 %v732
  %844 = vmatprep.mubr.f32.mxu0 %v466
  %845 = vmatmul.mubr.f32.gmra.mxu0 %v465
  %v846 = vpop.f32.mrf.mxu0
  %v847 = vadd.f32 0.0, %v846
  %v848 = vpop.f32.mrf.mxu0
  %849 = vmatprep.mubr.f32.mxu0 %v470
  %850 = vmatmul.mubr.f32.gmra.mxu0 %v469
  %v851 = vpop.f32.mrf.mxu0
  %v852 = vadd.f32 0.0, %v851
  %v853 = vpop.f32.mrf.mxu0
  %854 = vmatprep.mubr.f32.mxu0 %v474
  %855 = vmatmul.mubr.f32.gmra.mxu0 %v473
  %v856 = vpop.f32.mrf.mxu0
  %v857 = vadd.f32 0.0, %v856
  %v858 = vpop.f32.mrf.mxu0
  %859 = vmatprep.mubr.f32.mxu0 %v478
  %860 = vmatmul.mubr.f32.gmra.mxu0 %v477
  %v861 = vpop.f32.mrf.mxu0
  %v862 = vadd.f32 0.0, %v861
  %v863 = vpop.f32.mrf.mxu0
  %864 = vdwg.mxu0
  %865 = vmatprep.subr.mxu0 0.0
  %866 = vmatpush1.msra.mxu0 %v763
  %867 = vmatprep.subr.mxu0 0.0
  %868 = vmatpush1.msra.mxu0 %v762
  %869 = vmatprep.subr.mxu0 0.0
  %870 = vmatpush1.msra.mxu0 %v761
  %871 = vmatprep.subr.mxu0 0.0
  %872 = vmatpush1.msra.mxu0 %v760
  %873 = vmatprep.subr.mxu0 0.0
  %874 = vmatpush1.msra.mxu0 %v759
  %875 = vmatprep.subr.mxu0 0.0
  %876 = vmatpush1.msra.mxu0 %v758
  %877 = vmatprep.subr.mxu0 0.0
  %878 = vmatpush1.msra.mxu0 %v757
  %879 = vmatprep.subr.mxu0 0.0
  %880 = vmatpush1.msra.mxu0 %v756
  %881 = vmatprep.subr.mxu0 0.0
  %882 = vmatpush1.msra.mxu0 %v755
  %883 = vmatprep.subr.mxu0 0.0
  %884 = vmatpush1.msra.mxu0 %v754
  %885 = vmatprep.subr.mxu0 0.0
  %886 = vmatpush1.msra.mxu0 %v753
  %887 = vmatprep.subr.mxu0 0.0
  %888 = vmatpush1.msra.mxu0 %v752
  %889 = vmatprep.subr.mxu0 0.0
  %890 = vmatpush1.msra.mxu0 %v751
  %891 = vmatprep.subr.mxu0 0.0
  %892 = vmatpush1.msra.mxu0 %v750
  %893 = vmatprep.subr.mxu0 0.0
  %894 = vmatpush1.msra.mxu0 %v749
  %895 = vmatprep.subr.mxu0 0.0
  %896 = vmatpush1.msra.mxu0 %v748
  %897 = vmatprep.subr.mxu0 0.0
  %898 = vmatpush2.msra.mxu0 %v779
  %899 = vmatprep.subr.mxu0 0.0
  %900 = vmatpush2.msra.mxu0 %v778
  %901 = vmatprep.subr.mxu0 0.0
  %902 = vmatpush2.msra.mxu0 %v777
  %903 = vmatprep.subr.mxu0 0.0
  %904 = vmatpush2.msra.mxu0 %v776
  %905 = vmatprep.subr.mxu0 0.0
  %906 = vmatpush2.msra.mxu0 %v775
  %907 = vmatprep.subr.mxu0 0.0
  %908 = vmatpush2.msra.mxu0 %v774
  %909 = vmatprep.subr.mxu0 0.0
  %910 = vmatpush2.msra.mxu0 %v773
  %911 = vmatprep.subr.mxu0 0.0
  %912 = vmatpush2.msra.mxu0 %v772
  %913 = vmatprep.subr.mxu0 0.0
  %914 = vmatpush2.msra.mxu0 %v771
  %915 = vmatprep.subr.mxu0 0.0
  %916 = vmatpush2.msra.mxu0 %v770
  %917 = vmatprep.subr.mxu0 0.0
  %918 = vmatpush2.msra.mxu0 %v769
  %919 = vmatprep.subr.mxu0 0.0
  %920 = vmatpush2.msra.mxu0 %v768
  %921 = vmatprep.subr.mxu0 0.0
  %922 = vmatpush2.msra.mxu0 %v767
  %923 = vmatprep.subr.mxu0 0.0
  %924 = vmatpush2.msra.mxu0 %v766
  %925 = vmatprep.subr.mxu0 0.0
  %926 = vmatpush2.msra.mxu0 %v765
  %927 = vmatprep.subr.mxu0 0.0
  %928 = vmatpush2.msra.mxu0 %v764
  %929 = vmatprep.mubr.f32.mxu0 %v468
  %930 = vmatmul.mubr.f32.gmra.mxu0 %v467
  %v931 = vpop.f32.mrf.mxu0
  %v932 = vadd.f32 %v847, %v931
  %v933 = vpop.f32.mrf.mxu0
  %934 = vmatprep.mubr.f32.mxu0 %v472
  %935 = vmatmul.mubr.f32.gmra.mxu0 %v471
  %v936 = vpop.f32.mrf.mxu0
  %v937 = vadd.f32 %v852, %v936
  %v938 = vpop.f32.mrf.mxu0
  %939 = vmatprep.mubr.f32.mxu0 %v476
  %940 = vmatmul.mubr.f32.gmra.mxu0 %v475
  %v941 = vpop.f32.mrf.mxu0
  %v942 = vadd.f32 %v857, %v941
  %v943 = vpop.f32.mrf.mxu0
  %944 = vmatprep.mubr.f32.mxu0 %v480
  %945 = vmatmul.mubr.f32.gmra.mxu0 %v479
  %v946 = vpop.f32.mrf.mxu0
  %v947 = vadd.f32 %v862, %v946
  %v948 = vpop.f32.mrf.mxu0
  %949 = vdwg.mxu0
  %s950 = scalar_lea.vmem %s3, 1024
  %v951 = vld [vmem:[%s950] sm:$0xff]
  %v952 = vld [vmem:[%s950 + $0x8] sm:$0xff]
  %v953 = vld [vmem:[%s950 + $0x10] sm:$0xff]
  %v954 = vld [vmem:[%s950 + $0x18] sm:$0xff]
  %v955 = vld [vmem:[%s950 + $0x20] sm:$0xff]
  %v956 = vld [vmem:[%s950 + $0x28] sm:$0xff]
  %v957 = vld [vmem:[%s950 + $0x30] sm:$0xff]
  %v958 = vld [vmem:[%s950 + $0x38] sm:$0xff]
  %v959 = vld [vmem:[%s950 + $0x40] sm:$0xff]
  %v960 = vld [vmem:[%s950 + $0x48] sm:$0xff]
  %v961 = vld [vmem:[%s950 + $0x50] sm:$0xff]
  %v962 = vld [vmem:[%s950 + $0x58] sm:$0xff]
  %v963 = vld [vmem:[%s950 + $0x60] sm:$0xff]
  %v964 = vld [vmem:[%s950 + $0x68] sm:$0xff]
  %v965 = vld [vmem:[%s950 + $0x70] sm:$0xff]
  %v966 = vld [vmem:[%s950 + $0x78] sm:$0xff]
  %v967 = vld [vmem:[%s950 + $0x80] sm:$0xff]
  %v968 = vld [vmem:[%s950 + $0x88] sm:$0xff]
  %v969 = vld [vmem:[%s950 + $0x90] sm:$0xff]
  %v970 = vld [vmem:[%s950 + $0x98] sm:$0xff]
  %v971 = vld [vmem:[%s950 + $0xa0] sm:$0xff]
  %v972 = vld [vmem:[%s950 + $0xa8] sm:$0xff]
  %v973 = vld [vmem:[%s950 + $0xb0] sm:$0xff]
  %v974 = vld [vmem:[%s950 + $0xb8] sm:$0xff]
  %v975 = vld [vmem:[%s950 + $0xc0] sm:$0xff]
  %v976 = vld [vmem:[%s950 + $0xc8] sm:$0xff]
  %v977 = vld [vmem:[%s950 + $0xd0] sm:$0xff]
  %v978 = vld [vmem:[%s950 + $0xd8] sm:$0xff]
  %v979 = vld [vmem:[%s950 + $0xe0] sm:$0xff]
  %v980 = vld [vmem:[%s950 + $0xe8] sm:$0xff]
  %v981 = vld [vmem:[%s950 + $0xf0] sm:$0xff]
  %v982 = vld [vmem:[%s950 + $0xf8] sm:$0xff]
  %v983 = vld [vmem:[%s950 + $0x100] sm:$0xff]
  %v984 = vld [vmem:[%s950 + $0x108] sm:$0xff]
  %v985 = vld [vmem:[%s950 + $0x110] sm:$0xff]
  %v986 = vld [vmem:[%s950 + $0x118] sm:$0xff]
  %v987 = vld [vmem:[%s950 + $0x120] sm:$0xff]
  %v988 = vld [vmem:[%s950 + $0x128] sm:$0xff]
  %v989 = vld [vmem:[%s950 + $0x130] sm:$0xff]
  %v990 = vld [vmem:[%s950 + $0x138] sm:$0xff]
  %v991 = vld [vmem:[%s950 + $0x140] sm:$0xff]
  %v992 = vld [vmem:[%s950 + $0x148] sm:$0xff]
  %v993 = vld [vmem:[%s950 + $0x150] sm:$0xff]
  %v994 = vld [vmem:[%s950 + $0x158] sm:$0xff]
  %v995 = vld [vmem:[%s950 + $0x160] sm:$0xff]
  %v996 = vld [vmem:[%s950 + $0x168] sm:$0xff]
  %v997 = vld [vmem:[%s950 + $0x170] sm:$0xff]
  %v998 = vld [vmem:[%s950 + $0x178] sm:$0xff]
  %v999 = vld [vmem:[%s950 + $0x180] sm:$0xff]
  %v1000 = vld [vmem:[%s950 + $0x188] sm:$0xff]
  %v1001 = vld [vmem:[%s950 + $0x190] sm:$0xff]
  %v1002 = vld [vmem:[%s950 + $0x198] sm:$0xff]
  %v1003 = vld [vmem:[%s950 + $0x1a0] sm:$0xff]
  %v1004 = vld [vmem:[%s950 + $0x1a8] sm:$0xff]
  %v1005 = vld [vmem:[%s950 + $0x1b0] sm:$0xff]
  %v1006 = vld [vmem:[%s950 + $0x1b8] sm:$0xff]
  %v1007 = vld [vmem:[%s950 + $0x1c0] sm:$0xff]
  %v1008 = vld [vmem:[%s950 + $0x1c8] sm:$0xff]
  %v1009 = vld [vmem:[%s950 + $0x1d0] sm:$0xff]
  %v1010 = vld [vmem:[%s950 + $0x1d8] sm:$0xff]
  %v1011 = vld [vmem:[%s950 + $0x1e0] sm:$0xff]
  %v1012 = vld [vmem:[%s950 + $0x1e8] sm:$0xff]
  %v1013 = vld [vmem:[%s950 + $0x1f0] sm:$0xff]
  %v1014 = vld [vmem:[%s950 + $0x1f8] sm:$0xff]
  %1015 = vmatprep.subr.mxu0 0.0
  %1016 = vmatpush1.msra.mxu0 %v966
  %1017 = vmatprep.subr.mxu0 0.0
  %1018 = vmatpush1.msra.mxu0 %v965
  %1019 = vmatprep.subr.mxu0 0.0
  %1020 = vmatpush1.msra.mxu0 %v964
  %1021 = vmatprep.subr.mxu0 0.0
  %1022 = vmatpush1.msra.mxu0 %v963
  %1023 = vmatprep.subr.mxu0 0.0
  %1024 = vmatpush1.msra.mxu0 %v962
  %1025 = vmatprep.subr.mxu0 0.0
  %1026 = vmatpush1.msra.mxu0 %v961
  %1027 = vmatprep.subr.mxu0 0.0
  %1028 = vmatpush1.msra.mxu0 %v960
  %1029 = vmatprep.subr.mxu0 0.0
  %1030 = vmatpush1.msra.mxu0 %v959
  %1031 = vmatprep.subr.mxu0 0.0
  %1032 = vmatpush1.msra.mxu0 %v958
  %1033 = vmatprep.subr.mxu0 0.0
  %1034 = vmatpush1.msra.mxu0 %v957
  %1035 = vmatprep.subr.mxu0 0.0
  %1036 = vmatpush1.msra.mxu0 %v956
  %1037 = vmatprep.subr.mxu0 0.0
  %1038 = vmatpush1.msra.mxu0 %v955
  %1039 = vmatprep.subr.mxu0 0.0
  %1040 = vmatpush1.msra.mxu0 %v954
  %1041 = vmatprep.subr.mxu0 0.0
  %1042 = vmatpush1.msra.mxu0 %v953
  %1043 = vmatprep.subr.mxu0 0.0
  %1044 = vmatpush1.msra.mxu0 %v952
  %1045 = vmatprep.subr.mxu0 0.0
  %1046 = vmatpush1.msra.mxu0 %v951
  %1047 = vmatprep.subr.mxu0 0.0
  %1048 = vmatpush2.msra.mxu0 %v982
  %1049 = vmatprep.subr.mxu0 0.0
  %1050 = vmatpush2.msra.mxu0 %v981
  %1051 = vmatprep.subr.mxu0 0.0
  %1052 = vmatpush2.msra.mxu0 %v980
  %1053 = vmatprep.subr.mxu0 0.0
  %1054 = vmatpush2.msra.mxu0 %v979
  %1055 = vmatprep.subr.mxu0 0.0
  %1056 = vmatpush2.msra.mxu0 %v978
  %1057 = vmatprep.subr.mxu0 0.0
  %1058 = vmatpush2.msra.mxu0 %v977
  %1059 = vmatprep.subr.mxu0 0.0
  %1060 = vmatpush2.msra.mxu0 %v976
  %1061 = vmatprep.subr.mxu0 0.0
  %1062 = vmatpush2.msra.mxu0 %v975
  %1063 = vmatprep.subr.mxu0 0.0
  %1064 = vmatpush2.msra.mxu0 %v974
  %1065 = vmatprep.subr.mxu0 0.0
  %1066 = vmatpush2.msra.mxu0 %v973
  %1067 = vmatprep.subr.mxu0 0.0
  %1068 = vmatpush2.msra.mxu0 %v972
  %1069 = vmatprep.subr.mxu0 0.0
  %1070 = vmatpush2.msra.mxu0 %v971
  %1071 = vmatprep.subr.mxu0 0.0
  %1072 = vmatpush2.msra.mxu0 %v970
  %1073 = vmatprep.subr.mxu0 0.0
  %1074 = vmatpush2.msra.mxu0 %v969
  %1075 = vmatprep.subr.mxu0 0.0
  %1076 = vmatpush2.msra.mxu0 %v968
  %1077 = vmatprep.subr.mxu0 0.0
  %1078 = vmatpush2.msra.mxu0 %v967
  %1079 = vmatprep.mubr.f32.mxu0 %v466
  %1080 = vmatmul.mubr.f32.gmra.mxu0 %v465
  %v1081 = vpop.f32.mrf.mxu0
  %v1082 = vadd.f32 0.0, %v1081
  %v1083 = vpop.f32.mrf.mxu0
  %1084 = vmatprep.mubr.f32.mxu0 %v470
  %1085 = vmatmul.mubr.f32.gmra.mxu0 %v469
  %v1086 = vpop.f32.mrf.mxu0
  %v1087 = vadd.f32 0.0, %v1086
  %v1088 = vpop.f32.mrf.mxu0
  %1089 = vmatprep.mubr.f32.mxu0 %v474
  %1090 = vmatmul.mubr.f32.gmra.mxu0 %v473
  %v1091 = vpop.f32.mrf.mxu0
  %v1092 = vadd.f32 0.0, %v1091
  %v1093 = vpop.f32.mrf.mxu0
  %1094 = vmatprep.mubr.f32.mxu0 %v478
  %1095 = vmatmul.mubr.f32.gmra.mxu0 %v477
  %v1096 = vpop.f32.mrf.mxu0
  %v1097 = vadd.f32 0.0, %v1096
  %v1098 = vpop.f32.mrf.mxu0
  %1099 = vdwg.mxu0
  %1100 = vmatprep.subr.mxu0 0.0
  %1101 = vmatpush1.msra.mxu0 %v998
  %1102 = vmatprep.subr.mxu0 0.0
  %1103 = vmatpush1.msra.mxu0 %v997
  %1104 = vmatprep.subr.mxu0 0.0
  %1105 = vmatpush1.msra.mxu0 %v996
  %1106 = vmatprep.subr.mxu0 0.0
  %1107 = vmatpush1.msra.mxu0 %v995
  %1108 = vmatprep.subr.mxu0 0.0
  %1109 = vmatpush1.msra.mxu0 %v994
  %1110 = vmatprep.subr.mxu0 0.0
  %1111 = vmatpush1.msra.mxu0 %v993
  %1112 = vmatprep.subr.mxu0 0.0
  %1113 = vmatpush1.msra.mxu0 %v992
  %1114 = vmatprep.subr.mxu0 0.0
  %1115 = vmatpush1.msra.mxu0 %v991
  %1116 = vmatprep.subr.mxu0 0.0
  %1117 = vmatpush1.msra.mxu0 %v990
  %1118 = vmatprep.subr.mxu0 0.0
  %1119 = vmatpush1.msra.mxu0 %v989
  %1120 = vmatprep.subr.mxu0 0.0
  %1121 = vmatpush1.msra.mxu0 %v988
  %1122 = vmatprep.subr.mxu0 0.0
  %1123 = vmatpush1.msra.mxu0 %v987
  %1124 = vmatprep.subr.mxu0 0.0
  %1125 = vmatpush1.msra.mxu0 %v986
  %1126 = vmatprep.subr.mxu0 0.0
  %1127 = vmatpush1.msra.mxu0 %v985
  %1128 = vmatprep.subr.mxu0 0.0
  %1129 = vmatpush1.msra.mxu0 %v984
  %1130 = vmatprep.subr.mxu0 0.0
  %1131 = vmatpush1.msra.mxu0 %v983
  %1132 = vmatprep.subr.mxu0 0.0
  %1133 = vmatpush2.msra.mxu0 %v1014
  %1134 = vmatprep.subr.mxu0 0.0
  %1135 = vmatpush2.msra.mxu0 %v1013
  %1136 = vmatprep.subr.mxu0 0.0
  %1137 = vmatpush2.msra.mxu0 %v1012
  %1138 = vmatprep.subr.mxu0 0.0
  %1139 = vmatpush2.msra.mxu0 %v1011
  %1140 = vmatprep.subr.mxu0 0.0
  %1141 = vmatpush2.msra.mxu0 %v1010
  %1142 = vmatprep.subr.mxu0 0.0
  %1143 = vmatpush2.msra.mxu0 %v1009
  %1144 = vmatprep.subr.mxu0 0.0
  %1145 = vmatpush2.msra.mxu0 %v1008
  %1146 = vmatprep.subr.mxu0 0.0
  %1147 = vmatpush2.msra.mxu0 %v1007
  %1148 = vmatprep.subr.mxu0 0.0
  %1149 = vmatpush2.msra.mxu0 %v1006
  %1150 = vmatprep.subr.mxu0 0.0
  %1151 = vmatpush2.msra.mxu0 %v1005
  %1152 = vmatprep.subr.mxu0 0.0
  %1153 = vmatpush2.msra.mxu0 %v1004
  %1154 = vmatprep.subr.mxu0 0.0
  %1155 = vmatpush2.msra.mxu0 %v1003
  %1156 = vmatprep.subr.mxu0 0.0
  %1157 = vmatpush2.msra.mxu0 %v1002
  %1158 = vmatprep.subr.mxu0 0.0
  %1159 = vmatpush2.msra.mxu0 %v1001
  %1160 = vmatprep.subr.mxu0 0.0
  %1161 = vmatpush2.msra.mxu0 %v1000
  %1162 = vmatprep.subr.mxu0 0.0
  %1163 = vmatpush2.msra.mxu0 %v999
  %1164 = vmatprep.mubr.f32.mxu0 %v468
  %1165 = vmatmul.mubr.f32.gmra.mxu0 %v467
  %v1166 = vpop.f32.mrf.mxu0
  %v1167 = vadd.f32 %v1082, %v1166
  %v1168 = vpop.f32.mrf.mxu0
  %1169 = vmatprep.mubr.f32.mxu0 %v472
  %1170 = vmatmul.mubr.f32.gmra.mxu0 %v471
  %v1171 = vpop.f32.mrf.mxu0
  %v1172 = vadd.f32 %v1087, %v1171
  %v1173 = vpop.f32.mrf.mxu0
  %1174 = vmatprep.mubr.f32.mxu0 %v476
  %1175 = vmatmul.mubr.f32.gmra.mxu0 %v475
  %v1176 = vpop.f32.mrf.mxu0
  %v1177 = vadd.f32 %v1092, %v1176
  %v1178 = vpop.f32.mrf.mxu0
  %1179 = vmatprep.mubr.f32.mxu0 %v480
  %1180 = vmatmul.mubr.f32.gmra.mxu0 %v479
  %v1181 = vpop.f32.mrf.mxu0
  %v1182 = vadd.f32 %v1097, %v1181
  %v1183 = vpop.f32.mrf.mxu0
  %1184 = vdwg.mxu0
  %s1185 = scalar_lea.vmem %s3, 1536
  %v1186 = vld [vmem:[%s1185] sm:$0xff]
  %v1187 = vld [vmem:[%s1185 + $0x8] sm:$0xff]
  %v1188 = vld [vmem:[%s1185 + $0x10] sm:$0xff]
  %v1189 = vld [vmem:[%s1185 + $0x18] sm:$0xff]
  %v1190 = vld [vmem:[%s1185 + $0x20] sm:$0xff]
  %v1191 = vld [vmem:[%s1185 + $0x28] sm:$0xff]
  %v1192 = vld [vmem:[%s1185 + $0x30] sm:$0xff]
  %v1193 = vld [vmem:[%s1185 + $0x38] sm:$0xff]
  %v1194 = vld [vmem:[%s1185 + $0x40] sm:$0xff]
  %v1195 = vld [vmem:[%s1185 + $0x48] sm:$0xff]
  %v1196 = vld [vmem:[%s1185 + $0x50] sm:$0xff]
  %v1197 = vld [vmem:[%s1185 + $0x58] sm:$0xff]
  %v1198 = vld [vmem:[%s1185 + $0x60] sm:$0xff]
  %v1199 = vld [vmem:[%s1185 + $0x68] sm:$0xff]
  %v1200 = vld [vmem:[%s1185 + $0x70] sm:$0xff]
  %v1201 = vld [vmem:[%s1185 + $0x78] sm:$0xff]
  %v1202 = vld [vmem:[%s1185 + $0x80] sm:$0xff]
  %v1203 = vld [vmem:[%s1185 + $0x88] sm:$0xff]
  %v1204 = vld [vmem:[%s1185 + $0x90] sm:$0xff]
  %v1205 = vld [vmem:[%s1185 + $0x98] sm:$0xff]
  %v1206 = vld [vmem:[%s1185 + $0xa0] sm:$0xff]
  %v1207 = vld [vmem:[%s1185 + $0xa8] sm:$0xff]
  %v1208 = vld [vmem:[%s1185 + $0xb0] sm:$0xff]
  %v1209 = vld [vmem:[%s1185 + $0xb8] sm:$0xff]
  %v1210 = vld [vmem:[%s1185 + $0xc0] sm:$0xff]
  %v1211 = vld [vmem:[%s1185 + $0xc8] sm:$0xff]
  %v1212 = vld [vmem:[%s1185 + $0xd0] sm:$0xff]
  %v1213 = vld [vmem:[%s1185 + $0xd8] sm:$0xff]
  %v1214 = vld [vmem:[%s1185 + $0xe0] sm:$0xff]
  %v1215 = vld [vmem:[%s1185 + $0xe8] sm:$0xff]
  %v1216 = vld [vmem:[%s1185 + $0xf0] sm:$0xff]
  %v1217 = vld [vmem:[%s1185 + $0xf8] sm:$0xff]
  %v1218 = vld [vmem:[%s1185 + $0x100] sm:$0xff]
  %v1219 = vld [vmem:[%s1185 + $0x108] sm:$0xff]
  %v1220 = vld [vmem:[%s1185 + $0x110] sm:$0xff]
  %v1221 = vld [vmem:[%s1185 + $0x118] sm:$0xff]
  %v1222 = vld [vmem:[%s1185 + $0x120] sm:$0xff]
  %v1223 = vld [vmem:[%s1185 + $0x128] sm:$0xff]
  %v1224 = vld [vmem:[%s1185 + $0x130] sm:$0xff]
  %v1225 = vld [vmem:[%s1185 + $0x138] sm:$0xff]
  %v1226 = vld [vmem:[%s1185 + $0x140] sm:$0xff]
  %v1227 = vld [vmem:[%s1185 + $0x148] sm:$0xff]
  %v1228 = vld [vmem:[%s1185 + $0x150] sm:$0xff]
  %v1229 = vld [vmem:[%s1185 + $0x158] sm:$0xff]
  %v1230 = vld [vmem:[%s1185 + $0x160] sm:$0xff]
  %v1231 = vld [vmem:[%s1185 + $0x168] sm:$0xff]
  %v1232 = vld [vmem:[%s1185 + $0x170] sm:$0xff]
  %v1233 = vld [vmem:[%s1185 + $0x178] sm:$0xff]
  %v1234 = vld [vmem:[%s1185 + $0x180] sm:$0xff]
  %v1235 = vld [vmem:[%s1185 + $0x188] sm:$0xff]
  %v1236 = vld [vmem:[%s1185 + $0x190] sm:$0xff]
  %v1237 = vld [vmem:[%s1185 + $0x198] sm:$0xff]
  %v1238 = vld [vmem:[%s1185 + $0x1a0] sm:$0xff]
  %v1239 = vld [vmem:[%s1185 + $0x1a8] sm:$0xff]
  %v1240 = vld [vmem:[%s1185 + $0x1b0] sm:$0xff]
  %v1241 = vld [vmem:[%s1185 + $0x1b8] sm:$0xff]
  %v1242 = vld [vmem:[%s1185 + $0x1c0] sm:$0xff]
  %v1243 = vld [vmem:[%s1185 + $0x1c8] sm:$0xff]
  %v1244 = vld [vmem:[%s1185 + $0x1d0] sm:$0xff]
  %v1245 = vld [vmem:[%s1185 + $0x1d8] sm:$0xff]
  %v1246 = vld [vmem:[%s1185 + $0x1e0] sm:$0xff]
  %v1247 = vld [vmem:[%s1185 + $0x1e8] sm:$0xff]
  %v1248 = vld [vmem:[%s1185 + $0x1f0] sm:$0xff]
  %v1249 = vld [vmem:[%s1185 + $0x1f8] sm:$0xff]
  %1250 = vmatprep.subr.mxu0 0.0
  %1251 = vmatpush1.msra.mxu0 %v1201
  %1252 = vmatprep.subr.mxu0 0.0
  %1253 = vmatpush1.msra.mxu0 %v1200
  %1254 = vmatprep.subr.mxu0 0.0
  %1255 = vmatpush1.msra.mxu0 %v1199
  %1256 = vmatprep.subr.mxu0 0.0
  %1257 = vmatpush1.msra.mxu0 %v1198
  %1258 = vmatprep.subr.mxu0 0.0
  %1259 = vmatpush1.msra.mxu0 %v1197
  %1260 = vmatprep.subr.mxu0 0.0
  %1261 = vmatpush1.msra.mxu0 %v1196
  %1262 = vmatprep.subr.mxu0 0.0
  %1263 = vmatpush1.msra.mxu0 %v1195
  %1264 = vmatprep.subr.mxu0 0.0
  %1265 = vmatpush1.msra.mxu0 %v1194
  %1266 = vmatprep.subr.mxu0 0.0
  %1267 = vmatpush1.msra.mxu0 %v1193
  %1268 = vmatprep.subr.mxu0 0.0
  %1269 = vmatpush1.msra.mxu0 %v1192
  %1270 = vmatprep.subr.mxu0 0.0
  %1271 = vmatpush1.msra.mxu0 %v1191
  %1272 = vmatprep.subr.mxu0 0.0
  %1273 = vmatpush1.msra.mxu0 %v1190
  %1274 = vmatprep.subr.mxu0 0.0
  %1275 = vmatpush1.msra.mxu0 %v1189
  %1276 = vmatprep.subr.mxu0 0.0
  %1277 = vmatpush1.msra.mxu0 %v1188
  %1278 = vmatprep.subr.mxu0 0.0
  %1279 = vmatpush1.msra.mxu0 %v1187
  %1280 = vmatprep.subr.mxu0 0.0
  %1281 = vmatpush1.msra.mxu0 %v1186
  %1282 = vmatprep.subr.mxu0 0.0
  %1283 = vmatpush2.msra.mxu0 %v1217
  %1284 = vmatprep.subr.mxu0 0.0
  %1285 = vmatpush2.msra.mxu0 %v1216
  %1286 = vmatprep.subr.mxu0 0.0
  %1287 = vmatpush2.msra.mxu0 %v1215
  %1288 = vmatprep.subr.mxu0 0.0
  %1289 = vmatpush2.msra.mxu0 %v1214
  %1290 = vmatprep.subr.mxu0 0.0
  %1291 = vmatpush2.msra.mxu0 %v1213
  %1292 = vmatprep.subr.mxu0 0.0
  %1293 = vmatpush2.msra.mxu0 %v1212
  %1294 = vmatprep.subr.mxu0 0.0
  %1295 = vmatpush2.msra.mxu0 %v1211
  %1296 = vmatprep.subr.mxu0 0.0
  %1297 = vmatpush2.msra.mxu0 %v1210
  %1298 = vmatprep.subr.mxu0 0.0
  %1299 = vmatpush2.msra.mxu0 %v1209
  %1300 = vmatprep.subr.mxu0 0.0
  %1301 = vmatpush2.msra.mxu0 %v1208
  %1302 = vmatprep.subr.mxu0 0.0
  %1303 = vmatpush2.msra.mxu0 %v1207
  %1304 = vmatprep.subr.mxu0 0.0
  %1305 = vmatpush2.msra.mxu0 %v1206
  %1306 = vmatprep.subr.mxu0 0.0
  %1307 = vmatpush2.msra.mxu0 %v1205
  %1308 = vmatprep.subr.mxu0 0.0
  %1309 = vmatpush2.msra.mxu0 %v1204
  %1310 = vmatprep.subr.mxu0 0.0
  %1311 = vmatpush2.msra.mxu0 %v1203
  %1312 = vmatprep.subr.mxu0 0.0
  %1313 = vmatpush2.msra.mxu0 %v1202
  %1314 = vmatprep.mubr.f32.mxu0 %v466
  %1315 = vmatmul.mubr.f32.gmra.mxu0 %v465
  %v1316 = vpop.f32.mrf.mxu0
  %v1317 = vadd.f32 0.0, %v1316
  %v1318 = vpop.f32.mrf.mxu0
  %1319 = vmatprep.mubr.f32.mxu0 %v470
  %1320 = vmatmul.mubr.f32.gmra.mxu0 %v469
  %v1321 = vpop.f32.mrf.mxu0
  %v1322 = vadd.f32 0.0, %v1321
  %v1323 = vpop.f32.mrf.mxu0
  %1324 = vmatprep.mubr.f32.mxu0 %v474
  %1325 = vmatmul.mubr.f32.gmra.mxu0 %v473
  %v1326 = vpop.f32.mrf.mxu0
  %v1327 = vadd.f32 0.0, %v1326
  %v1328 = vpop.f32.mrf.mxu0
  %1329 = vmatprep.mubr.f32.mxu0 %v478
  %1330 = vmatmul.mubr.f32.gmra.mxu0 %v477
  %v1331 = vpop.f32.mrf.mxu0
  %v1332 = vadd.f32 0.0, %v1331
  %v1333 = vpop.f32.mrf.mxu0
  %1334 = vdwg.mxu0
  %1335 = vmatprep.subr.mxu0 0.0
  %1336 = vmatpush1.msra.mxu0 %v1233
  %1337 = vmatprep.subr.mxu0 0.0
  %1338 = vmatpush1.msra.mxu0 %v1232
  %1339 = vmatprep.subr.mxu0 0.0
  %1340 = vmatpush1.msra.mxu0 %v1231
  %1341 = vmatprep.subr.mxu0 0.0
  %1342 = vmatpush1.msra.mxu0 %v1230
  %1343 = vmatprep.subr.mxu0 0.0
  %1344 = vmatpush1.msra.mxu0 %v1229
  %1345 = vmatprep.subr.mxu0 0.0
  %1346 = vmatpush1.msra.mxu0 %v1228
  %1347 = vmatprep.subr.mxu0 0.0
  %1348 = vmatpush1.msra.mxu0 %v1227
  %1349 = vmatprep.subr.mxu0 0.0
  %1350 = vmatpush1.msra.mxu0 %v1226
  %1351 = vmatprep.subr.mxu0 0.0
  %1352 = vmatpush1.msra.mxu0 %v1225
  %1353 = vmatprep.subr.mxu0 0.0
  %1354 = vmatpush1.msra.mxu0 %v1224
  %1355 = vmatprep.subr.mxu0 0.0
  %1356 = vmatpush1.msra.mxu0 %v1223
  %1357 = vmatprep.subr.mxu0 0.0
  %1358 = vmatpush1.msra.mxu0 %v1222
  %1359 = vmatprep.subr.mxu0 0.0
  %1360 = vmatpush1.msra.mxu0 %v1221
  %1361 = vmatprep.subr.mxu0 0.0
  %1362 = vmatpush1.msra.mxu0 %v1220
  %1363 = vmatprep.subr.mxu0 0.0
  %1364 = vmatpush1.msra.mxu0 %v1219
  %1365 = vmatprep.subr.mxu0 0.0
  %1366 = vmatpush1.msra.mxu0 %v1218
  %1367 = vmatprep.subr.mxu0 0.0
  %1368 = vmatpush2.msra.mxu0 %v1249
  %1369 = vmatprep.subr.mxu0 0.0
  %1370 = vmatpush2.msra.mxu0 %v1248
  %1371 = vmatprep.subr.mxu0 0.0
  %1372 = vmatpush2.msra.mxu0 %v1247
  %1373 = vmatprep.subr.mxu0 0.0
  %1374 = vmatpush2.msra.mxu0 %v1246
  %1375 = vmatprep.subr.mxu0 0.0
  %1376 = vmatpush2.msra.mxu0 %v1245
  %1377 = vmatprep.subr.mxu0 0.0
  %1378 = vmatpush2.msra.mxu0 %v1244
  %1379 = vmatprep.subr.mxu0 0.0
  %1380 = vmatpush2.msra.mxu0 %v1243
  %1381 = vmatprep.subr.mxu0 0.0
  %1382 = vmatpush2.msra.mxu0 %v1242
  %1383 = vmatprep.subr.mxu0 0.0
  %1384 = vmatpush2.msra.mxu0 %v1241
  %1385 = vmatprep.subr.mxu0 0.0
  %1386 = vmatpush2.msra.mxu0 %v1240
  %1387 = vmatprep.subr.mxu0 0.0
  %1388 = vmatpush2.msra.mxu0 %v1239
  %1389 = vmatprep.subr.mxu0 0.0
  %1390 = vmatpush2.msra.mxu0 %v1238
  %1391 = vmatprep.subr.mxu0 0.0
  %1392 = vmatpush2.msra.mxu0 %v1237
  %1393 = vmatprep.subr.mxu0 0.0
  %1394 = vmatpush2.msra.mxu0 %v1236
  %1395 = vmatprep.subr.mxu0 0.0
  %1396 = vmatpush2.msra.mxu0 %v1235
  %1397 = vmatprep.subr.mxu0 0.0
  %1398 = vmatpush2.msra.mxu0 %v1234
  %1399 = vmatprep.mubr.f32.mxu0 %v468
  %1400 = vmatmul.mubr.f32.gmra.mxu0 %v467
  %v1401 = vpop.f32.mrf.mxu0
  %v1402 = vadd.f32 %v1317, %v1401
  %v1403 = vpop.f32.mrf.mxu0
  %1404 = vmatprep.mubr.f32.mxu0 %v472
  %1405 = vmatmul.mubr.f32.gmra.mxu0 %v471
  %v1406 = vpop.f32.mrf.mxu0
  %v1407 = vadd.f32 %v1322, %v1406
  %v1408 = vpop.f32.mrf.mxu0
  %1409 = vmatprep.mubr.f32.mxu0 %v476
  %1410 = vmatmul.mubr.f32.gmra.mxu0 %v475
  %v1411 = vpop.f32.mrf.mxu0
  %v1412 = vadd.f32 %v1327, %v1411
  %v1413 = vpop.f32.mrf.mxu0
  %1414 = vmatprep.mubr.f32.mxu0 %v480
  %1415 = vmatmul.mubr.f32.gmra.mxu0 %v479
  %v1416 = vpop.f32.mrf.mxu0
  %v1417 = vadd.f32 %v1332, %v1416
  %v1418 = vpop.f32.mrf.mxu0
  %1419 = vdwg.mxu0
  %s1420 = scalar_lea.vmem %s3, 2048
  %v1421 = vld [vmem:[%s1420] sm:$0xff]
  %v1422 = vld [vmem:[%s1420 + $0x8] sm:$0xff]
  %v1423 = vld [vmem:[%s1420 + $0x10] sm:$0xff]
  %v1424 = vld [vmem:[%s1420 + $0x18] sm:$0xff]
  %v1425 = vld [vmem:[%s1420 + $0x20] sm:$0xff]
  %v1426 = vld [vmem:[%s1420 + $0x28] sm:$0xff]
  %v1427 = vld [vmem:[%s1420 + $0x30] sm:$0xff]
  %v1428 = vld [vmem:[%s1420 + $0x38] sm:$0xff]
  %v1429 = vld [vmem:[%s1420 + $0x40] sm:$0xff]
  %v1430 = vld [vmem:[%s1420 + $0x48] sm:$0xff]
  %v1431 = vld [vmem:[%s1420 + $0x50] sm:$0xff]
  %v1432 = vld [vmem:[%s1420 + $0x58] sm:$0xff]
  %v1433 = vld [vmem:[%s1420 + $0x60] sm:$0xff]
  %v1434 = vld [vmem:[%s1420 + $0x68] sm:$0xff]
  %v1435 = vld [vmem:[%s1420 + $0x70] sm:$0xff]
  %v1436 = vld [vmem:[%s1420 + $0x78] sm:$0xff]
  %v1437 = vld [vmem:[%s1420 + $0x80] sm:$0xff]
  %v1438 = vld [vmem:[%s1420 + $0x88] sm:$0xff]
  %v1439 = vld [vmem:[%s1420 + $0x90] sm:$0xff]
  %v1440 = vld [vmem:[%s1420 + $0x98] sm:$0xff]
  %v1441 = vld [vmem:[%s1420 + $0xa0] sm:$0xff]
  %v1442 = vld [vmem:[%s1420 + $0xa8] sm:$0xff]
  %v1443 = vld [vmem:[%s1420 + $0xb0] sm:$0xff]
  %v1444 = vld [vmem:[%s1420 + $0xb8] sm:$0xff]
  %v1445 = vld [vmem:[%s1420 + $0xc0] sm:$0xff]
  %v1446 = vld [vmem:[%s1420 + $0xc8] sm:$0xff]
  %v1447 = vld [vmem:[%s1420 + $0xd0] sm:$0xff]
  %v1448 = vld [vmem:[%s1420 + $0xd8] sm:$0xff]
  %v1449 = vld [vmem:[%s1420 + $0xe0] sm:$0xff]
  %v1450 = vld [vmem:[%s1420 + $0xe8] sm:$0xff]
  %v1451 = vld [vmem:[%s1420 + $0xf0] sm:$0xff]
  %v1452 = vld [vmem:[%s1420 + $0xf8] sm:$0xff]
  %v1453 = vld [vmem:[%s1420 + $0x100] sm:$0xff]
  %v1454 = vld [vmem:[%s1420 + $0x108] sm:$0xff]
  %v1455 = vld [vmem:[%s1420 + $0x110] sm:$0xff]
  %v1456 = vld [vmem:[%s1420 + $0x118] sm:$0xff]
  %v1457 = vld [vmem:[%s1420 + $0x120] sm:$0xff]
  %v1458 = vld [vmem:[%s1420 + $0x128] sm:$0xff]
  %v1459 = vld [vmem:[%s1420 + $0x130] sm:$0xff]
  %v1460 = vld [vmem:[%s1420 + $0x138] sm:$0xff]
  %v1461 = vld [vmem:[%s1420 + $0x140] sm:$0xff]
  %v1462 = vld [vmem:[%s1420 + $0x148] sm:$0xff]
  %v1463 = vld [vmem:[%s1420 + $0x150] sm:$0xff]
  %v1464 = vld [vmem:[%s1420 + $0x158] sm:$0xff]
  %v1465 = vld [vmem:[%s1420 + $0x160] sm:$0xff]
  %v1466 = vld [vmem:[%s1420 + $0x168] sm:$0xff]
  %v1467 = vld [vmem:[%s1420 + $0x170] sm:$0xff]
  %v1468 = vld [vmem:[%s1420 + $0x178] sm:$0xff]
  %v1469 = vld [vmem:[%s1420 + $0x180] sm:$0xff]
  %v1470 = vld [vmem:[%s1420 + $0x188] sm:$0xff]
  %v1471 = vld [vmem:[%s1420 + $0x190] sm:$0xff]
  %v1472 = vld [vmem:[%s1420 + $0x198] sm:$0xff]
  %v1473 = vld [vmem:[%s1420 + $0x1a0] sm:$0xff]
  %v1474 = vld [vmem:[%s1420 + $0x1a8] sm:$0xff]
  %v1475 = vld [vmem:[%s1420 + $0x1b0] sm:$0xff]
  %v1476 = vld [vmem:[%s1420 + $0x1b8] sm:$0xff]
  %v1477 = vld [vmem:[%s1420 + $0x1c0] sm:$0xff]
  %v1478 = vld [vmem:[%s1420 + $0x1c8] sm:$0xff]
  %v1479 = vld [vmem:[%s1420 + $0x1d0] sm:$0xff]
  %v1480 = vld [vmem:[%s1420 + $0x1d8] sm:$0xff]
  %v1481 = vld [vmem:[%s1420 + $0x1e0] sm:$0xff]
  %v1482 = vld [vmem:[%s1420 + $0x1e8] sm:$0xff]
  %v1483 = vld [vmem:[%s1420 + $0x1f0] sm:$0xff]
  %v1484 = vld [vmem:[%s1420 + $0x1f8] sm:$0xff]
  %1485 = vmatprep.subr.mxu0 0.0
  %1486 = vmatpush1.msra.mxu0 %v1436
  %1487 = vmatprep.subr.mxu0 0.0
  %1488 = vmatpush1.msra.mxu0 %v1435
  %1489 = vmatprep.subr.mxu0 0.0
  %1490 = vmatpush1.msra.mxu0 %v1434
  %1491 = vmatprep.subr.mxu0 0.0
  %1492 = vmatpush1.msra.mxu0 %v1433
  %1493 = vmatprep.subr.mxu0 0.0
  %1494 = vmatpush1.msra.mxu0 %v1432
  %1495 = vmatprep.subr.mxu0 0.0
  %1496 = vmatpush1.msra.mxu0 %v1431
  %1497 = vmatprep.subr.mxu0 0.0
  %1498 = vmatpush1.msra.mxu0 %v1430
  %1499 = vmatprep.subr.mxu0 0.0
  %1500 = vmatpush1.msra.mxu0 %v1429
  %1501 = vmatprep.subr.mxu0 0.0
  %1502 = vmatpush1.msra.mxu0 %v1428
  %1503 = vmatprep.subr.mxu0 0.0
  %1504 = vmatpush1.msra.mxu0 %v1427
  %1505 = vmatprep.subr.mxu0 0.0
  %1506 = vmatpush1.msra.mxu0 %v1426
  %1507 = vmatprep.subr.mxu0 0.0
  %1508 = vmatpush1.msra.mxu0 %v1425
  %1509 = vmatprep.subr.mxu0 0.0
  %1510 = vmatpush1.msra.mxu0 %v1424
  %1511 = vmatprep.subr.mxu0 0.0
  %1512 = vmatpush1.msra.mxu0 %v1423
  %1513 = vmatprep.subr.mxu0 0.0
  %1514 = vmatpush1.msra.mxu0 %v1422
  %1515 = vmatprep.subr.mxu0 0.0
  %1516 = vmatpush1.msra.mxu0 %v1421
  %1517 = vmatprep.subr.mxu0 0.0
  %1518 = vmatpush2.msra.mxu0 %v1452
  %1519 = vmatprep.subr.mxu0 0.0
  %1520 = vmatpush2.msra.mxu0 %v1451
  %1521 = vmatprep.subr.mxu0 0.0
  %1522 = vmatpush2.msra.mxu0 %v1450
  %1523 = vmatprep.subr.mxu0 0.0
  %1524 = vmatpush2.msra.mxu0 %v1449
  %1525 = vmatprep.subr.mxu0 0.0
  %1526 = vmatpush2.msra.mxu0 %v1448
  %1527 = vmatprep.subr.mxu0 0.0
  %1528 = vmatpush2.msra.mxu0 %v1447
  %1529 = vmatprep.subr.mxu0 0.0
  %1530 = vmatpush2.msra.mxu0 %v1446
  %1531 = vmatprep.subr.mxu0 0.0
  %1532 = vmatpush2.msra.mxu0 %v1445
  %1533 = vmatprep.subr.mxu0 0.0
  %1534 = vmatpush2.msra.mxu0 %v1444
  %1535 = vmatprep.subr.mxu0 0.0
  %1536 = vmatpush2.msra.mxu0 %v1443
  %1537 = vmatprep.subr.mxu0 0.0
  %1538 = vmatpush2.msra.mxu0 %v1442
  %1539 = vmatprep.subr.mxu0 0.0
  %1540 = vmatpush2.msra.mxu0 %v1441
  %1541 = vmatprep.subr.mxu0 0.0
  %1542 = vmatpush2.msra.mxu0 %v1440
  %1543 = vmatprep.subr.mxu0 0.0
  %1544 = vmatpush2.msra.mxu0 %v1439
  %1545 = vmatprep.subr.mxu0 0.0
  %1546 = vmatpush2.msra.mxu0 %v1438
  %1547 = vmatprep.subr.mxu0 0.0
  %1548 = vmatpush2.msra.mxu0 %v1437
  %1549 = vmatprep.mubr.f32.mxu0 %v466
  %1550 = vmatmul.mubr.f32.gmra.mxu0 %v465
  %v1551 = vpop.f32.mrf.mxu0
  %v1552 = vadd.f32 0.0, %v1551
  %v1553 = vpop.f32.mrf.mxu0
  %1554 = vmatprep.mubr.f32.mxu0 %v470
  %1555 = vmatmul.mubr.f32.gmra.mxu0 %v469
  %v1556 = vpop.f32.mrf.mxu0
  %v1557 = vadd.f32 0.0, %v1556
  %v1558 = vpop.f32.mrf.mxu0
  %1559 = vmatprep.mubr.f32.mxu0 %v474
  %1560 = vmatmul.mubr.f32.gmra.mxu0 %v473
  %v1561 = vpop.f32.mrf.mxu0
  %v1562 = vadd.f32 0.0, %v1561
  %v1563 = vpop.f32.mrf.mxu0
  %1564 = vmatprep.mubr.f32.mxu0 %v478
  %1565 = vmatmul.mubr.f32.gmra.mxu0 %v477
  %v1566 = vpop.f32.mrf.mxu0
  %v1567 = vadd.f32 0.0, %v1566
  %v1568 = vpop.f32.mrf.mxu0
  %1569 = vdwg.mxu0
  %1570 = vmatprep.subr.mxu0 0.0
  %1571 = vmatpush1.msra.mxu0 %v1468
  %1572 = vmatprep.subr.mxu0 0.0
  %1573 = vmatpush1.msra.mxu0 %v1467
  %1574 = vmatprep.subr.mxu0 0.0
  %1575 = vmatpush1.msra.mxu0 %v1466
  %1576 = vmatprep.subr.mxu0 0.0
  %1577 = vmatpush1.msra.mxu0 %v1465
  %1578 = vmatprep.subr.mxu0 0.0
  %1579 = vmatpush1.msra.mxu0 %v1464
  %1580 = vmatprep.subr.mxu0 0.0
  %1581 = vmatpush1.msra.mxu0 %v1463
  %1582 = vmatprep.subr.mxu0 0.0
  %1583 = vmatpush1.msra.mxu0 %v1462
  %1584 = vmatprep.subr.mxu0 0.0
  %1585 = vmatpush1.msra.mxu0 %v1461
  %1586 = vmatprep.subr.mxu0 0.0
  %1587 = vmatpush1.msra.mxu0 %v1460
  %1588 = vmatprep.subr.mxu0 0.0
  %1589 = vmatpush1.msra.mxu0 %v1459
  %1590 = vmatprep.subr.mxu0 0.0
  %1591 = vmatpush1.msra.mxu0 %v1458
  %1592 = vmatprep.subr.mxu0 0.0
  %1593 = vmatpush1.msra.mxu0 %v1457
  %1594 = vmatprep.subr.mxu0 0.0
  %1595 = vmatpush1.msra.mxu0 %v1456
  %1596 = vmatprep.subr.mxu0 0.0
  %1597 = vmatpush1.msra.mxu0 %v1455
  %1598 = vmatprep.subr.mxu0 0.0
  %1599 = vmatpush1.msra.mxu0 %v1454
  %1600 = vmatprep.subr.mxu0 0.0
  %1601 = vmatpush1.msra.mxu0 %v1453
  %1602 = vmatprep.subr.mxu0 0.0
  %1603 = vmatpush2.msra.mxu0 %v1484
  %1604 = vmatprep.subr.mxu0 0.0
  %1605 = vmatpush2.msra.mxu0 %v1483
  %1606 = vmatprep.subr.mxu0 0.0
  %1607 = vmatpush2.msra.mxu0 %v1482
  %1608 = vmatprep.subr.mxu0 0.0
  %1609 = vmatpush2.msra.mxu0 %v1481
  %1610 = vmatprep.subr.mxu0 0.0
  %1611 = vmatpush2.msra.mxu0 %v1480
  %1612 = vmatprep.subr.mxu0 0.0
  %1613 = vmatpush2.msra.mxu0 %v1479
  %1614 = vmatprep.subr.mxu0 0.0
  %1615 = vmatpush2.msra.mxu0 %v1478
  %1616 = vmatprep.subr.mxu0 0.0
  %1617 = vmatpush2.msra.mxu0 %v1477
  %1618 = vmatprep.subr.mxu0 0.0
  %1619 = vmatpush2.msra.mxu0 %v1476
  %1620 = vmatprep.subr.mxu0 0.0
  %1621 = vmatpush2.msra.mxu0 %v1475
  %1622 = vmatprep.subr.mxu0 0.0
  %1623 = vmatpush2.msra.mxu0 %v1474
  %1624 = vmatprep.subr.mxu0 0.0
  %1625 = vmatpush2.msra.mxu0 %v1473
  %1626 = vmatprep.subr.mxu0 0.0
  %1627 = vmatpush2.msra.mxu0 %v1472
  %1628 = vmatprep.subr.mxu0 0.0
  %1629 = vmatpush2.msra.mxu0 %v1471
  %1630 = vmatprep.subr.mxu0 0.0
  %1631 = vmatpush2.msra.mxu0 %v1470
  %1632 = vmatprep.subr.mxu0 0.0
  %1633 = vmatpush2.msra.mxu0 %v1469
  %1634 = vmatprep.mubr.f32.mxu0 %v468
  %1635 = vmatmul.mubr.f32.gmra.mxu0 %v467
  %v1636 = vpop.f32.mrf.mxu0
  %v1637 = vadd.f32 %v1552, %v1636
  %v1638 = vpop.f32.mrf.mxu0
  %1639 = vmatprep.mubr.f32.mxu0 %v472
  %1640 = vmatmul.mubr.f32.gmra.mxu0 %v471
  %v1641 = vpop.f32.mrf.mxu0
  %v1642 = vadd.f32 %v1557, %v1641
  %v1643 = vpop.f32.mrf.mxu0
  %1644 = vmatprep.mubr.f32.mxu0 %v476
  %1645 = vmatmul.mubr.f32.gmra.mxu0 %v475
  %v1646 = vpop.f32.mrf.mxu0
  %v1647 = vadd.f32 %v1562, %v1646
  %v1648 = vpop.f32.mrf.mxu0
  %1649 = vmatprep.mubr.f32.mxu0 %v480
  %1650 = vmatmul.mubr.f32.gmra.mxu0 %v479
  %v1651 = vpop.f32.mrf.mxu0
  %v1652 = vadd.f32 %v1567, %v1651
  %v1653 = vpop.f32.mrf.mxu0
  %1654 = vdwg.mxu0
  %s1655 = scalar_lea.vmem %s3, 2560
  %v1656 = vld [vmem:[%s1655] sm:$0xff]
  %v1657 = vld [vmem:[%s1655 + $0x8] sm:$0xff]
  %v1658 = vld [vmem:[%s1655 + $0x10] sm:$0xff]
  %v1659 = vld [vmem:[%s1655 + $0x18] sm:$0xff]
  %v1660 = vld [vmem:[%s1655 + $0x20] sm:$0xff]
  %v1661 = vld [vmem:[%s1655 + $0x28] sm:$0xff]
  %v1662 = vld [vmem:[%s1655 + $0x30] sm:$0xff]
  %v1663 = vld [vmem:[%s1655 + $0x38] sm:$0xff]
  %v1664 = vld [vmem:[%s1655 + $0x40] sm:$0xff]
  %v1665 = vld [vmem:[%s1655 + $0x48] sm:$0xff]
  %v1666 = vld [vmem:[%s1655 + $0x50] sm:$0xff]
  %v1667 = vld [vmem:[%s1655 + $0x58] sm:$0xff]
  %v1668 = vld [vmem:[%s1655 + $0x60] sm:$0xff]
  %v1669 = vld [vmem:[%s1655 + $0x68] sm:$0xff]
  %v1670 = vld [vmem:[%s1655 + $0x70] sm:$0xff]
  %v1671 = vld [vmem:[%s1655 + $0x78] sm:$0xff]
  %v1672 = vld [vmem:[%s1655 + $0x80] sm:$0xff]
  %v1673 = vld [vmem:[%s1655 + $0x88] sm:$0xff]
  %v1674 = vld [vmem:[%s1655 + $0x90] sm:$0xff]
  %v1675 = vld [vmem:[%s1655 + $0x98] sm:$0xff]
  %v1676 = vld [vmem:[%s1655 + $0xa0] sm:$0xff]
  %v1677 = vld [vmem:[%s1655 + $0xa8] sm:$0xff]
  %v1678 = vld [vmem:[%s1655 + $0xb0] sm:$0xff]
  %v1679 = vld [vmem:[%s1655 + $0xb8] sm:$0xff]
  %v1680 = vld [vmem:[%s1655 + $0xc0] sm:$0xff]
  %v1681 = vld [vmem:[%s1655 + $0xc8] sm:$0xff]
  %v1682 = vld [vmem:[%s1655 + $0xd0] sm:$0xff]
  %v1683 = vld [vmem:[%s1655 + $0xd8] sm:$0xff]
  %v1684 = vld [vmem:[%s1655 + $0xe0] sm:$0xff]
  %v1685 = vld [vmem:[%s1655 + $0xe8] sm:$0xff]
  %v1686 = vld [vmem:[%s1655 + $0xf0] sm:$0xff]
  %v1687 = vld [vmem:[%s1655 + $0xf8] sm:$0xff]
  %v1688 = vld [vmem:[%s1655 + $0x100] sm:$0xff]
  %v1689 = vld [vmem:[%s1655 + $0x108] sm:$0xff]
  %v1690 = vld [vmem:[%s1655 + $0x110] sm:$0xff]
  %v1691 = vld [vmem:[%s1655 + $0x118] sm:$0xff]
  %v1692 = vld [vmem:[%s1655 + $0x120] sm:$0xff]
  %v1693 = vld [vmem:[%s1655 + $0x128] sm:$0xff]
  %v1694 = vld [vmem:[%s1655 + $0x130] sm:$0xff]
  %v1695 = vld [vmem:[%s1655 + $0x138] sm:$0xff]
  %v1696 = vld [vmem:[%s1655 + $0x140] sm:$0xff]
  %v1697 = vld [vmem:[%s1655 + $0x148] sm:$0xff]
  %v1698 = vld [vmem:[%s1655 + $0x150] sm:$0xff]
  %v1699 = vld [vmem:[%s1655 + $0x158] sm:$0xff]
  %v1700 = vld [vmem:[%s1655 + $0x160] sm:$0xff]
  %v1701 = vld [vmem:[%s1655 + $0x168] sm:$0xff]
  %v1702 = vld [vmem:[%s1655 + $0x170] sm:$0xff]
  %v1703 = vld [vmem:[%s1655 + $0x178] sm:$0xff]
  %v1704 = vld [vmem:[%s1655 + $0x180] sm:$0xff]
  %v1705 = vld [vmem:[%s1655 + $0x188] sm:$0xff]
  %v1706 = vld [vmem:[%s1655 + $0x190] sm:$0xff]
  %v1707 = vld [vmem:[%s1655 + $0x198] sm:$0xff]
  %v1708 = vld [vmem:[%s1655 + $0x1a0] sm:$0xff]
  %v1709 = vld [vmem:[%s1655 + $0x1a8] sm:$0xff]
  %v1710 = vld [vmem:[%s1655 + $0x1b0] sm:$0xff]
  %v1711 = vld [vmem:[%s1655 + $0x1b8] sm:$0xff]
  %v1712 = vld [vmem:[%s1655 + $0x1c0] sm:$0xff]
  %v1713 = vld [vmem:[%s1655 + $0x1c8] sm:$0xff]
  %v1714 = vld [vmem:[%s1655 + $0x1d0] sm:$0xff]
  %v1715 = vld [vmem:[%s1655 + $0x1d8] sm:$0xff]
  %v1716 = vld [vmem:[%s1655 + $0x1e0] sm:$0xff]
  %v1717 = vld [vmem:[%s1655 + $0x1e8] sm:$0xff]
  %v1718 = vld [vmem:[%s1655 + $0x1f0] sm:$0xff]
  %v1719 = vld [vmem:[%s1655 + $0x1f8] sm:$0xff]
  %1720 = vmatprep.subr.mxu0 0.0
  %1721 = vmatpush1.msra.mxu0 %v1671
  %1722 = vmatprep.subr.mxu0 0.0
  %1723 = vmatpush1.msra.mxu0 %v1670
  %1724 = vmatprep.subr.mxu0 0.0
  %1725 = vmatpush1.msra.mxu0 %v1669
  %1726 = vmatprep.subr.mxu0 0.0
  %1727 = vmatpush1.msra.mxu0 %v1668
  %1728 = vmatprep.subr.mxu0 0.0
  %1729 = vmatpush1.msra.mxu0 %v1667
  %1730 = vmatprep.subr.mxu0 0.0
  %1731 = vmatpush1.msra.mxu0 %v1666
  %1732 = vmatprep.subr.mxu0 0.0
  %1733 = vmatpush1.msra.mxu0 %v1665
  %1734 = vmatprep.subr.mxu0 0.0
  %1735 = vmatpush1.msra.mxu0 %v1664
  %1736 = vmatprep.subr.mxu0 0.0
  %1737 = vmatpush1.msra.mxu0 %v1663
  %1738 = vmatprep.subr.mxu0 0.0
  %1739 = vmatpush1.msra.mxu0 %v1662
  %1740 = vmatprep.subr.mxu0 0.0
  %1741 = vmatpush1.msra.mxu0 %v1661
  %1742 = vmatprep.subr.mxu0 0.0
  %1743 = vmatpush1.msra.mxu0 %v1660
  %1744 = vmatprep.subr.mxu0 0.0
  %1745 = vmatpush1.msra.mxu0 %v1659
  %1746 = vmatprep.subr.mxu0 0.0
  %1747 = vmatpush1.msra.mxu0 %v1658
  %1748 = vmatprep.subr.mxu0 0.0
  %1749 = vmatpush1.msra.mxu0 %v1657
  %1750 = vmatprep.subr.mxu0 0.0
  %1751 = vmatpush1.msra.mxu0 %v1656
  %1752 = vmatprep.subr.mxu0 0.0
  %1753 = vmatpush2.msra.mxu0 %v1687
  %1754 = vmatprep.subr.mxu0 0.0
  %1755 = vmatpush2.msra.mxu0 %v1686
  %1756 = vmatprep.subr.mxu0 0.0
  %1757 = vmatpush2.msra.mxu0 %v1685
  %1758 = vmatprep.subr.mxu0 0.0
  %1759 = vmatpush2.msra.mxu0 %v1684
  %1760 = vmatprep.subr.mxu0 0.0
  %1761 = vmatpush2.msra.mxu0 %v1683
  %1762 = vmatprep.subr.mxu0 0.0
  %1763 = vmatpush2.msra.mxu0 %v1682
  %1764 = vmatprep.subr.mxu0 0.0
  %1765 = vmatpush2.msra.mxu0 %v1681
  %1766 = vmatprep.subr.mxu0 0.0
  %1767 = vmatpush2.msra.mxu0 %v1680
  %1768 = vmatprep.subr.mxu0 0.0
  %1769 = vmatpush2.msra.mxu0 %v1679
  %1770 = vmatprep.subr.mxu0 0.0
  %1771 = vmatpush2.msra.mxu0 %v1678
  %1772 = vmatprep.subr.mxu0 0.0
  %1773 = vmatpush2.msra.mxu0 %v1677
  %1774 = vmatprep.subr.mxu0 0.0
  %1775 = vmatpush2.msra.mxu0 %v1676
  %1776 = vmatprep.subr.mxu0 0.0
  %1777 = vmatpush2.msra.mxu0 %v1675
  %1778 = vmatprep.subr.mxu0 0.0
  %1779 = vmatpush2.msra.mxu0 %v1674
  %1780 = vmatprep.subr.mxu0 0.0
  %1781 = vmatpush2.msra.mxu0 %v1673
  %1782 = vmatprep.subr.mxu0 0.0
  %1783 = vmatpush2.msra.mxu0 %v1672
  %1784 = vmatprep.mubr.f32.mxu0 %v466
  %1785 = vmatmul.mubr.f32.gmra.mxu0 %v465
  %v1786 = vpop.f32.mrf.mxu0
  %v1787 = vadd.f32 0.0, %v1786
  %v1788 = vpop.f32.mrf.mxu0
  %1789 = vmatprep.mubr.f32.mxu0 %v470
  %1790 = vmatmul.mubr.f32.gmra.mxu0 %v469
  %v1791 = vpop.f32.mrf.mxu0
  %v1792 = vadd.f32 0.0, %v1791
  %v1793 = vpop.f32.mrf.mxu0
  %1794 = vmatprep.mubr.f32.mxu0 %v474
  %1795 = vmatmul.mubr.f32.gmra.mxu0 %v473
  %v1796 = vpop.f32.mrf.mxu0
  %v1797 = vadd.f32 0.0, %v1796
  %v1798 = vpop.f32.mrf.mxu0
  %1799 = vmatprep.mubr.f32.mxu0 %v478
  %1800 = vmatmul.mubr.f32.gmra.mxu0 %v477
  %v1801 = vpop.f32.mrf.mxu0
  %v1802 = vadd.f32 0.0, %v1801
  %v1803 = vpop.f32.mrf.mxu0
  %1804 = vdwg.mxu0
  %1805 = vmatprep.subr.mxu0 0.0
  %1806 = vmatpush1.msra.mxu0 %v1703
  %1807 = vmatprep.subr.mxu0 0.0
  %1808 = vmatpush1.msra.mxu0 %v1702
  %1809 = vmatprep.subr.mxu0 0.0
  %1810 = vmatpush1.msra.mxu0 %v1701
  %1811 = vmatprep.subr.mxu0 0.0
  %1812 = vmatpush1.msra.mxu0 %v1700
  %1813 = vmatprep.subr.mxu0 0.0
  %1814 = vmatpush1.msra.mxu0 %v1699
  %1815 = vmatprep.subr.mxu0 0.0
  %1816 = vmatpush1.msra.mxu0 %v1698
  %1817 = vmatprep.subr.mxu0 0.0
  %1818 = vmatpush1.msra.mxu0 %v1697
  %1819 = vmatprep.subr.mxu0 0.0
  %1820 = vmatpush1.msra.mxu0 %v1696
  %1821 = vmatprep.subr.mxu0 0.0
  %1822 = vmatpush1.msra.mxu0 %v1695
  %1823 = vmatprep.subr.mxu0 0.0
  %1824 = vmatpush1.msra.mxu0 %v1694
  %1825 = vmatprep.subr.mxu0 0.0
  %1826 = vmatpush1.msra.mxu0 %v1693
  %1827 = vmatprep.subr.mxu0 0.0
  %1828 = vmatpush1.msra.mxu0 %v1692
  %1829 = vmatprep.subr.mxu0 0.0
  %1830 = vmatpush1.msra.mxu0 %v1691
  %1831 = vmatprep.subr.mxu0 0.0
  %1832 = vmatpush1.msra.mxu0 %v1690
  %1833 = vmatprep.subr.mxu0 0.0
  %1834 = vmatpush1.msra.mxu0 %v1689
  %1835 = vmatprep.subr.mxu0 0.0
  %1836 = vmatpush1.msra.mxu0 %v1688
  %1837 = vmatprep.subr.mxu0 0.0
  %1838 = vmatpush2.msra.mxu0 %v1719
  %1839 = vmatprep.subr.mxu0 0.0
  %1840 = vmatpush2.msra.mxu0 %v1718
  %1841 = vmatprep.subr.mxu0 0.0
  %1842 = vmatpush2.msra.mxu0 %v1717
  %1843 = vmatprep.subr.mxu0 0.0
  %1844 = vmatpush2.msra.mxu0 %v1716
  %1845 = vmatprep.subr.mxu0 0.0
  %1846 = vmatpush2.msra.mxu0 %v1715
  %1847 = vmatprep.subr.mxu0 0.0
  %1848 = vmatpush2.msra.mxu0 %v1714
  %1849 = vmatprep.subr.mxu0 0.0
  %1850 = vmatpush2.msra.mxu0 %v1713
  %1851 = vmatprep.subr.mxu0 0.0
  %1852 = vmatpush2.msra.mxu0 %v1712
  %1853 = vmatprep.subr.mxu0 0.0
  %1854 = vmatpush2.msra.mxu0 %v1711
  %1855 = vmatprep.subr.mxu0 0.0
  %1856 = vmatpush2.msra.mxu0 %v1710
  %1857 = vmatprep.subr.mxu0 0.0
  %1858 = vmatpush2.msra.mxu0 %v1709
  %1859 = vmatprep.subr.mxu0 0.0
  %1860 = vmatpush2.msra.mxu0 %v1708
  %1861 = vmatprep.subr.mxu0 0.0
  %1862 = vmatpush2.msra.mxu0 %v1707
  %1863 = vmatprep.subr.mxu0 0.0
  %1864 = vmatpush2.msra.mxu0 %v1706
  %1865 = vmatprep.subr.mxu0 0.0
  %1866 = vmatpush2.msra.mxu0 %v1705
  %1867 = vmatprep.subr.mxu0 0.0
  %1868 = vmatpush2.msra.mxu0 %v1704
  %1869 = vmatprep.mubr.f32.mxu0 %v468
  %1870 = vmatmul.mubr.f32.gmra.mxu0 %v467
  %v1871 = vpop.f32.mrf.mxu0
  %v1872 = vadd.f32 %v1787, %v1871
  %v1873 = vpop.f32.mrf.mxu0
  %1874 = vmatprep.mubr.f32.mxu0 %v472
  %1875 = vmatmul.mubr.f32.gmra.mxu0 %v471
  %v1876 = vpop.f32.mrf.mxu0
  %v1877 = vadd.f32 %v1792, %v1876
  %v1878 = vpop.f32.mrf.mxu0
  %1879 = vmatprep.mubr.f32.mxu0 %v476
  %1880 = vmatmul.mubr.f32.gmra.mxu0 %v475
  %v1881 = vpop.f32.mrf.mxu0
  %v1882 = vadd.f32 %v1797, %v1881
  %v1883 = vpop.f32.mrf.mxu0
  %1884 = vmatprep.mubr.f32.mxu0 %v480
  %1885 = vmatmul.mubr.f32.gmra.mxu0 %v479
  %v1886 = vpop.f32.mrf.mxu0
  %v1887 = vadd.f32 %v1802, %v1886
  %v1888 = vpop.f32.mrf.mxu0
  %1889 = vdwg.mxu0
  %s1890 = scalar_lea.vmem %s3, 3072
  %v1891 = vld [vmem:[%s1890] sm:$0xff]
  %v1892 = vld [vmem:[%s1890 + $0x8] sm:$0xff]
  %v1893 = vld [vmem:[%s1890 + $0x10] sm:$0xff]
  %v1894 = vld [vmem:[%s1890 + $0x18] sm:$0xff]
  %v1895 = vld [vmem:[%s1890 + $0x20] sm:$0xff]
  %v1896 = vld [vmem:[%s1890 + $0x28] sm:$0xff]
  %v1897 = vld [vmem:[%s1890 + $0x30] sm:$0xff]
  %v1898 = vld [vmem:[%s1890 + $0x38] sm:$0xff]
  %v1899 = vld [vmem:[%s1890 + $0x40] sm:$0xff]
  %v1900 = vld [vmem:[%s1890 + $0x48] sm:$0xff]
  %v1901 = vld [vmem:[%s1890 + $0x50] sm:$0xff]
  %v1902 = vld [vmem:[%s1890 + $0x58] sm:$0xff]
  %v1903 = vld [vmem:[%s1890 + $0x60] sm:$0xff]
  %v1904 = vld [vmem:[%s1890 + $0x68] sm:$0xff]
  %v1905 = vld [vmem:[%s1890 + $0x70] sm:$0xff]
  %v1906 = vld [vmem:[%s1890 + $0x78] sm:$0xff]
  %v1907 = vld [vmem:[%s1890 + $0x80] sm:$0xff]
  %v1908 = vld [vmem:[%s1890 + $0x88] sm:$0xff]
  %v1909 = vld [vmem:[%s1890 + $0x90] sm:$0xff]
  %v1910 = vld [vmem:[%s1890 + $0x98] sm:$0xff]
  %v1911 = vld [vmem:[%s1890 + $0xa0] sm:$0xff]
  %v1912 = vld [vmem:[%s1890 + $0xa8] sm:$0xff]
  %v1913 = vld [vmem:[%s1890 + $0xb0] sm:$0xff]
  %v1914 = vld [vmem:[%s1890 + $0xb8] sm:$0xff]
  %v1915 = vld [vmem:[%s1890 + $0xc0] sm:$0xff]
  %v1916 = vld [vmem:[%s1890 + $0xc8] sm:$0xff]
  %v1917 = vld [vmem:[%s1890 + $0xd0] sm:$0xff]
  %v1918 = vld [vmem:[%s1890 + $0xd8] sm:$0xff]
  %v1919 = vld [vmem:[%s1890 + $0xe0] sm:$0xff]
  %v1920 = vld [vmem:[%s1890 + $0xe8] sm:$0xff]
  %v1921 = vld [vmem:[%s1890 + $0xf0] sm:$0xff]
  %v1922 = vld [vmem:[%s1890 + $0xf8] sm:$0xff]
  %v1923 = vld [vmem:[%s1890 + $0x100] sm:$0xff]
  %v1924 = vld [vmem:[%s1890 + $0x108] sm:$0xff]
  %v1925 = vld [vmem:[%s1890 + $0x110] sm:$0xff]
  %v1926 = vld [vmem:[%s1890 + $0x118] sm:$0xff]
  %v1927 = vld [vmem:[%s1890 + $0x120] sm:$0xff]
  %v1928 = vld [vmem:[%s1890 + $0x128] sm:$0xff]
  %v1929 = vld [vmem:[%s1890 + $0x130] sm:$0xff]
  %v1930 = vld [vmem:[%s1890 + $0x138] sm:$0xff]
  %v1931 = vld [vmem:[%s1890 + $0x140] sm:$0xff]
  %v1932 = vld [vmem:[%s1890 + $0x148] sm:$0xff]
  %v1933 = vld [vmem:[%s1890 + $0x150] sm:$0xff]
  %v1934 = vld [vmem:[%s1890 + $0x158] sm:$0xff]
  %v1935 = vld [vmem:[%s1890 + $0x160] sm:$0xff]
  %v1936 = vld [vmem:[%s1890 + $0x168] sm:$0xff]
  %v1937 = vld [vmem:[%s1890 + $0x170] sm:$0xff]
  %v1938 = vld [vmem:[%s1890 + $0x178] sm:$0xff]
  %v1939 = vld [vmem:[%s1890 + $0x180] sm:$0xff]
  %v1940 = vld [vmem:[%s1890 + $0x188] sm:$0xff]
  %v1941 = vld [vmem:[%s1890 + $0x190] sm:$0xff]
  %v1942 = vld [vmem:[%s1890 + $0x198] sm:$0xff]
  %v1943 = vld [vmem:[%s1890 + $0x1a0] sm:$0xff]
  %v1944 = vld [vmem:[%s1890 + $0x1a8] sm:$0xff]
  %v1945 = vld [vmem:[%s1890 + $0x1b0] sm:$0xff]
  %v1946 = vld [vmem:[%s1890 + $0x1b8] sm:$0xff]
  %v1947 = vld [vmem:[%s1890 + $0x1c0] sm:$0xff]
  %v1948 = vld [vmem:[%s1890 + $0x1c8] sm:$0xff]
  %v1949 = vld [vmem:[%s1890 + $0x1d0] sm:$0xff]
  %v1950 = vld [vmem:[%s1890 + $0x1d8] sm:$0xff]
  %v1951 = vld [vmem:[%s1890 + $0x1e0] sm:$0xff]
  %v1952 = vld [vmem:[%s1890 + $0x1e8] sm:$0xff]
  %v1953 = vld [vmem:[%s1890 + $0x1f0] sm:$0xff]
  %v1954 = vld [vmem:[%s1890 + $0x1f8] sm:$0xff]
  %1955 = vmatprep.subr.mxu0 0.0
  %1956 = vmatpush1.msra.mxu0 %v1906
  %1957 = vmatprep.subr.mxu0 0.0
  %1958 = vmatpush1.msra.mxu0 %v1905
  %1959 = vmatprep.subr.mxu0 0.0
  %1960 = vmatpush1.msra.mxu0 %v1904
  %1961 = vmatprep.subr.mxu0 0.0
  %1962 = vmatpush1.msra.mxu0 %v1903
  %1963 = vmatprep.subr.mxu0 0.0
  %1964 = vmatpush1.msra.mxu0 %v1902
  %1965 = vmatprep.subr.mxu0 0.0
  %1966 = vmatpush1.msra.mxu0 %v1901
  %1967 = vmatprep.subr.mxu0 0.0
  %1968 = vmatpush1.msra.mxu0 %v1900
  %1969 = vmatprep.subr.mxu0 0.0
  %1970 = vmatpush1.msra.mxu0 %v1899
  %1971 = vmatprep.subr.mxu0 0.0
  %1972 = vmatpush1.msra.mxu0 %v1898
  %1973 = vmatprep.subr.mxu0 0.0
  %1974 = vmatpush1.msra.mxu0 %v1897
  %1975 = vmatprep.subr.mxu0 0.0
  %1976 = vmatpush1.msra.mxu0 %v1896
  %1977 = vmatprep.subr.mxu0 0.0
  %1978 = vmatpush1.msra.mxu0 %v1895
  %1979 = vmatprep.subr.mxu0 0.0
  %1980 = vmatpush1.msra.mxu0 %v1894
  %1981 = vmatprep.subr.mxu0 0.0
  %1982 = vmatpush1.msra.mxu0 %v1893
  %1983 = vmatprep.subr.mxu0 0.0
  %1984 = vmatpush1.msra.mxu0 %v1892
  %1985 = vmatprep.subr.mxu0 0.0
  %1986 = vmatpush1.msra.mxu0 %v1891
  %1987 = vmatprep.subr.mxu0 0.0
  %1988 = vmatpush2.msra.mxu0 %v1922
  %1989 = vmatprep.subr.mxu0 0.0
  %1990 = vmatpush2.msra.mxu0 %v1921
  %1991 = vmatprep.subr.mxu0 0.0
  %1992 = vmatpush2.msra.mxu0 %v1920
  %1993 = vmatprep.subr.mxu0 0.0
  %1994 = vmatpush2.msra.mxu0 %v1919
  %1995 = vmatprep.subr.mxu0 0.0
  %1996 = vmatpush2.msra.mxu0 %v1918
  %1997 = vmatprep.subr.mxu0 0.0
  %1998 = vmatpush2.msra.mxu0 %v1917
  %1999 = vmatprep.subr.mxu0 0.0
  %2000 = vmatpush2.msra.mxu0 %v1916
  %2001 = vmatprep.subr.mxu0 0.0
  %2002 = vmatpush2.msra.mxu0 %v1915
  %2003 = vmatprep.subr.mxu0 0.0
  %2004 = vmatpush2.msra.mxu0 %v1914
  %2005 = vmatprep.subr.mxu0 0.0
  %2006 = vmatpush2.msra.mxu0 %v1913
  %2007 = vmatprep.subr.mxu0 0.0
  %2008 = vmatpush2.msra.mxu0 %v1912
  %2009 = vmatprep.subr.mxu0 0.0
  %2010 = vmatpush2.msra.mxu0 %v1911
  %2011 = vmatprep.subr.mxu0 0.0
  %2012 = vmatpush2.msra.mxu0 %v1910
  %2013 = vmatprep.subr.mxu0 0.0
  %2014 = vmatpush2.msra.mxu0 %v1909
  %2015 = vmatprep.subr.mxu0 0.0
  %2016 = vmatpush2.msra.mxu0 %v1908
  %2017 = vmatprep.subr.mxu0 0.0
  %2018 = vmatpush2.msra.mxu0 %v1907
  %2019 = vmatprep.mubr.f32.mxu0 %v466
  %2020 = vmatmul.mubr.f32.gmra.mxu0 %v465
  %v2021 = vpop.f32.mrf.mxu0
  %v2022 = vadd.f32 0.0, %v2021
  %v2023 = vpop.f32.mrf.mxu0
  %2024 = vmatprep.mubr.f32.mxu0 %v470
  %2025 = vmatmul.mubr.f32.gmra.mxu0 %v469
  %v2026 = vpop.f32.mrf.mxu0
  %v2027 = vadd.f32 0.0, %v2026
  %v2028 = vpop.f32.mrf.mxu0
  %2029 = vmatprep.mubr.f32.mxu0 %v474
  %2030 = vmatmul.mubr.f32.gmra.mxu0 %v473
  %v2031 = vpop.f32.mrf.mxu0
  %v2032 = vadd.f32 0.0, %v2031
  %v2033 = vpop.f32.mrf.mxu0
  %2034 = vmatprep.mubr.f32.mxu0 %v478
  %2035 = vmatmul.mubr.f32.gmra.mxu0 %v477
  %v2036 = vpop.f32.mrf.mxu0
  %v2037 = vadd.f32 0.0, %v2036
  %v2038 = vpop.f32.mrf.mxu0
  %2039 = vdwg.mxu0
  %2040 = vmatprep.subr.mxu0 0.0
  %2041 = vmatpush1.msra.mxu0 %v1938
  %2042 = vmatprep.subr.mxu0 0.0
  %2043 = vmatpush1.msra.mxu0 %v1937
  %2044 = vmatprep.subr.mxu0 0.0
  %2045 = vmatpush1.msra.mxu0 %v1936
  %2046 = vmatprep.subr.mxu0 0.0
  %2047 = vmatpush1.msra.mxu0 %v1935
  %2048 = vmatprep.subr.mxu0 0.0
  %2049 = vmatpush1.msra.mxu0 %v1934
  %2050 = vmatprep.subr.mxu0 0.0
  %2051 = vmatpush1.msra.mxu0 %v1933
  %2052 = vmatprep.subr.mxu0 0.0
  %2053 = vmatpush1.msra.mxu0 %v1932
  %2054 = vmatprep.subr.mxu0 0.0
  %2055 = vmatpush1.msra.mxu0 %v1931
  %2056 = vmatprep.subr.mxu0 0.0
  %2057 = vmatpush1.msra.mxu0 %v1930
  %2058 = vmatprep.subr.mxu0 0.0
  %2059 = vmatpush1.msra.mxu0 %v1929
  %2060 = vmatprep.subr.mxu0 0.0
  %2061 = vmatpush1.msra.mxu0 %v1928
  %2062 = vmatprep.subr.mxu0 0.0
  %2063 = vmatpush1.msra.mxu0 %v1927
  %2064 = vmatprep.subr.mxu0 0.0
  %2065 = vmatpush1.msra.mxu0 %v1926
  %2066 = vmatprep.subr.mxu0 0.0
  %2067 = vmatpush1.msra.mxu0 %v1925
  %2068 = vmatprep.subr.mxu0 0.0
  %2069 = vmatpush1.msra.mxu0 %v1924
  %2070 = vmatprep.subr.mxu0 0.0
  %2071 = vmatpush1.msra.mxu0 %v1923
  %2072 = vmatprep.subr.mxu0 0.0
  %2073 = vmatpush2.msra.mxu0 %v1954
  %2074 = vmatprep.subr.mxu0 0.0
  %2075 = vmatpush2.msra.mxu0 %v1953
  %2076 = vmatprep.subr.mxu0 0.0
  %2077 = vmatpush2.msra.mxu0 %v1952
  %2078 = vmatprep.subr.mxu0 0.0
  %2079 = vmatpush2.msra.mxu0 %v1951
  %2080 = vmatprep.subr.mxu0 0.0
  %2081 = vmatpush2.msra.mxu0 %v1950
  %2082 = vmatprep.subr.mxu0 0.0
  %2083 = vmatpush2.msra.mxu0 %v1949
  %2084 = vmatprep.subr.mxu0 0.0
  %2085 = vmatpush2.msra.mxu0 %v1948
  %2086 = vmatprep.subr.mxu0 0.0
  %2087 = vmatpush2.msra.mxu0 %v1947
  %2088 = vmatprep.subr.mxu0 0.0
  %2089 = vmatpush2.msra.mxu0 %v1946
  %2090 = vmatprep.subr.mxu0 0.0
  %2091 = vmatpush2.msra.mxu0 %v1945
  %2092 = vmatprep.subr.mxu0 0.0
  %2093 = vmatpush2.msra.mxu0 %v1944
  %2094 = vmatprep.subr.mxu0 0.0
  %2095 = vmatpush2.msra.mxu0 %v1943
  %2096 = vmatprep.subr.mxu0 0.0
  %2097 = vmatpush2.msra.mxu0 %v1942
  %2098 = vmatprep.subr.mxu0 0.0
  %2099 = vmatpush2.msra.mxu0 %v1941
  %2100 = vmatprep.subr.mxu0 0.0
  %2101 = vmatpush2.msra.mxu0 %v1940
  %2102 = vmatprep.subr.mxu0 0.0
  %2103 = vmatpush2.msra.mxu0 %v1939
  %2104 = vmatprep.mubr.f32.mxu0 %v468
  %2105 = vmatmul.mubr.f32.gmra.mxu0 %v467
  %v2106 = vpop.f32.mrf.mxu0
  %v2107 = vadd.f32 %v2022, %v2106
  %v2108 = vpop.f32.mrf.mxu0
  %2109 = vmatprep.mubr.f32.mxu0 %v472
  %2110 = vmatmul.mubr.f32.gmra.mxu0 %v471
  %v2111 = vpop.f32.mrf.mxu0
  %v2112 = vadd.f32 %v2027, %v2111
  %v2113 = vpop.f32.mrf.mxu0
  %2114 = vmatprep.mubr.f32.mxu0 %v476
  %2115 = vmatmul.mubr.f32.gmra.mxu0 %v475
  %v2116 = vpop.f32.mrf.mxu0
  %v2117 = vadd.f32 %v2032, %v2116
  %v2118 = vpop.f32.mrf.mxu0
  %2119 = vmatprep.mubr.f32.mxu0 %v480
  %2120 = vmatmul.mubr.f32.gmra.mxu0 %v479
  %v2121 = vpop.f32.mrf.mxu0
  %v2122 = vadd.f32 %v2037, %v2121
  %v2123 = vpop.f32.mrf.mxu0
  %2124 = vdwg.mxu0
  %s2125 = scalar_lea.vmem %s3, 3584
  %v2126 = vld [vmem:[%s2125] sm:$0xff]
  %v2127 = vld [vmem:[%s2125 + $0x8] sm:$0xff]
  %v2128 = vld [vmem:[%s2125 + $0x10] sm:$0xff]
  %v2129 = vld [vmem:[%s2125 + $0x18] sm:$0xff]
  %v2130 = vld [vmem:[%s2125 + $0x20] sm:$0xff]
  %v2131 = vld [vmem:[%s2125 + $0x28] sm:$0xff]
  %v2132 = vld [vmem:[%s2125 + $0x30] sm:$0xff]
  %v2133 = vld [vmem:[%s2125 + $0x38] sm:$0xff]
  %v2134 = vld [vmem:[%s2125 + $0x40] sm:$0xff]
  %v2135 = vld [vmem:[%s2125 + $0x48] sm:$0xff]
  %v2136 = vld [vmem:[%s2125 + $0x50] sm:$0xff]
  %v2137 = vld [vmem:[%s2125 + $0x58] sm:$0xff]
  %v2138 = vld [vmem:[%s2125 + $0x60] sm:$0xff]
  %v2139 = vld [vmem:[%s2125 + $0x68] sm:$0xff]
  %v2140 = vld [vmem:[%s2125 + $0x70] sm:$0xff]
  %v2141 = vld [vmem:[%s2125 + $0x78] sm:$0xff]
  %v2142 = vld [vmem:[%s2125 + $0x80] sm:$0xff]
  %v2143 = vld [vmem:[%s2125 + $0x88] sm:$0xff]
  %v2144 = vld [vmem:[%s2125 + $0x90] sm:$0xff]
  %v2145 = vld [vmem:[%s2125 + $0x98] sm:$0xff]
  %v2146 = vld [vmem:[%s2125 + $0xa0] sm:$0xff]
  %v2147 = vld [vmem:[%s2125 + $0xa8] sm:$0xff]
  %v2148 = vld [vmem:[%s2125 + $0xb0] sm:$0xff]
  %v2149 = vld [vmem:[%s2125 + $0xb8] sm:$0xff]
  %v2150 = vld [vmem:[%s2125 + $0xc0] sm:$0xff]
  %v2151 = vld [vmem:[%s2125 + $0xc8] sm:$0xff]
  %v2152 = vld [vmem:[%s2125 + $0xd0] sm:$0xff]
  %v2153 = vld [vmem:[%s2125 + $0xd8] sm:$0xff]
  %v2154 = vld [vmem:[%s2125 + $0xe0] sm:$0xff]
  %v2155 = vld [vmem:[%s2125 + $0xe8] sm:$0xff]
  %v2156 = vld [vmem:[%s2125 + $0xf0] sm:$0xff]
  %v2157 = vld [vmem:[%s2125 + $0xf8] sm:$0xff]
  %v2158 = vld [vmem:[%s2125 + $0x100] sm:$0xff]
  %v2159 = vld [vmem:[%s2125 + $0x108] sm:$0xff]
  %v2160 = vld [vmem:[%s2125 + $0x110] sm:$0xff]
  %v2161 = vld [vmem:[%s2125 + $0x118] sm:$0xff]
  %v2162 = vld [vmem:[%s2125 + $0x120] sm:$0xff]
  %v2163 = vld [vmem:[%s2125 + $0x128] sm:$0xff]
  %v2164 = vld [vmem:[%s2125 + $0x130] sm:$0xff]
  %v2165 = vld [vmem:[%s2125 + $0x138] sm:$0xff]
  %v2166 = vld [vmem:[%s2125 + $0x140] sm:$0xff]
  %v2167 = vld [vmem:[%s2125 + $0x148] sm:$0xff]
  %v2168 = vld [vmem:[%s2125 + $0x150] sm:$0xff]
  %v2169 = vld [vmem:[%s2125 + $0x158] sm:$0xff]
  %v2170 = vld [vmem:[%s2125 + $0x160] sm:$0xff]
  %v2171 = vld [vmem:[%s2125 + $0x168] sm:$0xff]
  %v2172 = vld [vmem:[%s2125 + $0x170] sm:$0xff]
  %v2173 = vld [vmem:[%s2125 + $0x178] sm:$0xff]
  %v2174 = vld [vmem:[%s2125 + $0x180] sm:$0xff]
  %v2175 = vld [vmem:[%s2125 + $0x188] sm:$0xff]
  %v2176 = vld [vmem:[%s2125 + $0x190] sm:$0xff]
  %v2177 = vld [vmem:[%s2125 + $0x198] sm:$0xff]
  %v2178 = vld [vmem:[%s2125 + $0x1a0] sm:$0xff]
  %v2179 = vld [vmem:[%s2125 + $0x1a8] sm:$0xff]
  %v2180 = vld [vmem:[%s2125 + $0x1b0] sm:$0xff]
  %v2181 = vld [vmem:[%s2125 + $0x1b8] sm:$0xff]
  %v2182 = vld [vmem:[%s2125 + $0x1c0] sm:$0xff]
  %v2183 = vld [vmem:[%s2125 + $0x1c8] sm:$0xff]
  %v2184 = vld [vmem:[%s2125 + $0x1d0] sm:$0xff]
  %v2185 = vld [vmem:[%s2125 + $0x1d8] sm:$0xff]
  %v2186 = vld [vmem:[%s2125 + $0x1e0] sm:$0xff]
  %v2187 = vld [vmem:[%s2125 + $0x1e8] sm:$0xff]
  %v2188 = vld [vmem:[%s2125 + $0x1f0] sm:$0xff]
  %v2189 = vld [vmem:[%s2125 + $0x1f8] sm:$0xff]
  %2190 = vmatprep.subr.mxu0 0.0
  %2191 = vmatpush1.msra.mxu0 %v2141
  %2192 = vmatprep.subr.mxu0 0.0
  %2193 = vmatpush1.msra.mxu0 %v2140
  %2194 = vmatprep.subr.mxu0 0.0
  %2195 = vmatpush1.msra.mxu0 %v2139
  %2196 = vmatprep.subr.mxu0 0.0
  %2197 = vmatpush1.msra.mxu0 %v2138
  %2198 = vmatprep.subr.mxu0 0.0
  %2199 = vmatpush1.msra.mxu0 %v2137
  %2200 = vmatprep.subr.mxu0 0.0
  %2201 = vmatpush1.msra.mxu0 %v2136
  %2202 = vmatprep.subr.mxu0 0.0
  %2203 = vmatpush1.msra.mxu0 %v2135
  %2204 = vmatprep.subr.mxu0 0.0
  %2205 = vmatpush1.msra.mxu0 %v2134
  %2206 = vmatprep.subr.mxu0 0.0
  %2207 = vmatpush1.msra.mxu0 %v2133
  %2208 = vmatprep.subr.mxu0 0.0
  %2209 = vmatpush1.msra.mxu0 %v2132
  %2210 = vmatprep.subr.mxu0 0.0
  %2211 = vmatpush1.msra.mxu0 %v2131
  %2212 = vmatprep.subr.mxu0 0.0
  %2213 = vmatpush1.msra.mxu0 %v2130
  %2214 = vmatprep.subr.mxu0 0.0
  %2215 = vmatpush1.msra.mxu0 %v2129
  %2216 = vmatprep.subr.mxu0 0.0
  %2217 = vmatpush1.msra.mxu0 %v2128
  %2218 = vmatprep.subr.mxu0 0.0
  %2219 = vmatpush1.msra.mxu0 %v2127
  %2220 = vmatprep.subr.mxu0 0.0
  %2221 = vmatpush1.msra.mxu0 %v2126
  %2222 = vmatprep.subr.mxu0 0.0
  %2223 = vmatpush2.msra.mxu0 %v2157
  %2224 = vmatprep.subr.mxu0 0.0
  %2225 = vmatpush2.msra.mxu0 %v2156
  %2226 = vmatprep.subr.mxu0 0.0
  %2227 = vmatpush2.msra.mxu0 %v2155
  %2228 = vmatprep.subr.mxu0 0.0
  %2229 = vmatpush2.msra.mxu0 %v2154
  %2230 = vmatprep.subr.mxu0 0.0
  %2231 = vmatpush2.msra.mxu0 %v2153
  %2232 = vmatprep.subr.mxu0 0.0
  %2233 = vmatpush2.msra.mxu0 %v2152
  %2234 = vmatprep.subr.mxu0 0.0
  %2235 = vmatpush2.msra.mxu0 %v2151
  %2236 = vmatprep.subr.mxu0 0.0
  %2237 = vmatpush2.msra.mxu0 %v2150
  %2238 = vmatprep.subr.mxu0 0.0
  %2239 = vmatpush2.msra.mxu0 %v2149
  %2240 = vmatprep.subr.mxu0 0.0
  %2241 = vmatpush2.msra.mxu0 %v2148
  %2242 = vmatprep.subr.mxu0 0.0
  %2243 = vmatpush2.msra.mxu0 %v2147
  %2244 = vmatprep.subr.mxu0 0.0
  %2245 = vmatpush2.msra.mxu0 %v2146
  %2246 = vmatprep.subr.mxu0 0.0
  %2247 = vmatpush2.msra.mxu0 %v2145
  %2248 = vmatprep.subr.mxu0 0.0
  %2249 = vmatpush2.msra.mxu0 %v2144
  %2250 = vmatprep.subr.mxu0 0.0
  %2251 = vmatpush2.msra.mxu0 %v2143
  %2252 = vmatprep.subr.mxu0 0.0
  %2253 = vmatpush2.msra.mxu0 %v2142
  %2254 = vmatprep.mubr.f32.mxu0 %v466
  %2255 = vmatmul.mubr.f32.gmra.mxu0 %v465
  %v2256 = vpop.f32.mrf.mxu0
  %v2257 = vadd.f32 0.0, %v2256
  %v2258 = vpop.f32.mrf.mxu0
  %2259 = vmatprep.mubr.f32.mxu0 %v470
  %2260 = vmatmul.mubr.f32.gmra.mxu0 %v469
  %v2261 = vpop.f32.mrf.mxu0
  %v2262 = vadd.f32 0.0, %v2261
  %v2263 = vpop.f32.mrf.mxu0
  %2264 = vmatprep.mubr.f32.mxu0 %v474
  %2265 = vmatmul.mubr.f32.gmra.mxu0 %v473
  %v2266 = vpop.f32.mrf.mxu0
  %v2267 = vadd.f32 0.0, %v2266
  %v2268 = vpop.f32.mrf.mxu0
  %2269 = vmatprep.mubr.f32.mxu0 %v478
  %2270 = vmatmul.mubr.f32.gmra.mxu0 %v477
  %v2271 = vpop.f32.mrf.mxu0
  %v2272 = vadd.f32 0.0, %v2271
  %v2273 = vpop.f32.mrf.mxu0
  %2274 = vdwg.mxu0
  %2275 = vmatprep.subr.mxu0 0.0
  %2276 = vmatpush1.msra.mxu0 %v2173
  %2277 = vmatprep.subr.mxu0 0.0
  %2278 = vmatpush1.msra.mxu0 %v2172
  %2279 = vmatprep.subr.mxu0 0.0
  %2280 = vmatpush1.msra.mxu0 %v2171
  %2281 = vmatprep.subr.mxu0 0.0
  %2282 = vmatpush1.msra.mxu0 %v2170
  %2283 = vmatprep.subr.mxu0 0.0
  %2284 = vmatpush1.msra.mxu0 %v2169
  %2285 = vmatprep.subr.mxu0 0.0
  %2286 = vmatpush1.msra.mxu0 %v2168
  %2287 = vmatprep.subr.mxu0 0.0
  %2288 = vmatpush1.msra.mxu0 %v2167
  %2289 = vmatprep.subr.mxu0 0.0
  %2290 = vmatpush1.msra.mxu0 %v2166
  %2291 = vmatprep.subr.mxu0 0.0
  %2292 = vmatpush1.msra.mxu0 %v2165
  %2293 = vmatprep.subr.mxu0 0.0
  %2294 = vmatpush1.msra.mxu0 %v2164
  %2295 = vmatprep.subr.mxu0 0.0
  %2296 = vmatpush1.msra.mxu0 %v2163
  %2297 = vmatprep.subr.mxu0 0.0
  %2298 = vmatpush1.msra.mxu0 %v2162
  %2299 = vmatprep.subr.mxu0 0.0
  %2300 = vmatpush1.msra.mxu0 %v2161
  %2301 = vmatprep.subr.mxu0 0.0
  %2302 = vmatpush1.msra.mxu0 %v2160
  %2303 = vmatprep.subr.mxu0 0.0
  %2304 = vmatpush1.msra.mxu0 %v2159
  %2305 = vmatprep.subr.mxu0 0.0
  %2306 = vmatpush1.msra.mxu0 %v2158
  %2307 = vmatprep.subr.mxu0 0.0
  %2308 = vmatpush2.msra.mxu0 %v2189
  %2309 = vmatprep.subr.mxu0 0.0
  %2310 = vmatpush2.msra.mxu0 %v2188
  %2311 = vmatprep.subr.mxu0 0.0
  %2312 = vmatpush2.msra.mxu0 %v2187
  %2313 = vmatprep.subr.mxu0 0.0
  %2314 = vmatpush2.msra.mxu0 %v2186
  %2315 = vmatprep.subr.mxu0 0.0
  %2316 = vmatpush2.msra.mxu0 %v2185
  %2317 = vmatprep.subr.mxu0 0.0
  %2318 = vmatpush2.msra.mxu0 %v2184
  %2319 = vmatprep.subr.mxu0 0.0
  %2320 = vmatpush2.msra.mxu0 %v2183
  %2321 = vmatprep.subr.mxu0 0.0
  %2322 = vmatpush2.msra.mxu0 %v2182
  %2323 = vmatprep.subr.mxu0 0.0
  %2324 = vmatpush2.msra.mxu0 %v2181
  %2325 = vmatprep.subr.mxu0 0.0
  %2326 = vmatpush2.msra.mxu0 %v2180
  %2327 = vmatprep.subr.mxu0 0.0
  %2328 = vmatpush2.msra.mxu0 %v2179
  %2329 = vmatprep.subr.mxu0 0.0
  %2330 = vmatpush2.msra.mxu0 %v2178
  %2331 = vmatprep.subr.mxu0 0.0
  %2332 = vmatpush2.msra.mxu0 %v2177
  %2333 = vmatprep.subr.mxu0 0.0
  %2334 = vmatpush2.msra.mxu0 %v2176
  %2335 = vmatprep.subr.mxu0 0.0
  %2336 = vmatpush2.msra.mxu0 %v2175
  %2337 = vmatprep.subr.mxu0 0.0
  %2338 = vmatpush2.msra.mxu0 %v2174
  %2339 = vmatprep.mubr.f32.mxu0 %v468
  %2340 = vmatmul.mubr.f32.gmra.mxu0 %v467
  %v2341 = vpop.f32.mrf.mxu0
  %v2342 = vadd.f32 %v2257, %v2341
  %v2343 = vpop.f32.mrf.mxu0
  %2344 = vmatprep.mubr.f32.mxu0 %v472
  %2345 = vmatmul.mubr.f32.gmra.mxu0 %v471
  %v2346 = vpop.f32.mrf.mxu0
  %v2347 = vadd.f32 %v2262, %v2346
  %v2348 = vpop.f32.mrf.mxu0
  %2349 = vmatprep.mubr.f32.mxu0 %v476
  %2350 = vmatmul.mubr.f32.gmra.mxu0 %v475
  %v2351 = vpop.f32.mrf.mxu0
  %v2352 = vadd.f32 %v2267, %v2351
  %v2353 = vpop.f32.mrf.mxu0
  %2354 = vmatprep.mubr.f32.mxu0 %v480
  %2355 = vmatmul.mubr.f32.gmra.mxu0 %v479
  %v2356 = vpop.f32.mrf.mxu0
  %v2357 = vadd.f32 %v2272, %v2356
  %v2358 = vpop.f32.mrf.mxu0
  %2359 = vdwg.mxu0
  %s2360 = scalar_lea.vmem %s3, 4096
  %v2361 = vld [vmem:[%s2360] sm:$0xff]
  %v2362 = vld [vmem:[%s2360 + $0x8] sm:$0xff]
  %v2363 = vld [vmem:[%s2360 + $0x10] sm:$0xff]
  %v2364 = vld [vmem:[%s2360 + $0x18] sm:$0xff]
  %v2365 = vld [vmem:[%s2360 + $0x20] sm:$0xff]
  %v2366 = vld [vmem:[%s2360 + $0x28] sm:$0xff]
  %v2367 = vld [vmem:[%s2360 + $0x30] sm:$0xff]
  %v2368 = vld [vmem:[%s2360 + $0x38] sm:$0xff]
  %v2369 = vld [vmem:[%s2360 + $0x40] sm:$0xff]
  %v2370 = vld [vmem:[%s2360 + $0x48] sm:$0xff]
  %v2371 = vld [vmem:[%s2360 + $0x50] sm:$0xff]
  %v2372 = vld [vmem:[%s2360 + $0x58] sm:$0xff]
  %v2373 = vld [vmem:[%s2360 + $0x60] sm:$0xff]
  %v2374 = vld [vmem:[%s2360 + $0x68] sm:$0xff]
  %v2375 = vld [vmem:[%s2360 + $0x70] sm:$0xff]
  %v2376 = vld [vmem:[%s2360 + $0x78] sm:$0xff]
  %v2377 = vld [vmem:[%s2360 + $0x80] sm:$0xff]
  %v2378 = vld [vmem:[%s2360 + $0x88] sm:$0xff]
  %v2379 = vld [vmem:[%s2360 + $0x90] sm:$0xff]
  %v2380 = vld [vmem:[%s2360 + $0x98] sm:$0xff]
  %v2381 = vld [vmem:[%s2360 + $0xa0] sm:$0xff]
  %v2382 = vld [vmem:[%s2360 + $0xa8] sm:$0xff]
  %v2383 = vld [vmem:[%s2360 + $0xb0] sm:$0xff]
  %v2384 = vld [vmem:[%s2360 + $0xb8] sm:$0xff]
  %v2385 = vld [vmem:[%s2360 + $0xc0] sm:$0xff]
  %v2386 = vld [vmem:[%s2360 + $0xc8] sm:$0xff]
  %v2387 = vld [vmem:[%s2360 + $0xd0] sm:$0xff]
  %v2388 = vld [vmem:[%s2360 + $0xd8] sm:$0xff]
  %v2389 = vld [vmem:[%s2360 + $0xe0] sm:$0xff]
  %v2390 = vld [vmem:[%s2360 + $0xe8] sm:$0xff]
  %v2391 = vld [vmem:[%s2360 + $0xf0] sm:$0xff]
  %v2392 = vld [vmem:[%s2360 + $0xf8] sm:$0xff]
  %v2393 = vld [vmem:[%s2360 + $0x100] sm:$0xff]
  %v2394 = vld [vmem:[%s2360 + $0x108] sm:$0xff]
  %v2395 = vld [vmem:[%s2360 + $0x110] sm:$0xff]
  %v2396 = vld [vmem:[%s2360 + $0x118] sm:$0xff]
  %v2397 = vld [vmem:[%s2360 + $0x120] sm:$0xff]
  %v2398 = vld [vmem:[%s2360 + $0x128] sm:$0xff]
  %v2399 = vld [vmem:[%s2360 + $0x130] sm:$0xff]
  %v2400 = vld [vmem:[%s2360 + $0x138] sm:$0xff]
  %v2401 = vld [vmem:[%s2360 + $0x140] sm:$0xff]
  %v2402 = vld [vmem:[%s2360 + $0x148] sm:$0xff]
  %v2403 = vld [vmem:[%s2360 + $0x150] sm:$0xff]
  %v2404 = vld [vmem:[%s2360 + $0x158] sm:$0xff]
  %v2405 = vld [vmem:[%s2360 + $0x160] sm:$0xff]
  %v2406 = vld [vmem:[%s2360 + $0x168] sm:$0xff]
  %v2407 = vld [vmem:[%s2360 + $0x170] sm:$0xff]
  %v2408 = vld [vmem:[%s2360 + $0x178] sm:$0xff]
  %v2409 = vld [vmem:[%s2360 + $0x180] sm:$0xff]
  %v2410 = vld [vmem:[%s2360 + $0x188] sm:$0xff]
  %v2411 = vld [vmem:[%s2360 + $0x190] sm:$0xff]
  %v2412 = vld [vmem:[%s2360 + $0x198] sm:$0xff]
  %v2413 = vld [vmem:[%s2360 + $0x1a0] sm:$0xff]
  %v2414 = vld [vmem:[%s2360 + $0x1a8] sm:$0xff]
  %v2415 = vld [vmem:[%s2360 + $0x1b0] sm:$0xff]
  %v2416 = vld [vmem:[%s2360 + $0x1b8] sm:$0xff]
  %v2417 = vld [vmem:[%s2360 + $0x1c0] sm:$0xff]
  %v2418 = vld [vmem:[%s2360 + $0x1c8] sm:$0xff]
  %v2419 = vld [vmem:[%s2360 + $0x1d0] sm:$0xff]
  %v2420 = vld [vmem:[%s2360 + $0x1d8] sm:$0xff]
  %v2421 = vld [vmem:[%s2360 + $0x1e0] sm:$0xff]
  %v2422 = vld [vmem:[%s2360 + $0x1e8] sm:$0xff]
  %v2423 = vld [vmem:[%s2360 + $0x1f0] sm:$0xff]
  %v2424 = vld [vmem:[%s2360 + $0x1f8] sm:$0xff]
  %2425 = vmatprep.subr.mxu0 0.0
  %2426 = vmatpush1.msra.mxu0 %v2376
  %2427 = vmatprep.subr.mxu0 0.0
  %2428 = vmatpush1.msra.mxu0 %v2375
  %2429 = vmatprep.subr.mxu0 0.0
  %2430 = vmatpush1.msra.mxu0 %v2374
  %2431 = vmatprep.subr.mxu0 0.0
  %2432 = vmatpush1.msra.mxu0 %v2373
  %2433 = vmatprep.subr.mxu0 0.0
  %2434 = vmatpush1.msra.mxu0 %v2372
  %2435 = vmatprep.subr.mxu0 0.0
  %2436 = vmatpush1.msra.mxu0 %v2371
  %2437 = vmatprep.subr.mxu0 0.0
  %2438 = vmatpush1.msra.mxu0 %v2370
  %2439 = vmatprep.subr.mxu0 0.0
  %2440 = vmatpush1.msra.mxu0 %v2369
  %2441 = vmatprep.subr.mxu0 0.0
  %2442 = vmatpush1.msra.mxu0 %v2368
  %2443 = vmatprep.subr.mxu0 0.0
  %2444 = vmatpush1.msra.mxu0 %v2367
  %2445 = vmatprep.subr.mxu0 0.0
  %2446 = vmatpush1.msra.mxu0 %v2366
  %2447 = vmatprep.subr.mxu0 0.0
  %2448 = vmatpush1.msra.mxu0 %v2365
  %2449 = vmatprep.subr.mxu0 0.0
  %2450 = vmatpush1.msra.mxu0 %v2364
  %2451 = vmatprep.subr.mxu0 0.0
  %2452 = vmatpush1.msra.mxu0 %v2363
  %2453 = vmatprep.subr.mxu0 0.0
  %2454 = vmatpush1.msra.mxu0 %v2362
  %2455 = vmatprep.subr.mxu0 0.0
  %2456 = vmatpush1.msra.mxu0 %v2361
  %2457 = vmatprep.subr.mxu0 0.0
  %2458 = vmatpush2.msra.mxu0 %v2392
  %2459 = vmatprep.subr.mxu0 0.0
  %2460 = vmatpush2.msra.mxu0 %v2391
  %2461 = vmatprep.subr.mxu0 0.0
  %2462 = vmatpush2.msra.mxu0 %v2390
  %2463 = vmatprep.subr.mxu0 0.0
  %2464 = vmatpush2.msra.mxu0 %v2389
  %2465 = vmatprep.subr.mxu0 0.0
  %2466 = vmatpush2.msra.mxu0 %v2388
  %2467 = vmatprep.subr.mxu0 0.0
  %2468 = vmatpush2.msra.mxu0 %v2387
  %2469 = vmatprep.subr.mxu0 0.0
  %2470 = vmatpush2.msra.mxu0 %v2386
  %2471 = vmatprep.subr.mxu0 0.0
  %2472 = vmatpush2.msra.mxu0 %v2385
  %2473 = vmatprep.subr.mxu0 0.0
  %2474 = vmatpush2.msra.mxu0 %v2384
  %2475 = vmatprep.subr.mxu0 0.0
  %2476 = vmatpush2.msra.mxu0 %v2383
  %2477 = vmatprep.subr.mxu0 0.0
  %2478 = vmatpush2.msra.mxu0 %v2382
  %2479 = vmatprep.subr.mxu0 0.0
  %2480 = vmatpush2.msra.mxu0 %v2381
  %2481 = vmatprep.subr.mxu0 0.0
  %2482 = vmatpush2.msra.mxu0 %v2380
  %2483 = vmatprep.subr.mxu0 0.0
  %2484 = vmatpush2.msra.mxu0 %v2379
  %2485 = vmatprep.subr.mxu0 0.0
  %2486 = vmatpush2.msra.mxu0 %v2378
  %2487 = vmatprep.subr.mxu0 0.0
  %2488 = vmatpush2.msra.mxu0 %v2377
  %2489 = vmatprep.mubr.f32.mxu0 %v466
  %2490 = vmatmul.mubr.f32.gmra.mxu0 %v465
  %v2491 = vpop.f32.mrf.mxu0
  %v2492 = vadd.f32 0.0, %v2491
  %v2493 = vpop.f32.mrf.mxu0
  %2494 = vmatprep.mubr.f32.mxu0 %v470
  %2495 = vmatmul.mubr.f32.gmra.mxu0 %v469
  %v2496 = vpop.f32.mrf.mxu0
  %v2497 = vadd.f32 0.0, %v2496
  %v2498 = vpop.f32.mrf.mxu0
  %2499 = vmatprep.mubr.f32.mxu0 %v474
  %2500 = vmatmul.mubr.f32.gmra.mxu0 %v473
  %v2501 = vpop.f32.mrf.mxu0
  %v2502 = vadd.f32 0.0, %v2501
  %v2503 = vpop.f32.mrf.mxu0
  %2504 = vmatprep.mubr.f32.mxu0 %v478
  %2505 = vmatmul.mubr.f32.gmra.mxu0 %v477
  %v2506 = vpop.f32.mrf.mxu0
  %v2507 = vadd.f32 0.0, %v2506
  %v2508 = vpop.f32.mrf.mxu0
  %2509 = vdwg.mxu0
  %2510 = vmatprep.subr.mxu0 0.0
  %2511 = vmatpush1.msra.mxu0 %v2408
  %2512 = vmatprep.subr.mxu0 0.0
  %2513 = vmatpush1.msra.mxu0 %v2407
  %2514 = vmatprep.subr.mxu0 0.0
  %2515 = vmatpush1.msra.mxu0 %v2406
  %2516 = vmatprep.subr.mxu0 0.0
  %2517 = vmatpush1.msra.mxu0 %v2405
  %2518 = vmatprep.subr.mxu0 0.0
  %2519 = vmatpush1.msra.mxu0 %v2404
  %2520 = vmatprep.subr.mxu0 0.0
  %2521 = vmatpush1.msra.mxu0 %v2403
  %2522 = vmatprep.subr.mxu0 0.0
  %2523 = vmatpush1.msra.mxu0 %v2402
  %2524 = vmatprep.subr.mxu0 0.0
  %2525 = vmatpush1.msra.mxu0 %v2401
  %2526 = vmatprep.subr.mxu0 0.0
  %2527 = vmatpush1.msra.mxu0 %v2400
  %2528 = vmatprep.subr.mxu0 0.0
  %2529 = vmatpush1.msra.mxu0 %v2399
  %2530 = vmatprep.subr.mxu0 0.0
  %2531 = vmatpush1.msra.mxu0 %v2398
  %2532 = vmatprep.subr.mxu0 0.0
  %2533 = vmatpush1.msra.mxu0 %v2397
  %2534 = vmatprep.subr.mxu0 0.0
  %2535 = vmatpush1.msra.mxu0 %v2396
  %2536 = vmatprep.subr.mxu0 0.0
  %2537 = vmatpush1.msra.mxu0 %v2395
  %2538 = vmatprep.subr.mxu0 0.0
  %2539 = vmatpush1.msra.mxu0 %v2394
  %2540 = vmatprep.subr.mxu0 0.0
  %2541 = vmatpush1.msra.mxu0 %v2393
  %2542 = vmatprep.subr.mxu0 0.0
  %2543 = vmatpush2.msra.mxu0 %v2424
  %2544 = vmatprep.subr.mxu0 0.0
  %2545 = vmatpush2.msra.mxu0 %v2423
  %2546 = vmatprep.subr.mxu0 0.0
  %2547 = vmatpush2.msra.mxu0 %v2422
  %2548 = vmatprep.subr.mxu0 0.0
  %2549 = vmatpush2.msra.mxu0 %v2421
  %2550 = vmatprep.subr.mxu0 0.0
  %2551 = vmatpush2.msra.mxu0 %v2420
  %2552 = vmatprep.subr.mxu0 0.0
  %2553 = vmatpush2.msra.mxu0 %v2419
  %2554 = vmatprep.subr.mxu0 0.0
  %2555 = vmatpush2.msra.mxu0 %v2418
  %2556 = vmatprep.subr.mxu0 0.0
  %2557 = vmatpush2.msra.mxu0 %v2417
  %2558 = vmatprep.subr.mxu0 0.0
  %2559 = vmatpush2.msra.mxu0 %v2416
  %2560 = vmatprep.subr.mxu0 0.0
  %2561 = vmatpush2.msra.mxu0 %v2415
  %2562 = vmatprep.subr.mxu0 0.0
  %2563 = vmatpush2.msra.mxu0 %v2414
  %2564 = vmatprep.subr.mxu0 0.0
  %2565 = vmatpush2.msra.mxu0 %v2413
  %2566 = vmatprep.subr.mxu0 0.0
  %2567 = vmatpush2.msra.mxu0 %v2412
  %2568 = vmatprep.subr.mxu0 0.0
  %2569 = vmatpush2.msra.mxu0 %v2411
  %2570 = vmatprep.subr.mxu0 0.0
  %2571 = vmatpush2.msra.mxu0 %v2410
  %2572 = vmatprep.subr.mxu0 0.0
  %2573 = vmatpush2.msra.mxu0 %v2409
  %2574 = vmatprep.mubr.f32.mxu0 %v468
  %2575 = vmatmul.mubr.f32.gmra.mxu0 %v467
  %v2576 = vpop.f32.mrf.mxu0
  %v2577 = vadd.f32 %v2492, %v2576
  %v2578 = vpop.f32.mrf.mxu0
  %2579 = vmatprep.mubr.f32.mxu0 %v472
  %2580 = vmatmul.mubr.f32.gmra.mxu0 %v471
  %v2581 = vpop.f32.mrf.mxu0
  %v2582 = vadd.f32 %v2497, %v2581
  %v2583 = vpop.f32.mrf.mxu0
  %2584 = vmatprep.mubr.f32.mxu0 %v476
  %2585 = vmatmul.mubr.f32.gmra.mxu0 %v475
  %v2586 = vpop.f32.mrf.mxu0
  %v2587 = vadd.f32 %v2502, %v2586
  %v2588 = vpop.f32.mrf.mxu0
  %2589 = vmatprep.mubr.f32.mxu0 %v480
  %2590 = vmatmul.mubr.f32.gmra.mxu0 %v479
  %v2591 = vpop.f32.mrf.mxu0
  %v2592 = vadd.f32 %v2507, %v2591
  %v2593 = vpop.f32.mrf.mxu0
  %2594 = vdwg.mxu0
  %v2595 = vld [vmem:[%s2] sm:$0xff]
  %v2596 = vld [vmem:[%s2 + $0x8] sm:$0xff]
  %v2597 = vld [vmem:[%s2 + $0x10] sm:$0xff]
  %v2598 = vld [vmem:[%s2 + $0x18] sm:$0xff]
  %v2599 = vld [vmem:[%s2 + $0x20] sm:$0xff]
  %v2600 = vld [vmem:[%s2 + $0x28] sm:$0xff]
  %v2601 = vld [vmem:[%s2 + $0x30] sm:$0xff]
  %v2602 = vld [vmem:[%s2 + $0x38] sm:$0xff]
  %v2603 = vld [vmem:[%s2 + $0x40] sm:$0xff]
  %v2604 = vld [vmem:[%s2 + $0x48] sm:$0xff]
  %v2605 = vld [vmem:[%s2 + $0x50] sm:$0xff]
  %v2606 = vld [vmem:[%s2 + $0x58] sm:$0xff]
  %vm2607 = vcmask 261120
  %v2609 = vsel %vm2607, %v2597, 0
  %v2612 = vsel %vm2607, %v2600, 0
  %v2615 = vsel %vm2607, %v2603, 0
  %v2618 = vsel %vm2607, %v2606, 0
  %2620 = vmatprep.subr.mxu0 0.0
  %2621 = vmatpush1.msra.mxu0 %v1417
  %2622 = vmatprep.subr.mxu0 0.0
  %2623 = vmatpush1.msra.mxu0 %v1412
  %2624 = vmatprep.subr.mxu0 0.0
  %2625 = vmatpush1.msra.mxu0 %v1407
  %2626 = vmatprep.subr.mxu0 0.0
  %2627 = vmatpush1.msra.mxu0 %v1402
  %2628 = vmatprep.subr.mxu0 0.0
  %2629 = vmatpush1.msra.mxu0 %v1182
  %2630 = vmatprep.subr.mxu0 0.0
  %2631 = vmatpush1.msra.mxu0 %v1177
  %2632 = vmatprep.subr.mxu0 0.0
  %2633 = vmatpush1.msra.mxu0 %v1172
  %2634 = vmatprep.subr.mxu0 0.0
  %2635 = vmatpush1.msra.mxu0 %v1167
  %2636 = vmatprep.subr.mxu0 0.0
  %2637 = vmatpush1.msra.mxu0 %v947
  %2638 = vmatprep.subr.mxu0 0.0
  %2639 = vmatpush1.msra.mxu0 %v942
  %2640 = vmatprep.subr.mxu0 0.0
  %2641 = vmatpush1.msra.mxu0 %v937
  %2642 = vmatprep.subr.mxu0 0.0
  %2643 = vmatpush1.msra.mxu0 %v932
  %2644 = vmatprep.subr.mxu0 0.0
  %2645 = vmatpush1.msra.mxu0 %v712
  %2646 = vmatprep.subr.mxu0 0.0
  %2647 = vmatpush1.msra.mxu0 %v707
  %2648 = vmatprep.subr.mxu0 0.0
  %2649 = vmatpush1.msra.mxu0 %v702
  %2650 = vmatprep.subr.mxu0 0.0
  %2651 = vmatpush1.msra.mxu0 %v697
  %2652 = vmatprep.subr.mxu0 0.0
  %2653 = vmatpush2.msra.mxu0 %v2357
  %2654 = vmatprep.subr.mxu0 0.0
  %2655 = vmatpush2.msra.mxu0 %v2352
  %2656 = vmatprep.subr.mxu0 0.0
  %2657 = vmatpush2.msra.mxu0 %v2347
  %2658 = vmatprep.subr.mxu0 0.0
  %2659 = vmatpush2.msra.mxu0 %v2342
  %2660 = vmatprep.subr.mxu0 0.0
  %2661 = vmatpush2.msra.mxu0 %v2122
  %2662 = vmatprep.subr.mxu0 0.0
  %2663 = vmatpush2.msra.mxu0 %v2117
  %2664 = vmatprep.subr.mxu0 0.0
  %2665 = vmatpush2.msra.mxu0 %v2112
  %2666 = vmatprep.subr.mxu0 0.0
  %2667 = vmatpush2.msra.mxu0 %v2107
  %2668 = vmatprep.subr.mxu0 0.0
  %2669 = vmatpush2.msra.mxu0 %v1887
  %2670 = vmatprep.subr.mxu0 0.0
  %2671 = vmatpush2.msra.mxu0 %v1882
  %2672 = vmatprep.subr.mxu0 0.0
  %2673 = vmatpush2.msra.mxu0 %v1877
  %2674 = vmatprep.subr.mxu0 0.0
  %2675 = vmatpush2.msra.mxu0 %v1872
  %2676 = vmatprep.subr.mxu0 0.0
  %2677 = vmatpush2.msra.mxu0 %v1652
  %2678 = vmatprep.subr.mxu0 0.0
  %2679 = vmatpush2.msra.mxu0 %v1647
  %2680 = vmatprep.subr.mxu0 0.0
  %2681 = vmatpush2.msra.mxu0 %v1642
  %2682 = vmatprep.subr.mxu0 0.0
  %2683 = vmatpush2.msra.mxu0 %v1637
  %2684 = vmatprep.mubr.f32.mxu0 %v2596
  %2685 = vmatmul.mubr.f32.gmra.mxu0 %v2595
  %v2686 = vpop.f32.mrf.mxu0
  %v2687 = vadd.f32 0.0, %v2686
  %v2688 = vpop.f32.mrf.mxu0
  %2689 = vmatprep.mubr.f32.mxu0 %v2599
  %2690 = vmatmul.mubr.f32.gmra.mxu0 %v2598
  %v2691 = vpop.f32.mrf.mxu0
  %v2692 = vadd.f32 0.0, %v2691
  %v2693 = vpop.f32.mrf.mxu0
  %2694 = vmatprep.mubr.f32.mxu0 %v2602
  %2695 = vmatmul.mubr.f32.gmra.mxu0 %v2601
  %v2696 = vpop.f32.mrf.mxu0
  %v2697 = vadd.f32 0.0, %v2696
  %v2698 = vpop.f32.mrf.mxu0
  %2699 = vmatprep.mubr.f32.mxu0 %v2605
  %2700 = vmatmul.mubr.f32.gmra.mxu0 %v2604
  %v2701 = vpop.f32.mrf.mxu0
  %v2702 = vadd.f32 0.0, %v2701
  %v2703 = vpop.f32.mrf.mxu0
  %2704 = vdwg.mxu0
  %2705 = vmatprep.subr.mxu0 0.0
  %2706 = vmatpush1.msra.mxu0 0.0
  %2707 = vmatprep.subr.mxu0 0.0
  %2708 = vmatpush1.msra.mxu0 0.0
  %2709 = vmatprep.subr.mxu0 0.0
  %2710 = vmatpush1.msra.mxu0 0.0
  %2711 = vmatprep.subr.mxu0 0.0
  %2712 = vmatpush1.msra.mxu0 0.0
  %2713 = vmatprep.subr.mxu0 0.0
  %2714 = vmatpush1.msra.mxu0 0.0
  %2715 = vmatprep.subr.mxu0 0.0
  %2716 = vmatpush1.msra.mxu0 0.0
  %2717 = vmatprep.subr.mxu0 0.0
  %2718 = vmatpush1.msra.mxu0 0.0
  %2719 = vmatprep.subr.mxu0 0.0
  %2720 = vmatpush1.msra.mxu0 0.0
  %2721 = vmatprep.subr.mxu0 0.0
  %2722 = vmatpush1.msra.mxu0 0.0
  %2723 = vmatprep.subr.mxu0 0.0
  %2724 = vmatpush1.msra.mxu0 0.0
  %2725 = vmatprep.subr.mxu0 0.0
  %2726 = vmatpush1.msra.mxu0 0.0
  %2727 = vmatprep.subr.mxu0 0.0
  %2728 = vmatpush1.msra.mxu0 0.0
  %2729 = vmatprep.subr.mxu0 0.0
  %2730 = vmatpush1.msra.mxu0 %v2592
  %2731 = vmatprep.subr.mxu0 0.0
  %2732 = vmatpush1.msra.mxu0 %v2587
  %2733 = vmatprep.subr.mxu0 0.0
  %2734 = vmatpush1.msra.mxu0 %v2582
  %2735 = vmatprep.subr.mxu0 0.0
  %2736 = vmatpush1.msra.mxu0 %v2577
  %2737 = vmatprep.subr.mxu0 0.0
  %2738 = vmatpush2.msra.mxu0 0.0
  %2739 = vmatprep.subr.mxu0 0.0
  %2740 = vmatpush2.msra.mxu0 0.0
  %2741 = vmatprep.subr.mxu0 0.0
  %2742 = vmatpush2.msra.mxu0 0.0
  %2743 = vmatprep.subr.mxu0 0.0
  %2744 = vmatpush2.msra.mxu0 0.0
  %2745 = vmatprep.subr.mxu0 0.0
  %2746 = vmatpush2.msra.mxu0 0.0
  %2747 = vmatprep.subr.mxu0 0.0
  %2748 = vmatpush2.msra.mxu0 0.0
  %2749 = vmatprep.subr.mxu0 0.0
  %2750 = vmatpush2.msra.mxu0 0.0
  %2751 = vmatprep.subr.mxu0 0.0
  %2752 = vmatpush2.msra.mxu0 0.0
  %2753 = vmatprep.subr.mxu0 0.0
  %2754 = vmatpush2.msra.mxu0 0.0
  %2755 = vmatprep.subr.mxu0 0.0
  %2756 = vmatpush2.msra.mxu0 0.0
  %2757 = vmatprep.subr.mxu0 0.0
  %2758 = vmatpush2.msra.mxu0 0.0
  %2759 = vmatprep.subr.mxu0 0.0
  %2760 = vmatpush2.msra.mxu0 0.0
  %2761 = vmatprep.subr.mxu0 0.0
  %2762 = vmatpush2.msra.mxu0 0.0
  %2763 = vmatprep.subr.mxu0 0.0
  %2764 = vmatpush2.msra.mxu0 0.0
  %2765 = vmatprep.subr.mxu0 0.0
  %2766 = vmatpush2.msra.mxu0 0.0
  %2767 = vmatprep.subr.mxu0 0.0
  %2768 = vmatpush2.msra.mxu0 0.0
  %2769 = vmatprep.mubr.f32.mxu0 0.0
  %2770 = vmatmul.mubr.f32.gmra.mxu0 %v2609
  %v2771 = vpop.f32.mrf.mxu0
  %v2772 = vadd.f32 %v2687, %v2771
  %v2773 = vpop.f32.mrf.mxu0
  %2774 = vmatprep.mubr.f32.mxu0 0.0
  %2775 = vmatmul.mubr.f32.gmra.mxu0 %v2612
  %v2776 = vpop.f32.mrf.mxu0
  %v2777 = vadd.f32 %v2692, %v2776
  %v2778 = vpop.f32.mrf.mxu0
  %2779 = vmatprep.mubr.f32.mxu0 0.0
  %2780 = vmatmul.mubr.f32.gmra.mxu0 %v2615
  %v2781 = vpop.f32.mrf.mxu0
  %v2782 = vadd.f32 %v2697, %v2781
  %v2783 = vpop.f32.mrf.mxu0
  %2784 = vmatprep.mubr.f32.mxu0 0.0
  %2785 = vmatmul.mubr.f32.gmra.mxu0 %v2618
  %v2786 = vpop.f32.mrf.mxu0
  %v2787 = vadd.f32 %v2702, %v2786
  %v2788 = vpop.f32.mrf.mxu0
  %2789 = vdwg.mxu0
  %vm2790 = vcmask 801792
  %v2791 = vsel %vm2790, %v2772, 0.0
  %2792 = vadd.xlane.f32.xlu0 %v2791
  %v2793 = vpop.xlane.xlu0 %2792
  %v2794 = vsel %vm2790, %v2777, 0.0
  %2795 = vadd.xlane.f32.xlu0 %v2794
  %v2796 = vpop.xlane.xlu0 %2795
  %v2797 = vsel %vm2790, %v2782, 0.0
  %2798 = vadd.xlane.f32.xlu0 %v2797
  %v2799 = vpop.xlane.xlu0 %2798
  %v2800 = vsel %vm2790, %v2787, 0.0
  %2801 = vadd.xlane.f32.xlu0 %v2800
  %v2802 = vpop.xlane.xlu0 %2801
  %v2803 = vmul.f32 %v2793, 0.010204081
  %v2804 = vmul.f32 %v2796, 0.010204081
  %v2805 = vmul.f32 %v2799, 0.010204081
  %v2806 = vmul.f32 %v2802, 0.010204081
  %v2807 = vsub.f32 %v2772, %v2803
  %v2808 = vsub.f32 %v2777, %v2804
  %v2809 = vsub.f32 %v2782, %v2805
  %v2810 = vsub.f32 %v2787, %v2806
  %v2811 = vmul.f32 %v2807, %v2807
  %v2812 = vmul.f32 %v2808, %v2808
  %v2813 = vmul.f32 %v2809, %v2809
  %v2814 = vmul.f32 %v2810, %v2810
  %v2815 = vsel %vm2790, %v2811, 0.0
  %2816 = vadd.xlane.f32.xlu0 %v2815
  %v2817 = vpop.xlane.xlu0 %2816
  %v2818 = vsel %vm2790, %v2812, 0.0
  %2819 = vadd.xlane.f32.xlu0 %v2818
  %v2820 = vpop.xlane.xlu0 %2819
  %v2821 = vsel %vm2790, %v2813, 0.0
  %2822 = vadd.xlane.f32.xlu0 %v2821
  %v2823 = vpop.xlane.xlu0 %2822
  %v2824 = vsel %vm2790, %v2814, 0.0
  %2825 = vadd.xlane.f32.xlu0 %v2824
  %v2826 = vpop.xlane.xlu0 %2825
  %v2827 = vmul.f32 %v2817, 0.010204081
  %v2828 = vmul.f32 %v2820, 0.010204081
  %v2829 = vmul.f32 %v2823, 0.010204081
  %v2830 = vmul.f32 %v2826, 0.010204081
  %v2831 = vadd.f32 %v2827, 1e-05
  %v2832 = vadd.f32 %v2828, 1e-05
  %v2833 = vadd.f32 %v2829, 1e-05
  %v2834 = vadd.f32 %v2830, 1e-05
  %v2835 = vrsqrt.pop %v2831
  %v2836 = vrsqrt.pop %v2832
  %v2837 = vrsqrt.pop %v2833
  %v2838 = vrsqrt.pop %v2834
  %v2839 = vmul.f32 %v297, %v2835
  %v2840 = vmul.f32 %v298, %v2836
  %v2841 = vmul.f32 %v299, %v2837
  %v2842 = vmul.f32 %v300, %v2838
  %2844 = vset.pattern.permute.xlu0 2
  %2845 = vperm.xlu0 %2844, %v2839
  %v2846 = vpop.permute.xlu0 %2845
  %2849 = vset.pattern.permute.xlu0 2
  %2850 = vperm.xlu0 %2849, %v2840
  %v2851 = vpop.permute.xlu0 %2850
  %2854 = vset.pattern.permute.xlu0 2
  %2855 = vperm.xlu0 %2854, %v2841
  %v2856 = vpop.permute.xlu0 %2855
  %2859 = vset.pattern.permute.xlu0 2
  %2860 = vperm.xlu0 %2859, %v2842
  %v2861 = vpop.permute.xlu0 %2860
  %v2863 = vmul.f32 %v2807, %v2846
  %v2864 = vmul.f32 %v2808, %v2851
  %v2865 = vmul.f32 %v2809, %v2856
  %v2866 = vmul.f32 %v2810, %v2861
  %2867 = vset.pattern.permute.xlu0 3
  %2868 = vperm.xlu0 %2867, %v297
  %v2869 = vpop.permute.xlu0 %2868
  %2871 = vset.pattern.permute.xlu0 3
  %2872 = vperm.xlu0 %2871, %v298
  %v2873 = vpop.permute.xlu0 %2872
  %2875 = vset.pattern.permute.xlu0 3
  %2876 = vperm.xlu0 %2875, %v299
  %v2877 = vpop.permute.xlu0 %2876
  %2879 = vset.pattern.permute.xlu0 3
  %2880 = vperm.xlu0 %2879, %v300
  %v2881 = vpop.permute.xlu0 %2880
  %v2883 = vadd.f32 %v2863, %v2869
  %v2884 = vadd.f32 %v2864, %v2873
  %v2885 = vadd.f32 %v2865, %v2877
  %v2886 = vadd.f32 %v2866, %v2881
  %v2887 = vmax.f32 %v2883, 0.0
  %v2888 = vmax.f32 %v2884, 0.0
  %v2889 = vmax.f32 %v2885, 0.0
  %v2890 = vmax.f32 %v2886, 0.0
  %v2891 = vld [vmem:[%s4] sm:$0xff]
  %v2892 = vld [vmem:[%s4 + $0x8] sm:$0xff]
  %v2893 = vld [vmem:[%s4 + $0x10] sm:$0xff]
  %v2894 = vld [vmem:[%s4 + $0x18] sm:$0xff]
  %v2895 = vld [vmem:[%s4 + $0x20] sm:$0xff]
  %v2896 = vld [vmem:[%s4 + $0x28] sm:$0xff]
  %v2897 = vld [vmem:[%s4 + $0x30] sm:$0xff]
  %v2898 = vld [vmem:[%s4 + $0x38] sm:$0xff]
  %v2899 = vld [vmem:[%s4 + $0x40] sm:$0xff]
  %v2900 = vld [vmem:[%s4 + $0x48] sm:$0xff]
  %v2901 = vld [vmem:[%s4 + $0x50] sm:$0xff]
  %v2902 = vld [vmem:[%s4 + $0x58] sm:$0xff]
  %v2903 = vld [vmem:[%s4 + $0x60] sm:$0x3]
  %v2905 = vsel %vm2790, %v2887, 0
  %v2908 = vsel %vm2790, %v2888, 0
  %v2911 = vsel %vm2790, %v2889, 0
  %v2914 = vsel %vm2790, %v2890, 0
  %vm2916 = vcmask 1041408
  %v2918 = vsel %vm2916, %v2903, 0
  %2920 = vmatprep.subr.mxu0 0.0
  %2921 = vmatpush1.msra.mxu0 0.0
  %2922 = vmatprep.subr.mxu0 0.0
  %2923 = vmatpush1.msra.mxu0 0.0
  %2924 = vmatprep.subr.mxu0 0.0
  %2925 = vmatpush1.msra.mxu0 0.0
  %2926 = vmatprep.subr.mxu0 0.0
  %2927 = vmatpush1.msra.mxu0 %v2918
  %2928 = vmatprep.subr.mxu0 0.0
  %2929 = vmatpush1.msra.mxu0 %v2902
  %2930 = vmatprep.subr.mxu0 0.0
  %2931 = vmatpush1.msra.mxu0 %v2901
  %2932 = vmatprep.subr.mxu0 0.0
  %2933 = vmatpush1.msra.mxu0 %v2900
  %2934 = vmatprep.subr.mxu0 0.0
  %2935 = vmatpush1.msra.mxu0 %v2899
  %2936 = vmatprep.subr.mxu0 0.0
  %2937 = vmatpush1.msra.mxu0 %v2898
  %2938 = vmatprep.subr.mxu0 0.0
  %2939 = vmatpush1.msra.mxu0 %v2897
  %2940 = vmatprep.subr.mxu0 0.0
  %2941 = vmatpush1.msra.mxu0 %v2896
  %2942 = vmatprep.subr.mxu0 0.0
  %2943 = vmatpush1.msra.mxu0 %v2895
  %2944 = vmatprep.subr.mxu0 0.0
  %2945 = vmatpush1.msra.mxu0 %v2894
  %2946 = vmatprep.subr.mxu0 0.0
  %2947 = vmatpush1.msra.mxu0 %v2893
  %2948 = vmatprep.subr.mxu0 0.0
  %2949 = vmatpush1.msra.mxu0 %v2892
  %2950 = vmatprep.subr.mxu0 0.0
  %2951 = vmatpush1.msra.mxu0 %v2891
  %2952 = vmatprep.subr.mxu0 0.0
  %2953 = vmatpush2.msra.mxu0 0.0
  %2954 = vmatprep.subr.mxu0 0.0
  %2955 = vmatpush2.msra.mxu0 0.0
  %2956 = vmatprep.subr.mxu0 0.0
  %2957 = vmatpush2.msra.mxu0 0.0
  %2958 = vmatprep.subr.mxu0 0.0
  %2959 = vmatpush2.msra.mxu0 0.0
  %2960 = vmatprep.subr.mxu0 0.0
  %2961 = vmatpush2.msra.mxu0 0.0
  %2962 = vmatprep.subr.mxu0 0.0
  %2963 = vmatpush2.msra.mxu0 0.0
  %2964 = vmatprep.subr.mxu0 0.0
  %2965 = vmatpush2.msra.mxu0 0.0
  %2966 = vmatprep.subr.mxu0 0.0
  %2967 = vmatpush2.msra.mxu0 0.0
  %2968 = vmatprep.subr.mxu0 0.0
  %2969 = vmatpush2.msra.mxu0 0.0
  %2970 = vmatprep.subr.mxu0 0.0
  %2971 = vmatpush2.msra.mxu0 0.0
  %2972 = vmatprep.subr.mxu0 0.0
  %2973 = vmatpush2.msra.mxu0 0.0
  %2974 = vmatprep.subr.mxu0 0.0
  %2975 = vmatpush2.msra.mxu0 0.0
  %2976 = vmatprep.subr.mxu0 0.0
  %2977 = vmatpush2.msra.mxu0 0.0
  %2978 = vmatprep.subr.mxu0 0.0
  %2979 = vmatpush2.msra.mxu0 0.0
  %2980 = vmatprep.subr.mxu0 0.0
  %2981 = vmatpush2.msra.mxu0 0.0
  %2982 = vmatprep.subr.mxu0 0.0
  %2983 = vmatpush2.msra.mxu0 0.0
  %2984 = vmatprep.mubr.f32.mxu0 0.0
  %2985 = vmatmul.mubr.f32.gmra.mxu0 %v2905
  %v2986 = vpop.f32.mrf.mxu0
  %v2987 = vadd.f32 0.0, %v2986
  %v2988 = vpop.f32.mrf.mxu0
  %2989 = vmatprep.mubr.f32.mxu0 0.0
  %2990 = vmatmul.mubr.f32.gmra.mxu0 %v2908
  %v2991 = vpop.f32.mrf.mxu0
  %v2992 = vadd.f32 0.0, %v2991
  %v2993 = vpop.f32.mrf.mxu0
  %2994 = vmatprep.mubr.f32.mxu0 0.0
  %2995 = vmatmul.mubr.f32.gmra.mxu0 %v2911
  %v2996 = vpop.f32.mrf.mxu0
  %v2997 = vadd.f32 0.0, %v2996
  %v2998 = vpop.f32.mrf.mxu0
  %2999 = vmatprep.mubr.f32.mxu0 0.0
  %3000 = vmatmul.mubr.f32.gmra.mxu0 %v2914
  %v3001 = vpop.f32.mrf.mxu0
  %v3002 = vadd.f32 0.0, %v3001
  %v3003 = vpop.f32.mrf.mxu0
  %3004 = vdwg.mxu0
  %s3005 = scalar_lea.vmem %s4, 104
  %v3006 = vld [vmem:[%s3005] sm:$0xff]
  %v3007 = vld [vmem:[%s3005 + $0x8] sm:$0xff]
  %v3008 = vld [vmem:[%s3005 + $0x10] sm:$0xff]
  %v3009 = vld [vmem:[%s3005 + $0x18] sm:$0xff]
  %v3010 = vld [vmem:[%s3005 + $0x20] sm:$0xff]
  %v3011 = vld [vmem:[%s3005 + $0x28] sm:$0xff]
  %v3012 = vld [vmem:[%s3005 + $0x30] sm:$0xff]
  %v3013 = vld [vmem:[%s3005 + $0x38] sm:$0xff]
  %v3014 = vld [vmem:[%s3005 + $0x40] sm:$0xff]
  %v3015 = vld [vmem:[%s3005 + $0x48] sm:$0xff]
  %v3016 = vld [vmem:[%s3005 + $0x50] sm:$0xff]
  %v3017 = vld [vmem:[%s3005 + $0x58] sm:$0xff]
  %v3018 = vld [vmem:[%s3005 + $0x60] sm:$0x3]
  %v3020 = vsel %vm2916, %v3018, 0
  %3022 = vmatprep.subr.mxu0 0.0
  %3023 = vmatpush1.msra.mxu0 0.0
  %3024 = vmatprep.subr.mxu0 0.0
  %3025 = vmatpush1.msra.mxu0 0.0
  %3026 = vmatprep.subr.mxu0 0.0
  %3027 = vmatpush1.msra.mxu0 0.0
  %3028 = vmatprep.subr.mxu0 0.0
  %3029 = vmatpush1.msra.mxu0 %v3020
  %3030 = vmatprep.subr.mxu0 0.0
  %3031 = vmatpush1.msra.mxu0 %v3017
  %3032 = vmatprep.subr.mxu0 0.0
  %3033 = vmatpush1.msra.mxu0 %v3016
  %3034 = vmatprep.subr.mxu0 0.0
  %3035 = vmatpush1.msra.mxu0 %v3015
  %3036 = vmatprep.subr.mxu0 0.0
  %3037 = vmatpush1.msra.mxu0 %v3014
  %3038 = vmatprep.subr.mxu0 0.0
  %3039 = vmatpush1.msra.mxu0 %v3013
  %3040 = vmatprep.subr.mxu0 0.0
  %3041 = vmatpush1.msra.mxu0 %v3012
  %3042 = vmatprep.subr.mxu0 0.0
  %3043 = vmatpush1.msra.mxu0 %v3011
  %3044 = vmatprep.subr.mxu0 0.0
  %3045 = vmatpush1.msra.mxu0 %v3010
  %3046 = vmatprep.subr.mxu0 0.0
  %3047 = vmatpush1.msra.mxu0 %v3009
  %3048 = vmatprep.subr.mxu0 0.0
  %3049 = vmatpush1.msra.mxu0 %v3008
  %3050 = vmatprep.subr.mxu0 0.0
  %3051 = vmatpush1.msra.mxu0 %v3007
  %3052 = vmatprep.subr.mxu0 0.0
  %3053 = vmatpush1.msra.mxu0 %v3006
  %3054 = vmatprep.subr.mxu0 0.0
  %3055 = vmatpush2.msra.mxu0 0.0
  %3056 = vmatprep.subr.mxu0 0.0
  %3057 = vmatpush2.msra.mxu0 0.0
  %3058 = vmatprep.subr.mxu0 0.0
  %3059 = vmatpush2.msra.mxu0 0.0
  %3060 = vmatprep.subr.mxu0 0.0
  %3061 = vmatpush2.msra.mxu0 0.0
  %3062 = vmatprep.subr.mxu0 0.0
  %3063 = vmatpush2.msra.mxu0 0.0
  %3064 = vmatprep.subr.mxu0 0.0
  %3065 = vmatpush2.msra.mxu0 0.0
  %3066 = vmatprep.subr.mxu0 0.0
  %3067 = vmatpush2.msra.mxu0 0.0
  %3068 = vmatprep.subr.mxu0 0.0
  %3069 = vmatpush2.msra.mxu0 0.0
  %3070 = vmatprep.subr.mxu0 0.0
  %3071 = vmatpush2.msra.mxu0 0.0
  %3072 = vmatprep.subr.mxu0 0.0
  %3073 = vmatpush2.msra.mxu0 0.0
  %3074 = vmatprep.subr.mxu0 0.0
  %3075 = vmatpush2.msra.mxu0 0.0
  %3076 = vmatprep.subr.mxu0 0.0
  %3077 = vmatpush2.msra.mxu0 0.0
  %3078 = vmatprep.subr.mxu0 0.0
  %3079 = vmatpush2.msra.mxu0 0.0
  %3080 = vmatprep.subr.mxu0 0.0
  %3081 = vmatpush2.msra.mxu0 0.0
  %3082 = vmatprep.subr.mxu0 0.0
  %3083 = vmatpush2.msra.mxu0 0.0
  %3084 = vmatprep.subr.mxu0 0.0
  %3085 = vmatpush2.msra.mxu0 0.0
  %3086 = vmatprep.mubr.f32.mxu0 0.0
  %3087 = vmatmul.mubr.f32.gmra.mxu0 %v2905
  %v3088 = vpop.f32.mrf.mxu0
  %v3089 = vadd.f32 0.0, %v3088
  %v3090 = vpop.f32.mrf.mxu0
  %3091 = vmatprep.mubr.f32.mxu0 0.0
  %3092 = vmatmul.mubr.f32.gmra.mxu0 %v2908
  %v3093 = vpop.f32.mrf.mxu0
  %v3094 = vadd.f32 0.0, %v3093
  %v3095 = vpop.f32.mrf.mxu0
  %3096 = vmatprep.mubr.f32.mxu0 0.0
  %3097 = vmatmul.mubr.f32.gmra.mxu0 %v2911
  %v3098 = vpop.f32.mrf.mxu0
  %v3099 = vadd.f32 0.0, %v3098
  %v3100 = vpop.f32.mrf.mxu0
  %3101 = vmatprep.mubr.f32.mxu0 0.0
  %3102 = vmatmul.mubr.f32.gmra.mxu0 %v2914
  %v3103 = vpop.f32.mrf.mxu0
  %v3104 = vadd.f32 0.0, %v3103
  %v3105 = vpop.f32.mrf.mxu0
  %3106 = vdwg.mxu0
  %s3107 = scalar_lea.vmem %s4, 208
  %v3108 = vld [vmem:[%s3107] sm:$0xff]
  %v3109 = vld [vmem:[%s3107 + $0x8] sm:$0xff]
  %v3110 = vld [vmem:[%s3107 + $0x10] sm:$0xff]
  %v3111 = vld [vmem:[%s3107 + $0x18] sm:$0xff]
  %v3112 = vld [vmem:[%s3107 + $0x20] sm:$0xff]
  %v3113 = vld [vmem:[%s3107 + $0x28] sm:$0xff]
  %v3114 = vld [vmem:[%s3107 + $0x30] sm:$0xff]
  %v3115 = vld [vmem:[%s3107 + $0x38] sm:$0xff]
  %v3116 = vld [vmem:[%s3107 + $0x40] sm:$0xff]
  %v3117 = vld [vmem:[%s3107 + $0x48] sm:$0xff]
  %v3118 = vld [vmem:[%s3107 + $0x50] sm:$0xff]
  %v3119 = vld [vmem:[%s3107 + $0x58] sm:$0xff]
  %v3120 = vld [vmem:[%s3107 + $0x60] sm:$0x3]
  %v3122 = vsel %vm2916, %v3120, 0
  %3124 = vmatprep.subr.mxu0 0.0
  %3125 = vmatpush1.msra.mxu0 0.0
  %3126 = vmatprep.subr.mxu0 0.0
  %3127 = vmatpush1.msra.mxu0 0.0
  %3128 = vmatprep.subr.mxu0 0.0
  %3129 = vmatpush1.msra.mxu0 0.0
  %3130 = vmatprep.subr.mxu0 0.0
  %3131 = vmatpush1.msra.mxu0 %v3122
  %3132 = vmatprep.subr.mxu0 0.0
  %3133 = vmatpush1.msra.mxu0 %v3119
  %3134 = vmatprep.subr.mxu0 0.0
  %3135 = vmatpush1.msra.mxu0 %v3118
  %3136 = vmatprep.subr.mxu0 0.0
  %3137 = vmatpush1.msra.mxu0 %v3117
  %3138 = vmatprep.subr.mxu0 0.0
  %3139 = vmatpush1.msra.mxu0 %v3116
  %3140 = vmatprep.subr.mxu0 0.0
  %3141 = vmatpush1.msra.mxu0 %v3115
  %3142 = vmatprep.subr.mxu0 0.0
  %3143 = vmatpush1.msra.mxu0 %v3114
  %3144 = vmatprep.subr.mxu0 0.0
  %3145 = vmatpush1.msra.mxu0 %v3113
  %3146 = vmatprep.subr.mxu0 0.0
  %3147 = vmatpush1.msra.mxu0 %v3112
  %3148 = vmatprep.subr.mxu0 0.0
  %3149 = vmatpush1.msra.mxu0 %v3111
  %3150 = vmatprep.subr.mxu0 0.0
  %3151 = vmatpush1.msra.mxu0 %v3110
  %3152 = vmatprep.subr.mxu0 0.0
  %3153 = vmatpush1.msra.mxu0 %v3109
  %3154 = vmatprep.subr.mxu0 0.0
  %3155 = vmatpush1.msra.mxu0 %v3108
  %3156 = vmatprep.subr.mxu0 0.0
  %3157 = vmatpush2.msra.mxu0 0.0
  %3158 = vmatprep.subr.mxu0 0.0
  %3159 = vmatpush2.msra.mxu0 0.0
  %3160 = vmatprep.subr.mxu0 0.0
  %3161 = vmatpush2.msra.mxu0 0.0
  %3162 = vmatprep.subr.mxu0 0.0
  %3163 = vmatpush2.msra.mxu0 0.0
  %3164 = vmatprep.subr.mxu0 0.0
  %3165 = vmatpush2.msra.mxu0 0.0
  %3166 = vmatprep.subr.mxu0 0.0
  %3167 = vmatpush2.msra.mxu0 0.0
  %3168 = vmatprep.subr.mxu0 0.0
  %3169 = vmatpush2.msra.mxu0 0.0
  %3170 = vmatprep.subr.mxu0 0.0
  %3171 = vmatpush2.msra.mxu0 0.0
  %3172 = vmatprep.subr.mxu0 0.0
  %3173 = vmatpush2.msra.mxu0 0.0
  %3174 = vmatprep.subr.mxu0 0.0
  %3175 = vmatpush2.msra.mxu0 0.0
  %3176 = vmatprep.subr.mxu0 0.0
  %3177 = vmatpush2.msra.mxu0 0.0
  %3178 = vmatprep.subr.mxu0 0.0
  %3179 = vmatpush2.msra.mxu0 0.0
  %3180 = vmatprep.subr.mxu0 0.0
  %3181 = vmatpush2.msra.mxu0 0.0
  %3182 = vmatprep.subr.mxu0 0.0
  %3183 = vmatpush2.msra.mxu0 0.0
  %3184 = vmatprep.subr.mxu0 0.0
  %3185 = vmatpush2.msra.mxu0 0.0
  %3186 = vmatprep.subr.mxu0 0.0
  %3187 = vmatpush2.msra.mxu0 0.0
  %3188 = vmatprep.mubr.f32.mxu0 0.0
  %3189 = vmatmul.mubr.f32.gmra.mxu0 %v2905
  %v3190 = vpop.f32.mrf.mxu0
  %v3191 = vadd.f32 0.0, %v3190
  %v3192 = vpop.f32.mrf.mxu0
  %3193 = vmatprep.mubr.f32.mxu0 0.0
  %3194 = vmatmul.mubr.f32.gmra.mxu0 %v2908
  %v3195 = vpop.f32.mrf.mxu0
  %v3196 = vadd.f32 0.0, %v3195
  %v3197 = vpop.f32.mrf.mxu0
  %3198 = vmatprep.mubr.f32.mxu0 0.0
  %3199 = vmatmul.mubr.f32.gmra.mxu0 %v2911
  %v3200 = vpop.f32.mrf.mxu0
  %v3201 = vadd.f32 0.0, %v3200
  %v3202 = vpop.f32.mrf.mxu0
  %3203 = vmatprep.mubr.f32.mxu0 0.0
  %3204 = vmatmul.mubr.f32.gmra.mxu0 %v2914
  %v3205 = vpop.f32.mrf.mxu0
  %v3206 = vadd.f32 0.0, %v3205
  %v3207 = vpop.f32.mrf.mxu0
  %3208 = vdwg.mxu0
  %s3209 = scalar_lea.vmem %s4, 312
  %v3210 = vld [vmem:[%s3209] sm:$0xff]
  %v3211 = vld [vmem:[%s3209 + $0x8] sm:$0xff]
  %v3212 = vld [vmem:[%s3209 + $0x10] sm:$0xff]
  %v3213 = vld [vmem:[%s3209 + $0x18] sm:$0xff]
  %v3214 = vld [vmem:[%s3209 + $0x20] sm:$0xff]
  %v3215 = vld [vmem:[%s3209 + $0x28] sm:$0xff]
  %v3216 = vld [vmem:[%s3209 + $0x30] sm:$0xff]
  %v3217 = vld [vmem:[%s3209 + $0x38] sm:$0xff]
  %v3218 = vld [vmem:[%s3209 + $0x40] sm:$0xff]
  %v3219 = vld [vmem:[%s3209 + $0x48] sm:$0xff]
  %v3220 = vld [vmem:[%s3209 + $0x50] sm:$0xff]
  %v3221 = vld [vmem:[%s3209 + $0x58] sm:$0xff]
  %v3222 = vld [vmem:[%s3209 + $0x60] sm:$0x3]
  %v3224 = vsel %vm2916, %v3222, 0
  %3226 = vmatprep.subr.mxu0 0.0
  %3227 = vmatpush1.msra.mxu0 0.0
  %3228 = vmatprep.subr.mxu0 0.0
  %3229 = vmatpush1.msra.mxu0 0.0
  %3230 = vmatprep.subr.mxu0 0.0
  %3231 = vmatpush1.msra.mxu0 0.0
  %3232 = vmatprep.subr.mxu0 0.0
  %3233 = vmatpush1.msra.mxu0 %v3224
  %3234 = vmatprep.subr.mxu0 0.0
  %3235 = vmatpush1.msra.mxu0 %v3221
  %3236 = vmatprep.subr.mxu0 0.0
  %3237 = vmatpush1.msra.mxu0 %v3220
  %3238 = vmatprep.subr.mxu0 0.0
  %3239 = vmatpush1.msra.mxu0 %v3219
  %3240 = vmatprep.subr.mxu0 0.0
  %3241 = vmatpush1.msra.mxu0 %v3218
  %3242 = vmatprep.subr.mxu0 0.0
  %3243 = vmatpush1.msra.mxu0 %v3217
  %3244 = vmatprep.subr.mxu0 0.0
  %3245 = vmatpush1.msra.mxu0 %v3216
  %3246 = vmatprep.subr.mxu0 0.0
  %3247 = vmatpush1.msra.mxu0 %v3215
  %3248 = vmatprep.subr.mxu0 0.0
  %3249 = vmatpush1.msra.mxu0 %v3214
  %3250 = vmatprep.subr.mxu0 0.0
  %3251 = vmatpush1.msra.mxu0 %v3213
  %3252 = vmatprep.subr.mxu0 0.0
  %3253 = vmatpush1.msra.mxu0 %v3212
  %3254 = vmatprep.subr.mxu0 0.0
  %3255 = vmatpush1.msra.mxu0 %v3211
  %3256 = vmatprep.subr.mxu0 0.0
  %3257 = vmatpush1.msra.mxu0 %v3210
  %3258 = vmatprep.subr.mxu0 0.0
  %3259 = vmatpush2.msra.mxu0 0.0
  %3260 = vmatprep.subr.mxu0 0.0
  %3261 = vmatpush2.msra.mxu0 0.0
  %3262 = vmatprep.subr.mxu0 0.0
  %3263 = vmatpush2.msra.mxu0 0.0
  %3264 = vmatprep.subr.mxu0 0.0
  %3265 = vmatpush2.msra.mxu0 0.0
  %3266 = vmatprep.subr.mxu0 0.0
  %3267 = vmatpush2.msra.mxu0 0.0
  %3268 = vmatprep.subr.mxu0 0.0
  %3269 = vmatpush2.msra.mxu0 0.0
  %3270 = vmatprep.subr.mxu0 0.0
  %3271 = vmatpush2.msra.mxu0 0.0
  %3272 = vmatprep.subr.mxu0 0.0
  %3273 = vmatpush2.msra.mxu0 0.0
  %3274 = vmatprep.subr.mxu0 0.0
  %3275 = vmatpush2.msra.mxu0 0.0
  %3276 = vmatprep.subr.mxu0 0.0
  %3277 = vmatpush2.msra.mxu0 0.0
  %3278 = vmatprep.subr.mxu0 0.0
  %3279 = vmatpush2.msra.mxu0 0.0
  %3280 = vmatprep.subr.mxu0 0.0
  %3281 = vmatpush2.msra.mxu0 0.0
  %3282 = vmatprep.subr.mxu0 0.0
  %3283 = vmatpush2.msra.mxu0 0.0
  %3284 = vmatprep.subr.mxu0 0.0
  %3285 = vmatpush2.msra.mxu0 0.0
  %3286 = vmatprep.subr.mxu0 0.0
  %3287 = vmatpush2.msra.mxu0 0.0
  %3288 = vmatprep.subr.mxu0 0.0
  %3289 = vmatpush2.msra.mxu0 0.0
  %3290 = vmatprep.mubr.f32.mxu0 0.0
  %3291 = vmatmul.mubr.f32.gmra.mxu0 %v2905
  %v3292 = vpop.f32.mrf.mxu0
  %v3293 = vadd.f32 0.0, %v3292
  %v3294 = vpop.f32.mrf.mxu0
  %3295 = vmatprep.mubr.f32.mxu0 0.0
  %3296 = vmatmul.mubr.f32.gmra.mxu0 %v2908
  %v3297 = vpop.f32.mrf.mxu0
  %v3298 = vadd.f32 0.0, %v3297
  %v3299 = vpop.f32.mrf.mxu0
  %3300 = vmatprep.mubr.f32.mxu0 0.0
  %3301 = vmatmul.mubr.f32.gmra.mxu0 %v2911
  %v3302 = vpop.f32.mrf.mxu0
  %v3303 = vadd.f32 0.0, %v3302
  %v3304 = vpop.f32.mrf.mxu0
  %3305 = vmatprep.mubr.f32.mxu0 0.0
  %3306 = vmatmul.mubr.f32.gmra.mxu0 %v2914
  %v3307 = vpop.f32.mrf.mxu0
  %v3308 = vadd.f32 0.0, %v3307
  %v3309 = vpop.f32.mrf.mxu0
  %3310 = vdwg.mxu0
  %s3311 = scalar_lea.vmem %s4, 416
  %v3312 = vld [vmem:[%s3311] sm:$0xff]
  %v3313 = vld [vmem:[%s3311 + $0x8] sm:$0xff]
  %v3314 = vld [vmem:[%s3311 + $0x10] sm:$0xff]
  %v3315 = vld [vmem:[%s3311 + $0x18] sm:$0xff]
  %v3316 = vld [vmem:[%s3311 + $0x20] sm:$0xff]
  %v3317 = vld [vmem:[%s3311 + $0x28] sm:$0xff]
  %v3318 = vld [vmem:[%s3311 + $0x30] sm:$0xff]
  %v3319 = vld [vmem:[%s3311 + $0x38] sm:$0xff]
  %v3320 = vld [vmem:[%s3311 + $0x40] sm:$0xff]
  %v3321 = vld [vmem:[%s3311 + $0x48] sm:$0xff]
  %v3322 = vld [vmem:[%s3311 + $0x50] sm:$0xff]
  %v3323 = vld [vmem:[%s3311 + $0x58] sm:$0xff]
  %v3324 = vld [vmem:[%s3311 + $0x60] sm:$0x3]
  %v3326 = vsel %vm2916, %v3324, 0
  %3328 = vmatprep.subr.mxu0 0.0
  %3329 = vmatpush1.msra.mxu0 0.0
  %3330 = vmatprep.subr.mxu0 0.0
  %3331 = vmatpush1.msra.mxu0 0.0
  %3332 = vmatprep.subr.mxu0 0.0
  %3333 = vmatpush1.msra.mxu0 0.0
  %3334 = vmatprep.subr.mxu0 0.0
  %3335 = vmatpush1.msra.mxu0 %v3326
  %3336 = vmatprep.subr.mxu0 0.0
  %3337 = vmatpush1.msra.mxu0 %v3323
  %3338 = vmatprep.subr.mxu0 0.0
  %3339 = vmatpush1.msra.mxu0 %v3322
  %3340 = vmatprep.subr.mxu0 0.0
  %3341 = vmatpush1.msra.mxu0 %v3321
  %3342 = vmatprep.subr.mxu0 0.0
  %3343 = vmatpush1.msra.mxu0 %v3320
  %3344 = vmatprep.subr.mxu0 0.0
  %3345 = vmatpush1.msra.mxu0 %v3319
  %3346 = vmatprep.subr.mxu0 0.0
  %3347 = vmatpush1.msra.mxu0 %v3318
  %3348 = vmatprep.subr.mxu0 0.0
  %3349 = vmatpush1.msra.mxu0 %v3317
  %3350 = vmatprep.subr.mxu0 0.0
  %3351 = vmatpush1.msra.mxu0 %v3316
  %3352 = vmatprep.subr.mxu0 0.0
  %3353 = vmatpush1.msra.mxu0 %v3315
  %3354 = vmatprep.subr.mxu0 0.0
  %3355 = vmatpush1.msra.mxu0 %v3314
  %3356 = vmatprep.subr.mxu0 0.0
  %3357 = vmatpush1.msra.mxu0 %v3313
  %3358 = vmatprep.subr.mxu0 0.0
  %3359 = vmatpush1.msra.mxu0 %v3312
  %3360 = vmatprep.subr.mxu0 0.0
  %3361 = vmatpush2.msra.mxu0 0.0
  %3362 = vmatprep.subr.mxu0 0.0
  %3363 = vmatpush2.msra.mxu0 0.0
  %3364 = vmatprep.subr.mxu0 0.0
  %3365 = vmatpush2.msra.mxu0 0.0
  %3366 = vmatprep.subr.mxu0 0.0
  %3367 = vmatpush2.msra.mxu0 0.0
  %3368 = vmatprep.subr.mxu0 0.0
  %3369 = vmatpush2.msra.mxu0 0.0
  %3370 = vmatprep.subr.mxu0 0.0
  %3371 = vmatpush2.msra.mxu0 0.0
  %3372 = vmatprep.subr.mxu0 0.0
  %3373 = vmatpush2.msra.mxu0 0.0
  %3374 = vmatprep.subr.mxu0 0.0
  %3375 = vmatpush2.msra.mxu0 0.0
  %3376 = vmatprep.subr.mxu0 0.0
  %3377 = vmatpush2.msra.mxu0 0.0
  %3378 = vmatprep.subr.mxu0 0.0
  %3379 = vmatpush2.msra.mxu0 0.0
  %3380 = vmatprep.subr.mxu0 0.0
  %3381 = vmatpush2.msra.mxu0 0.0
  %3382 = vmatprep.subr.mxu0 0.0
  %3383 = vmatpush2.msra.mxu0 0.0
  %3384 = vmatprep.subr.mxu0 0.0
  %3385 = vmatpush2.msra.mxu0 0.0
  %3386 = vmatprep.subr.mxu0 0.0
  %3387 = vmatpush2.msra.mxu0 0.0
  %3388 = vmatprep.subr.mxu0 0.0
  %3389 = vmatpush2.msra.mxu0 0.0
  %3390 = vmatprep.subr.mxu0 0.0
  %3391 = vmatpush2.msra.mxu0 0.0
  %3392 = vmatprep.mubr.f32.mxu0 0.0
  %3393 = vmatmul.mubr.f32.gmra.mxu0 %v2905
  %v3394 = vpop.f32.mrf.mxu0
  %v3395 = vadd.f32 0.0, %v3394
  %v3396 = vpop.f32.mrf.mxu0
  %3397 = vmatprep.mubr.f32.mxu0 0.0
  %3398 = vmatmul.mubr.f32.gmra.mxu0 %v2908
  %v3399 = vpop.f32.mrf.mxu0
  %v3400 = vadd.f32 0.0, %v3399
  %v3401 = vpop.f32.mrf.mxu0
  %3402 = vmatprep.mubr.f32.mxu0 0.0
  %3403 = vmatmul.mubr.f32.gmra.mxu0 %v2911
  %v3404 = vpop.f32.mrf.mxu0
  %v3405 = vadd.f32 0.0, %v3404
  %v3406 = vpop.f32.mrf.mxu0
  %3407 = vmatprep.mubr.f32.mxu0 0.0
  %3408 = vmatmul.mubr.f32.gmra.mxu0 %v2914
  %v3409 = vpop.f32.mrf.mxu0
  %v3410 = vadd.f32 0.0, %v3409
  %v3411 = vpop.f32.mrf.mxu0
  %3412 = vdwg.mxu0
  %s3413 = scalar_lea.vmem %s4, 520
  %v3414 = vld [vmem:[%s3413] sm:$0xff]
  %v3415 = vld [vmem:[%s3413 + $0x8] sm:$0xff]
  %v3416 = vld [vmem:[%s3413 + $0x10] sm:$0xff]
  %v3417 = vld [vmem:[%s3413 + $0x18] sm:$0xff]
  %v3418 = vld [vmem:[%s3413 + $0x20] sm:$0xff]
  %v3419 = vld [vmem:[%s3413 + $0x28] sm:$0xff]
  %v3420 = vld [vmem:[%s3413 + $0x30] sm:$0xff]
  %v3421 = vld [vmem:[%s3413 + $0x38] sm:$0xff]
  %v3422 = vld [vmem:[%s3413 + $0x40] sm:$0xff]
  %v3423 = vld [vmem:[%s3413 + $0x48] sm:$0xff]
  %v3424 = vld [vmem:[%s3413 + $0x50] sm:$0xff]
  %v3425 = vld [vmem:[%s3413 + $0x58] sm:$0xff]
  %v3426 = vld [vmem:[%s3413 + $0x60] sm:$0x3]
  %v3428 = vsel %vm2916, %v3426, 0
  %3430 = vmatprep.subr.mxu0 0.0
  %3431 = vmatpush1.msra.mxu0 0.0
  %3432 = vmatprep.subr.mxu0 0.0
  %3433 = vmatpush1.msra.mxu0 0.0
  %3434 = vmatprep.subr.mxu0 0.0
  %3435 = vmatpush1.msra.mxu0 0.0
  %3436 = vmatprep.subr.mxu0 0.0
  %3437 = vmatpush1.msra.mxu0 %v3428
  %3438 = vmatprep.subr.mxu0 0.0
  %3439 = vmatpush1.msra.mxu0 %v3425
  %3440 = vmatprep.subr.mxu0 0.0
  %3441 = vmatpush1.msra.mxu0 %v3424
  %3442 = vmatprep.subr.mxu0 0.0
  %3443 = vmatpush1.msra.mxu0 %v3423
  %3444 = vmatprep.subr.mxu0 0.0
  %3445 = vmatpush1.msra.mxu0 %v3422
  %3446 = vmatprep.subr.mxu0 0.0
  %3447 = vmatpush1.msra.mxu0 %v3421
  %3448 = vmatprep.subr.mxu0 0.0
  %3449 = vmatpush1.msra.mxu0 %v3420
  %3450 = vmatprep.subr.mxu0 0.0
  %3451 = vmatpush1.msra.mxu0 %v3419
  %3452 = vmatprep.subr.mxu0 0.0
  %3453 = vmatpush1.msra.mxu0 %v3418
  %3454 = vmatprep.subr.mxu0 0.0
  %3455 = vmatpush1.msra.mxu0 %v3417
  %3456 = vmatprep.subr.mxu0 0.0
  %3457 = vmatpush1.msra.mxu0 %v3416
  %3458 = vmatprep.subr.mxu0 0.0
  %3459 = vmatpush1.msra.mxu0 %v3415
  %3460 = vmatprep.subr.mxu0 0.0
  %3461 = vmatpush1.msra.mxu0 %v3414
  %3462 = vmatprep.subr.mxu0 0.0
  %3463 = vmatpush2.msra.mxu0 0.0
  %3464 = vmatprep.subr.mxu0 0.0
  %3465 = vmatpush2.msra.mxu0 0.0
  %3466 = vmatprep.subr.mxu0 0.0
  %3467 = vmatpush2.msra.mxu0 0.0
  %3468 = vmatprep.subr.mxu0 0.0
  %3469 = vmatpush2.msra.mxu0 0.0
  %3470 = vmatprep.subr.mxu0 0.0
  %3471 = vmatpush2.msra.mxu0 0.0
  %3472 = vmatprep.subr.mxu0 0.0
  %3473 = vmatpush2.msra.mxu0 0.0
  %3474 = vmatprep.subr.mxu0 0.0
  %3475 = vmatpush2.msra.mxu0 0.0
  %3476 = vmatprep.subr.mxu0 0.0
  %3477 = vmatpush2.msra.mxu0 0.0
  %3478 = vmatprep.subr.mxu0 0.0
  %3479 = vmatpush2.msra.mxu0 0.0
  %3480 = vmatprep.subr.mxu0 0.0
  %3481 = vmatpush2.msra.mxu0 0.0
  %3482 = vmatprep.subr.mxu0 0.0
  %3483 = vmatpush2.msra.mxu0 0.0
  %3484 = vmatprep.subr.mxu0 0.0
  %3485 = vmatpush2.msra.mxu0 0.0
  %3486 = vmatprep.subr.mxu0 0.0
  %3487 = vmatpush2.msra.mxu0 0.0
  %3488 = vmatprep.subr.mxu0 0.0
  %3489 = vmatpush2.msra.mxu0 0.0
  %3490 = vmatprep.subr.mxu0 0.0
  %3491 = vmatpush2.msra.mxu0 0.0
  %3492 = vmatprep.subr.mxu0 0.0
  %3493 = vmatpush2.msra.mxu0 0.0
  %3494 = vmatprep.mubr.f32.mxu0 0.0
  %3495 = vmatmul.mubr.f32.gmra.mxu0 %v2905
  %v3496 = vpop.f32.mrf.mxu0
  %v3497 = vadd.f32 0.0, %v3496
  %v3498 = vpop.f32.mrf.mxu0
  %3499 = vmatprep.mubr.f32.mxu0 0.0
  %3500 = vmatmul.mubr.f32.gmra.mxu0 %v2908
  %v3501 = vpop.f32.mrf.mxu0
  %v3502 = vadd.f32 0.0, %v3501
  %v3503 = vpop.f32.mrf.mxu0
  %3504 = vmatprep.mubr.f32.mxu0 0.0
  %3505 = vmatmul.mubr.f32.gmra.mxu0 %v2911
  %v3506 = vpop.f32.mrf.mxu0
  %v3507 = vadd.f32 0.0, %v3506
  %v3508 = vpop.f32.mrf.mxu0
  %3509 = vmatprep.mubr.f32.mxu0 0.0
  %3510 = vmatmul.mubr.f32.gmra.mxu0 %v2914
  %v3511 = vpop.f32.mrf.mxu0
  %v3512 = vadd.f32 0.0, %v3511
  %v3513 = vpop.f32.mrf.mxu0
  %3514 = vdwg.mxu0
  %s3515 = scalar_lea.vmem %s4, 624
  %v3516 = vld [vmem:[%s3515] sm:$0xff]
  %v3517 = vld [vmem:[%s3515 + $0x8] sm:$0xff]
  %v3518 = vld [vmem:[%s3515 + $0x10] sm:$0xff]
  %v3519 = vld [vmem:[%s3515 + $0x18] sm:$0xff]
  %v3520 = vld [vmem:[%s3515 + $0x20] sm:$0xff]
  %v3521 = vld [vmem:[%s3515 + $0x28] sm:$0xff]
  %v3522 = vld [vmem:[%s3515 + $0x30] sm:$0xff]
  %v3523 = vld [vmem:[%s3515 + $0x38] sm:$0xff]
  %v3524 = vld [vmem:[%s3515 + $0x40] sm:$0xff]
  %v3525 = vld [vmem:[%s3515 + $0x48] sm:$0xff]
  %v3526 = vld [vmem:[%s3515 + $0x50] sm:$0xff]
  %v3527 = vld [vmem:[%s3515 + $0x58] sm:$0xff]
  %v3528 = vld [vmem:[%s3515 + $0x60] sm:$0x3]
  %v3530 = vsel %vm2916, %v3528, 0
  %3532 = vmatprep.subr.mxu0 0.0
  %3533 = vmatpush1.msra.mxu0 0.0
  %3534 = vmatprep.subr.mxu0 0.0
  %3535 = vmatpush1.msra.mxu0 0.0
  %3536 = vmatprep.subr.mxu0 0.0
  %3537 = vmatpush1.msra.mxu0 0.0
  %3538 = vmatprep.subr.mxu0 0.0
  %3539 = vmatpush1.msra.mxu0 %v3530
  %3540 = vmatprep.subr.mxu0 0.0
  %3541 = vmatpush1.msra.mxu0 %v3527
  %3542 = vmatprep.subr.mxu0 0.0
  %3543 = vmatpush1.msra.mxu0 %v3526
  %3544 = vmatprep.subr.mxu0 0.0
  %3545 = vmatpush1.msra.mxu0 %v3525
  %3546 = vmatprep.subr.mxu0 0.0
  %3547 = vmatpush1.msra.mxu0 %v3524
  %3548 = vmatprep.subr.mxu0 0.0
  %3549 = vmatpush1.msra.mxu0 %v3523
  %3550 = vmatprep.subr.mxu0 0.0
  %3551 = vmatpush1.msra.mxu0 %v3522
  %3552 = vmatprep.subr.mxu0 0.0
  %3553 = vmatpush1.msra.mxu0 %v3521
  %3554 = vmatprep.subr.mxu0 0.0
  %3555 = vmatpush1.msra.mxu0 %v3520
  %3556 = vmatprep.subr.mxu0 0.0
  %3557 = vmatpush1.msra.mxu0 %v3519
  %3558 = vmatprep.subr.mxu0 0.0
  %3559 = vmatpush1.msra.mxu0 %v3518
  %3560 = vmatprep.subr.mxu0 0.0
  %3561 = vmatpush1.msra.mxu0 %v3517
  %3562 = vmatprep.subr.mxu0 0.0
  %3563 = vmatpush1.msra.mxu0 %v3516
  %3564 = vmatprep.subr.mxu0 0.0
  %3565 = vmatpush2.msra.mxu0 0.0
  %3566 = vmatprep.subr.mxu0 0.0
  %3567 = vmatpush2.msra.mxu0 0.0
  %3568 = vmatprep.subr.mxu0 0.0
  %3569 = vmatpush2.msra.mxu0 0.0
  %3570 = vmatprep.subr.mxu0 0.0
  %3571 = vmatpush2.msra.mxu0 0.0
  %3572 = vmatprep.subr.mxu0 0.0
  %3573 = vmatpush2.msra.mxu0 0.0
  %3574 = vmatprep.subr.mxu0 0.0
  %3575 = vmatpush2.msra.mxu0 0.0
  %3576 = vmatprep.subr.mxu0 0.0
  %3577 = vmatpush2.msra.mxu0 0.0
  %3578 = vmatprep.subr.mxu0 0.0
  %3579 = vmatpush2.msra.mxu0 0.0
  %3580 = vmatprep.subr.mxu0 0.0
  %3581 = vmatpush2.msra.mxu0 0.0
  %3582 = vmatprep.subr.mxu0 0.0
  %3583 = vmatpush2.msra.mxu0 0.0
  %3584 = vmatprep.subr.mxu0 0.0
  %3585 = vmatpush2.msra.mxu0 0.0
  %3586 = vmatprep.subr.mxu0 0.0
  %3587 = vmatpush2.msra.mxu0 0.0
  %3588 = vmatprep.subr.mxu0 0.0
  %3589 = vmatpush2.msra.mxu0 0.0
  %3590 = vmatprep.subr.mxu0 0.0
  %3591 = vmatpush2.msra.mxu0 0.0
  %3592 = vmatprep.subr.mxu0 0.0
  %3593 = vmatpush2.msra.mxu0 0.0
  %3594 = vmatprep.subr.mxu0 0.0
  %3595 = vmatpush2.msra.mxu0 0.0
  %3596 = vmatprep.mubr.f32.mxu0 0.0
  %3597 = vmatmul.mubr.f32.gmra.mxu0 %v2905
  %v3598 = vpop.f32.mrf.mxu0
  %v3599 = vadd.f32 0.0, %v3598
  %v3600 = vpop.f32.mrf.mxu0
  %3601 = vmatprep.mubr.f32.mxu0 0.0
  %3602 = vmatmul.mubr.f32.gmra.mxu0 %v2908
  %v3603 = vpop.f32.mrf.mxu0
  %v3604 = vadd.f32 0.0, %v3603
  %v3605 = vpop.f32.mrf.mxu0
  %3606 = vmatprep.mubr.f32.mxu0 0.0
  %3607 = vmatmul.mubr.f32.gmra.mxu0 %v2911
  %v3608 = vpop.f32.mrf.mxu0
  %v3609 = vadd.f32 0.0, %v3608
  %v3610 = vpop.f32.mrf.mxu0
  %3611 = vmatprep.mubr.f32.mxu0 0.0
  %3612 = vmatmul.mubr.f32.gmra.mxu0 %v2914
  %v3613 = vpop.f32.mrf.mxu0
  %v3614 = vadd.f32 0.0, %v3613
  %v3615 = vpop.f32.mrf.mxu0
  %3616 = vdwg.mxu0
  %s3617 = scalar_lea.vmem %s4, 728
  %v3618 = vld [vmem:[%s3617] sm:$0xff]
  %v3619 = vld [vmem:[%s3617 + $0x8] sm:$0xff]
  %v3620 = vld [vmem:[%s3617 + $0x10] sm:$0xff]
  %v3621 = vld [vmem:[%s3617 + $0x18] sm:$0xff]
  %v3622 = vld [vmem:[%s3617 + $0x20] sm:$0xff]
  %v3623 = vld [vmem:[%s3617 + $0x28] sm:$0xff]
  %v3624 = vld [vmem:[%s3617 + $0x30] sm:$0xff]
  %v3625 = vld [vmem:[%s3617 + $0x38] sm:$0xff]
  %v3626 = vld [vmem:[%s3617 + $0x40] sm:$0xff]
  %v3627 = vld [vmem:[%s3617 + $0x48] sm:$0xff]
  %v3628 = vld [vmem:[%s3617 + $0x50] sm:$0xff]
  %v3629 = vld [vmem:[%s3617 + $0x58] sm:$0xff]
  %v3630 = vld [vmem:[%s3617 + $0x60] sm:$0x3]
  %v3632 = vsel %vm2916, %v3630, 0
  %3634 = vmatprep.subr.mxu0 0.0
  %3635 = vmatpush1.msra.mxu0 0.0
  %3636 = vmatprep.subr.mxu0 0.0
  %3637 = vmatpush1.msra.mxu0 0.0
  %3638 = vmatprep.subr.mxu0 0.0
  %3639 = vmatpush1.msra.mxu0 0.0
  %3640 = vmatprep.subr.mxu0 0.0
  %3641 = vmatpush1.msra.mxu0 %v3632
  %3642 = vmatprep.subr.mxu0 0.0
  %3643 = vmatpush1.msra.mxu0 %v3629
  %3644 = vmatprep.subr.mxu0 0.0
  %3645 = vmatpush1.msra.mxu0 %v3628
  %3646 = vmatprep.subr.mxu0 0.0
  %3647 = vmatpush1.msra.mxu0 %v3627
  %3648 = vmatprep.subr.mxu0 0.0
  %3649 = vmatpush1.msra.mxu0 %v3626
  %3650 = vmatprep.subr.mxu0 0.0
  %3651 = vmatpush1.msra.mxu0 %v3625
  %3652 = vmatprep.subr.mxu0 0.0
  %3653 = vmatpush1.msra.mxu0 %v3624
  %3654 = vmatprep.subr.mxu0 0.0
  %3655 = vmatpush1.msra.mxu0 %v3623
  %3656 = vmatprep.subr.mxu0 0.0
  %3657 = vmatpush1.msra.mxu0 %v3622
  %3658 = vmatprep.subr.mxu0 0.0
  %3659 = vmatpush1.msra.mxu0 %v3621
  %3660 = vmatprep.subr.mxu0 0.0
  %3661 = vmatpush1.msra.mxu0 %v3620
  %3662 = vmatprep.subr.mxu0 0.0
  %3663 = vmatpush1.msra.mxu0 %v3619
  %3664 = vmatprep.subr.mxu0 0.0
  %3665 = vmatpush1.msra.mxu0 %v3618
  %3666 = vmatprep.subr.mxu0 0.0
  %3667 = vmatpush2.msra.mxu0 0.0
  %3668 = vmatprep.subr.mxu0 0.0
  %3669 = vmatpush2.msra.mxu0 0.0
  %3670 = vmatprep.subr.mxu0 0.0
  %3671 = vmatpush2.msra.mxu0 0.0
  %3672 = vmatprep.subr.mxu0 0.0
  %3673 = vmatpush2.msra.mxu0 0.0
  %3674 = vmatprep.subr.mxu0 0.0
  %3675 = vmatpush2.msra.mxu0 0.0
  %3676 = vmatprep.subr.mxu0 0.0
  %3677 = vmatpush2.msra.mxu0 0.0
  %3678 = vmatprep.subr.mxu0 0.0
  %3679 = vmatpush2.msra.mxu0 0.0
  %3680 = vmatprep.subr.mxu0 0.0
  %3681 = vmatpush2.msra.mxu0 0.0
  %3682 = vmatprep.subr.mxu0 0.0
  %3683 = vmatpush2.msra.mxu0 0.0
  %3684 = vmatprep.subr.mxu0 0.0
  %3685 = vmatpush2.msra.mxu0 0.0
  %3686 = vmatprep.subr.mxu0 0.0
  %3687 = vmatpush2.msra.mxu0 0.0
  %3688 = vmatprep.subr.mxu0 0.0
  %3689 = vmatpush2.msra.mxu0 0.0
  %3690 = vmatprep.subr.mxu0 0.0
  %3691 = vmatpush2.msra.mxu0 0.0
  %3692 = vmatprep.subr.mxu0 0.0
  %3693 = vmatpush2.msra.mxu0 0.0
  %3694 = vmatprep.subr.mxu0 0.0
  %3695 = vmatpush2.msra.mxu0 0.0
  %3696 = vmatprep.subr.mxu0 0.0
  %3697 = vmatpush2.msra.mxu0 0.0
  %3698 = vmatprep.mubr.f32.mxu0 0.0
  %3699 = vmatmul.mubr.f32.gmra.mxu0 %v2905
  %v3700 = vpop.f32.mrf.mxu0
  %v3701 = vadd.f32 0.0, %v3700
  %v3702 = vpop.f32.mrf.mxu0
  %3703 = vmatprep.mubr.f32.mxu0 0.0
  %3704 = vmatmul.mubr.f32.gmra.mxu0 %v2908
  %v3705 = vpop.f32.mrf.mxu0
  %v3706 = vadd.f32 0.0, %v3705
  %v3707 = vpop.f32.mrf.mxu0
  %3708 = vmatprep.mubr.f32.mxu0 0.0
  %3709 = vmatmul.mubr.f32.gmra.mxu0 %v2911
  %v3710 = vpop.f32.mrf.mxu0
  %v3711 = vadd.f32 0.0, %v3710
  %v3712 = vpop.f32.mrf.mxu0
  %3713 = vmatprep.mubr.f32.mxu0 0.0
  %3714 = vmatmul.mubr.f32.gmra.mxu0 %v2914
  %v3715 = vpop.f32.mrf.mxu0
  %v3716 = vadd.f32 0.0, %v3715
  %v3717 = vpop.f32.mrf.mxu0
  %3718 = vdwg.mxu0
  %s3719 = scalar_lea.vmem %s4, 832
  %v3720 = vld [vmem:[%s3719] sm:$0xff]
  %v3721 = vld [vmem:[%s3719 + $0x8] sm:$0xff]
  %v3722 = vld [vmem:[%s3719 + $0x10] sm:$0xff]
  %v3723 = vld [vmem:[%s3719 + $0x18] sm:$0xff]
  %v3724 = vld [vmem:[%s3719 + $0x20] sm:$0xff]
  %v3725 = vld [vmem:[%s3719 + $0x28] sm:$0xff]
  %v3726 = vld [vmem:[%s3719 + $0x30] sm:$0xff]
  %v3727 = vld [vmem:[%s3719 + $0x38] sm:$0xff]
  %v3728 = vld [vmem:[%s3719 + $0x40] sm:$0xff]
  %v3729 = vld [vmem:[%s3719 + $0x48] sm:$0xff]
  %v3730 = vld [vmem:[%s3719 + $0x50] sm:$0xff]
  %v3731 = vld [vmem:[%s3719 + $0x58] sm:$0xff]
  %v3732 = vld [vmem:[%s3719 + $0x60] sm:$0x3]
  %v3734 = vsel %vm2916, %v3732, 0
  %3736 = vmatprep.subr.mxu0 0.0
  %3737 = vmatpush1.msra.mxu0 0.0
  %3738 = vmatprep.subr.mxu0 0.0
  %3739 = vmatpush1.msra.mxu0 0.0
  %3740 = vmatprep.subr.mxu0 0.0
  %3741 = vmatpush1.msra.mxu0 0.0
  %3742 = vmatprep.subr.mxu0 0.0
  %3743 = vmatpush1.msra.mxu0 %v3734
  %3744 = vmatprep.subr.mxu0 0.0
  %3745 = vmatpush1.msra.mxu0 %v3731
  %3746 = vmatprep.subr.mxu0 0.0
  %3747 = vmatpush1.msra.mxu0 %v3730
  %3748 = vmatprep.subr.mxu0 0.0
  %3749 = vmatpush1.msra.mxu0 %v3729
  %3750 = vmatprep.subr.mxu0 0.0
  %3751 = vmatpush1.msra.mxu0 %v3728
  %3752 = vmatprep.subr.mxu0 0.0
  %3753 = vmatpush1.msra.mxu0 %v3727
  %3754 = vmatprep.subr.mxu0 0.0
  %3755 = vmatpush1.msra.mxu0 %v3726
  %3756 = vmatprep.subr.mxu0 0.0
  %3757 = vmatpush1.msra.mxu0 %v3725
  %3758 = vmatprep.subr.mxu0 0.0
  %3759 = vmatpush1.msra.mxu0 %v3724
  %3760 = vmatprep.subr.mxu0 0.0
  %3761 = vmatpush1.msra.mxu0 %v3723
  %3762 = vmatprep.subr.mxu0 0.0
  %3763 = vmatpush1.msra.mxu0 %v3722
  %3764 = vmatprep.subr.mxu0 0.0
  %3765 = vmatpush1.msra.mxu0 %v3721
  %3766 = vmatprep.subr.mxu0 0.0
  %3767 = vmatpush1.msra.mxu0 %v3720
  %3768 = vmatprep.subr.mxu0 0.0
  %3769 = vmatpush2.msra.mxu0 0.0
  %3770 = vmatprep.subr.mxu0 0.0
  %3771 = vmatpush2.msra.mxu0 0.0
  %3772 = vmatprep.subr.mxu0 0.0
  %3773 = vmatpush2.msra.mxu0 0.0
  %3774 = vmatprep.subr.mxu0 0.0
  %3775 = vmatpush2.msra.mxu0 0.0
  %3776 = vmatprep.subr.mxu0 0.0
  %3777 = vmatpush2.msra.mxu0 0.0
  %3778 = vmatprep.subr.mxu0 0.0
  %3779 = vmatpush2.msra.mxu0 0.0
  %3780 = vmatprep.subr.mxu0 0.0
  %3781 = vmatpush2.msra.mxu0 0.0
  %3782 = vmatprep.subr.mxu0 0.0
  %3783 = vmatpush2.msra.mxu0 0.0
  %3784 = vmatprep.subr.mxu0 0.0
  %3785 = vmatpush2.msra.mxu0 0.0
  %3786 = vmatprep.subr.mxu0 0.0
  %3787 = vmatpush2.msra.mxu0 0.0
  %3788 = vmatprep.subr.mxu0 0.0
  %3789 = vmatpush2.msra.mxu0 0.0
  %3790 = vmatprep.subr.mxu0 0.0
  %3791 = vmatpush2.msra.mxu0 0.0
  %3792 = vmatprep.subr.mxu0 0.0
  %3793 = vmatpush2.msra.mxu0 0.0
  %3794 = vmatprep.subr.mxu0 0.0
  %3795 = vmatpush2.msra.mxu0 0.0
  %3796 = vmatprep.subr.mxu0 0.0
  %3797 = vmatpush2.msra.mxu0 0.0
  %3798 = vmatprep.subr.mxu0 0.0
  %3799 = vmatpush2.msra.mxu0 0.0
  %3800 = vmatprep.mubr.f32.mxu0 0.0
  %3801 = vmatmul.mubr.f32.gmra.mxu0 %v2905
  %v3802 = vpop.f32.mrf.mxu0
  %v3803 = vadd.f32 0.0, %v3802
  %v3804 = vpop.f32.mrf.mxu0
  %3805 = vmatprep.mubr.f32.mxu0 0.0
  %3806 = vmatmul.mubr.f32.gmra.mxu0 %v2908
  %v3807 = vpop.f32.mrf.mxu0
  %v3808 = vadd.f32 0.0, %v3807
  %v3809 = vpop.f32.mrf.mxu0
  %3810 = vmatprep.mubr.f32.mxu0 0.0
  %3811 = vmatmul.mubr.f32.gmra.mxu0 %v2911
  %v3812 = vpop.f32.mrf.mxu0
  %v3813 = vadd.f32 0.0, %v3812
  %v3814 = vpop.f32.mrf.mxu0
  %3815 = vmatprep.mubr.f32.mxu0 0.0
  %3816 = vmatmul.mubr.f32.gmra.mxu0 %v2914
  %v3817 = vpop.f32.mrf.mxu0
  %v3818 = vadd.f32 0.0, %v3817
  %v3819 = vpop.f32.mrf.mxu0
  %3820 = vdwg.mxu0
  %s3821 = scalar_lea.vmem %s2, 96
  %v3822 = vld [vmem:[%s3821] sm:$0xff]
  %v3823 = vld [vmem:[%s3821 + $0x8] sm:$0xff]
  %v3824 = vld [vmem:[%s3821 + $0x10] sm:$0xff]
  %v3825 = vld [vmem:[%s3821 + $0x18] sm:$0xff]
  %v3826 = vld [vmem:[%s3821 + $0x20] sm:$0xff]
  %v3827 = vld [vmem:[%s3821 + $0x28] sm:$0xff]
  %v3828 = vld [vmem:[%s3821 + $0x30] sm:$0xff]
  %v3829 = vld [vmem:[%s3821 + $0x38] sm:$0xff]
  %v3830 = vld [vmem:[%s3821 + $0x40] sm:$0xff]
  %v3831 = vld [vmem:[%s3821 + $0x48] sm:$0xff]
  %v3832 = vld [vmem:[%s3821 + $0x50] sm:$0xff]
  %v3833 = vld [vmem:[%s3821 + $0x58] sm:$0xff]
  %v3835 = vsel %vm2607, %v3824, 0
  %v3838 = vsel %vm2607, %v3827, 0
  %v3841 = vsel %vm2607, %v3830, 0
  %v3844 = vsel %vm2607, %v3833, 0
  %3846 = vmatprep.subr.mxu0 0.0
  %3847 = vmatpush1.msra.mxu0 %v3308
  %3848 = vmatprep.subr.mxu0 0.0
  %3849 = vmatpush1.msra.mxu0 %v3303
  %3850 = vmatprep.subr.mxu0 0.0
  %3851 = vmatpush1.msra.mxu0 %v3298
  %3852 = vmatprep.subr.mxu0 0.0
  %3853 = vmatpush1.msra.mxu0 %v3293
  %3854 = vmatprep.subr.mxu0 0.0
  %3855 = vmatpush1.msra.mxu0 %v3206
  %3856 = vmatprep.subr.mxu0 0.0
  %3857 = vmatpush1.msra.mxu0 %v3201
  %3858 = vmatprep.subr.mxu0 0.0
  %3859 = vmatpush1.msra.mxu0 %v3196
  %3860 = vmatprep.subr.mxu0 0.0
  %3861 = vmatpush1.msra.mxu0 %v3191
  %3862 = vmatprep.subr.mxu0 0.0
  %3863 = vmatpush1.msra.mxu0 %v3104
  %3864 = vmatprep.subr.mxu0 0.0
  %3865 = vmatpush1.msra.mxu0 %v3099
  %3866 = vmatprep.subr.mxu0 0.0
  %3867 = vmatpush1.msra.mxu0 %v3094
  %3868 = vmatprep.subr.mxu0 0.0
  %3869 = vmatpush1.msra.mxu0 %v3089
  %3870 = vmatprep.subr.mxu0 0.0
  %3871 = vmatpush1.msra.mxu0 %v3002
  %3872 = vmatprep.subr.mxu0 0.0
  %3873 = vmatpush1.msra.mxu0 %v2997
  %3874 = vmatprep.subr.mxu0 0.0
  %3875 = vmatpush1.msra.mxu0 %v2992
  %3876 = vmatprep.subr.mxu0 0.0
  %3877 = vmatpush1.msra.mxu0 %v2987
  %3878 = vmatprep.subr.mxu0 0.0
  %3879 = vmatpush2.msra.mxu0 %v3716
  %3880 = vmatprep.subr.mxu0 0.0
  %3881 = vmatpush2.msra.mxu0 %v3711
  %3882 = vmatprep.subr.mxu0 0.0
  %3883 = vmatpush2.msra.mxu0 %v3706
  %3884 = vmatprep.subr.mxu0 0.0
  %3885 = vmatpush2.msra.mxu0 %v3701
  %3886 = vmatprep.subr.mxu0 0.0
  %3887 = vmatpush2.msra.mxu0 %v3614
  %3888 = vmatprep.subr.mxu0 0.0
  %3889 = vmatpush2.msra.mxu0 %v3609
  %3890 = vmatprep.subr.mxu0 0.0
  %3891 = vmatpush2.msra.mxu0 %v3604
  %3892 = vmatprep.subr.mxu0 0.0
  %3893 = vmatpush2.msra.mxu0 %v3599
  %3894 = vmatprep.subr.mxu0 0.0
  %3895 = vmatpush2.msra.mxu0 %v3512
  %3896 = vmatprep.subr.mxu0 0.0
  %3897 = vmatpush2.msra.mxu0 %v3507
  %3898 = vmatprep.subr.mxu0 0.0
  %3899 = vmatpush2.msra.mxu0 %v3502
  %3900 = vmatprep.subr.mxu0 0.0
  %3901 = vmatpush2.msra.mxu0 %v3497
  %3902 = vmatprep.subr.mxu0 0.0
  %3903 = vmatpush2.msra.mxu0 %v3410
  %3904 = vmatprep.subr.mxu0 0.0
  %3905 = vmatpush2.msra.mxu0 %v3405
  %3906 = vmatprep.subr.mxu0 0.0
  %3907 = vmatpush2.msra.mxu0 %v3400
  %3908 = vmatprep.subr.mxu0 0.0
  %3909 = vmatpush2.msra.mxu0 %v3395
  %3910 = vmatprep.mubr.f32.mxu0 %v3823
  %3911 = vmatmul.mubr.f32.gmra.mxu0 %v3822
  %v3912 = vpop.f32.mrf.mxu0
  %v3913 = vadd.f32 0.0, %v3912
  %v3914 = vpop.f32.mrf.mxu0
  %3915 = vmatprep.mubr.f32.mxu0 %v3826
  %3916 = vmatmul.mubr.f32.gmra.mxu0 %v3825
  %v3917 = vpop.f32.mrf.mxu0
  %v3918 = vadd.f32 0.0, %v3917
  %v3919 = vpop.f32.mrf.mxu0
  %3920 = vmatprep.mubr.f32.mxu0 %v3829
  %3921 = vmatmul.mubr.f32.gmra.mxu0 %v3828
  %v3922 = vpop.f32.mrf.mxu0
  %v3923 = vadd.f32 0.0, %v3922
  %v3924 = vpop.f32.mrf.mxu0
  %3925 = vmatprep.mubr.f32.mxu0 %v3832
  %3926 = vmatmul.mubr.f32.gmra.mxu0 %v3831
  %v3927 = vpop.f32.mrf.mxu0
  %v3928 = vadd.f32 0.0, %v3927
  %v3929 = vpop.f32.mrf.mxu0
  %3930 = vdwg.mxu0
  %3931 = vmatprep.subr.mxu0 0.0
  %3932 = vmatpush1.msra.mxu0 0.0
  %3933 = vmatprep.subr.mxu0 0.0
  %3934 = vmatpush1.msra.mxu0 0.0
  %3935 = vmatprep.subr.mxu0 0.0
  %3936 = vmatpush1.msra.mxu0 0.0
  %3937 = vmatprep.subr.mxu0 0.0
  %3938 = vmatpush1.msra.mxu0 0.0
  %3939 = vmatprep.subr.mxu0 0.0
  %3940 = vmatpush1.msra.mxu0 0.0
  %3941 = vmatprep.subr.mxu0 0.0
  %3942 = vmatpush1.msra.mxu0 0.0
  %3943 = vmatprep.subr.mxu0 0.0
  %3944 = vmatpush1.msra.mxu0 0.0
  %3945 = vmatprep.subr.mxu0 0.0
  %3946 = vmatpush1.msra.mxu0 0.0
  %3947 = vmatprep.subr.mxu0 0.0
  %3948 = vmatpush1.msra.mxu0 0.0
  %3949 = vmatprep.subr.mxu0 0.0
  %3950 = vmatpush1.msra.mxu0 0.0
  %3951 = vmatprep.subr.mxu0 0.0
  %3952 = vmatpush1.msra.mxu0 0.0
  %3953 = vmatprep.subr.mxu0 0.0
  %3954 = vmatpush1.msra.mxu0 0.0
  %3955 = vmatprep.subr.mxu0 0.0
  %3956 = vmatpush1.msra.mxu0 %v3818
  %3957 = vmatprep.subr.mxu0 0.0
  %3958 = vmatpush1.msra.mxu0 %v3813
  %3959 = vmatprep.subr.mxu0 0.0
  %3960 = vmatpush1.msra.mxu0 %v3808
  %3961 = vmatprep.subr.mxu0 0.0
  %3962 = vmatpush1.msra.mxu0 %v3803
  %3963 = vmatprep.subr.mxu0 0.0
  %3964 = vmatpush2.msra.mxu0 0.0
  %3965 = vmatprep.subr.mxu0 0.0
  %3966 = vmatpush2.msra.mxu0 0.0
  %3967 = vmatprep.subr.mxu0 0.0
  %3968 = vmatpush2.msra.mxu0 0.0
  %3969 = vmatprep.subr.mxu0 0.0
  %3970 = vmatpush2.msra.mxu0 0.0
  %3971 = vmatprep.subr.mxu0 0.0
  %3972 = vmatpush2.msra.mxu0 0.0
  %3973 = vmatprep.subr.mxu0 0.0
  %3974 = vmatpush2.msra.mxu0 0.0
  %3975 = vmatprep.subr.mxu0 0.0
  %3976 = vmatpush2.msra.mxu0 0.0
  %3977 = vmatprep.subr.mxu0 0.0
  %3978 = vmatpush2.msra.mxu0 0.0
  %3979 = vmatprep.subr.mxu0 0.0
  %3980 = vmatpush2.msra.mxu0 0.0
  %3981 = vmatprep.subr.mxu0 0.0
  %3982 = vmatpush2.msra.mxu0 0.0
  %3983 = vmatprep.subr.mxu0 0.0
  %3984 = vmatpush2.msra.mxu0 0.0
  %3985 = vmatprep.subr.mxu0 0.0
  %3986 = vmatpush2.msra.mxu0 0.0
  %3987 = vmatprep.subr.mxu0 0.0
  %3988 = vmatpush2.msra.mxu0 0.0
  %3989 = vmatprep.subr.mxu0 0.0
  %3990 = vmatpush2.msra.mxu0 0.0
  %3991 = vmatprep.subr.mxu0 0.0
  %3992 = vmatpush2.msra.mxu0 0.0
  %3993 = vmatprep.subr.mxu0 0.0
  %3994 = vmatpush2.msra.mxu0 0.0
  %3995 = vmatprep.mubr.f32.mxu0 0.0
  %3996 = vmatmul.mubr.f32.gmra.mxu0 %v3835
  %v3997 = vpop.f32.mrf.mxu0
  %v3998 = vadd.f32 %v3913, %v3997
  %v3999 = vpop.f32.mrf.mxu0
  %4000 = vmatprep.mubr.f32.mxu0 0.0
  %4001 = vmatmul.mubr.f32.gmra.mxu0 %v3838
  %v4002 = vpop.f32.mrf.mxu0
  %v4003 = vadd.f32 %v3918, %v4002
  %v4004 = vpop.f32.mrf.mxu0
  %4005 = vmatprep.mubr.f32.mxu0 0.0
  %4006 = vmatmul.mubr.f32.gmra.mxu0 %v3841
  %v4007 = vpop.f32.mrf.mxu0
  %v4008 = vadd.f32 %v3923, %v4007
  %v4009 = vpop.f32.mrf.mxu0
  %4010 = vmatprep.mubr.f32.mxu0 0.0
  %4011 = vmatmul.mubr.f32.gmra.mxu0 %v3844
  %v4012 = vpop.f32.mrf.mxu0
  %v4013 = vadd.f32 %v3928, %v4012
  %v4014 = vpop.f32.mrf.mxu0
  %4015 = vdwg.mxu0
  %vm4016 = vcmask 146432
  %v4017 = vsel %vm4016, %v3998, 0.0
  %4018 = vadd.xlane.f32.xlu0 %v4017
  %v4019 = vpop.xlane.xlu0 %4018
  %v4020 = vsel %vm4016, %v4003, 0.0
  %4021 = vadd.xlane.f32.xlu0 %v4020
  %v4022 = vpop.xlane.xlu0 %4021
  %v4023 = vsel %vm4016, %v4008, 0.0
  %4024 = vadd.xlane.f32.xlu0 %v4023
  %v4025 = vpop.xlane.xlu0 %4024
  %v4026 = vsel %vm4016, %v4013, 0.0
  %4027 = vadd.xlane.f32.xlu0 %v4026
  %v4028 = vpop.xlane.xlu0 %4027
  %v4029 = vmul.f32 %v4019, 0.055555556
  %v4030 = vmul.f32 %v4022, 0.055555556
  %v4031 = vmul.f32 %v4025, 0.055555556
  %v4032 = vmul.f32 %v4028, 0.055555556
  %v4033 = vsub.f32 %v3998, %v4029
  %v4034 = vsub.f32 %v4003, %v4030
  %v4035 = vsub.f32 %v4008, %v4031
  %v4036 = vsub.f32 %v4013, %v4032
  %v4037 = vmul.f32 %v4033, %v4033
  %v4038 = vmul.f32 %v4034, %v4034
  %v4039 = vmul.f32 %v4035, %v4035
  %v4040 = vmul.f32 %v4036, %v4036
  %v4041 = vsel %vm4016, %v4037, 0.0
  %4042 = vadd.xlane.f32.xlu0 %v4041
  %v4043 = vpop.xlane.xlu0 %4042
  %v4044 = vsel %vm4016, %v4038, 0.0
  %4045 = vadd.xlane.f32.xlu0 %v4044
  %v4046 = vpop.xlane.xlu0 %4045
  %v4047 = vsel %vm4016, %v4039, 0.0
  %4048 = vadd.xlane.f32.xlu0 %v4047
  %v4049 = vpop.xlane.xlu0 %4048
  %v4050 = vsel %vm4016, %v4040, 0.0
  %4051 = vadd.xlane.f32.xlu0 %v4050
  %v4052 = vpop.xlane.xlu0 %4051
  %v4053 = vmul.f32 %v4043, 0.055555556
  %v4054 = vmul.f32 %v4046, 0.055555556
  %v4055 = vmul.f32 %v4049, 0.055555556
  %v4056 = vmul.f32 %v4052, 0.055555556
  %v4057 = vadd.f32 %v4053, 1e-05
  %v4058 = vadd.f32 %v4054, 1e-05
  %v4059 = vadd.f32 %v4055, 1e-05
  %v4060 = vadd.f32 %v4056, 1e-05
  %v4061 = vrsqrt.pop %v4057
  %v4062 = vrsqrt.pop %v4058
  %v4063 = vrsqrt.pop %v4059
  %v4064 = vrsqrt.pop %v4060
  %v4065 = vmul.f32 %v297, %v4061
  %v4066 = vmul.f32 %v298, %v4062
  %v4067 = vmul.f32 %v299, %v4063
  %v4068 = vmul.f32 %v300, %v4064
  %4070 = vset.pattern.permute.xlu0 4
  %4071 = vperm.xlu0 %4070, %v4065
  %v4072 = vpop.permute.xlu0 %4071
  %4075 = vset.pattern.permute.xlu0 4
  %4076 = vperm.xlu0 %4075, %v4066
  %v4077 = vpop.permute.xlu0 %4076
  %4080 = vset.pattern.permute.xlu0 4
  %4081 = vperm.xlu0 %4080, %v4067
  %v4082 = vpop.permute.xlu0 %4081
  %4085 = vset.pattern.permute.xlu0 4
  %4086 = vperm.xlu0 %4085, %v4068
  %v4087 = vpop.permute.xlu0 %4086
  %v4089 = vmul.f32 %v4033, %v4072
  %v4090 = vmul.f32 %v4034, %v4077
  %v4091 = vmul.f32 %v4035, %v4082
  %v4092 = vmul.f32 %v4036, %v4087
  %4093 = vset.pattern.permute.xlu0 5
  %4094 = vperm.xlu0 %4093, %v297
  %v4095 = vpop.permute.xlu0 %4094
  %4097 = vset.pattern.permute.xlu0 5
  %4098 = vperm.xlu0 %4097, %v298
  %v4099 = vpop.permute.xlu0 %4098
  %4101 = vset.pattern.permute.xlu0 5
  %4102 = vperm.xlu0 %4101, %v299
  %v4103 = vpop.permute.xlu0 %4102
  %4105 = vset.pattern.permute.xlu0 5
  %4106 = vperm.xlu0 %4105, %v300
  %v4107 = vpop.permute.xlu0 %4106
  %v4109 = vadd.f32 %v4089, %v4095
  %v4110 = vadd.f32 %v4090, %v4099
  %v4111 = vadd.f32 %v4091, %v4103
  %v4112 = vadd.f32 %v4092, %v4107
  %v4113 = vmax.f32 %v4109, 0.0
  %v4114 = vmax.f32 %v4110, 0.0
  %v4115 = vmax.f32 %v4111, 0.0
  %v4116 = vmax.f32 %v4112, 0.0
  %v4117 = vld [vmem:[%s5] sm:$0xff]
  %v4118 = vld [vmem:[%s5 + $0x8] sm:$0xff]
  %v4119 = vld [vmem:[%s5 + $0x10] sm:$0x3]
  %v4121 = vsel %vm4016, %v4113, 0
  %v4124 = vsel %vm4016, %v4114, 0
  %v4127 = vsel %vm4016, %v4115, 0
  %v4130 = vsel %vm4016, %v4116, 0
  %v4133 = vsel %vm2916, %v4119, 0
  %4135 = vmatprep.subr.mxu0 0.0
  %4136 = vmatpush1.msra.mxu0 0.0
  %4137 = vmatprep.subr.mxu0 0.0
  %4138 = vmatpush1.msra.mxu0 0.0
  %4139 = vmatprep.subr.mxu0 0.0
  %4140 = vmatpush1.msra.mxu0 0.0
  %4141 = vmatprep.subr.mxu0 0.0
  %4142 = vmatpush1.msra.mxu0 0.0
  %4143 = vmatprep.subr.mxu0 0.0
  %4144 = vmatpush1.msra.mxu0 0.0
  %4145 = vmatprep.subr.mxu0 0.0
  %4146 = vmatpush1.msra.mxu0 0.0
  %4147 = vmatprep.subr.mxu0 0.0
  %4148 = vmatpush1.msra.mxu0 0.0
  %4149 = vmatprep.subr.mxu0 0.0
  %4150 = vmatpush1.msra.mxu0 0.0
  %4151 = vmatprep.subr.mxu0 0.0
  %4152 = vmatpush1.msra.mxu0 0.0
  %4153 = vmatprep.subr.mxu0 0.0
  %4154 = vmatpush1.msra.mxu0 0.0
  %4155 = vmatprep.subr.mxu0 0.0
  %4156 = vmatpush1.msra.mxu0 0.0
  %4157 = vmatprep.subr.mxu0 0.0
  %4158 = vmatpush1.msra.mxu0 0.0
  %4159 = vmatprep.subr.mxu0 0.0
  %4160 = vmatpush1.msra.mxu0 0.0
  %4161 = vmatprep.subr.mxu0 0.0
  %4162 = vmatpush1.msra.mxu0 %v4133
  %4163 = vmatprep.subr.mxu0 0.0
  %4164 = vmatpush1.msra.mxu0 %v4118
  %4165 = vmatprep.subr.mxu0 0.0
  %4166 = vmatpush1.msra.mxu0 %v4117
  %4167 = vmatprep.subr.mxu0 0.0
  %4168 = vmatpush2.msra.mxu0 0.0
  %4169 = vmatprep.subr.mxu0 0.0
  %4170 = vmatpush2.msra.mxu0 0.0
  %4171 = vmatprep.subr.mxu0 0.0
  %4172 = vmatpush2.msra.mxu0 0.0
  %4173 = vmatprep.subr.mxu0 0.0
  %4174 = vmatpush2.msra.mxu0 0.0
  %4175 = vmatprep.subr.mxu0 0.0
  %4176 = vmatpush2.msra.mxu0 0.0
  %4177 = vmatprep.subr.mxu0 0.0
  %4178 = vmatpush2.msra.mxu0 0.0
  %4179 = vmatprep.subr.mxu0 0.0
  %4180 = vmatpush2.msra.mxu0 0.0
  %4181 = vmatprep.subr.mxu0 0.0
  %4182 = vmatpush2.msra.mxu0 0.0
  %4183 = vmatprep.subr.mxu0 0.0
  %4184 = vmatpush2.msra.mxu0 0.0
  %4185 = vmatprep.subr.mxu0 0.0
  %4186 = vmatpush2.msra.mxu0 0.0
  %4187 = vmatprep.subr.mxu0 0.0
  %4188 = vmatpush2.msra.mxu0 0.0
  %4189 = vmatprep.subr.mxu0 0.0
  %4190 = vmatpush2.msra.mxu0 0.0
  %4191 = vmatprep.subr.mxu0 0.0
  %4192 = vmatpush2.msra.mxu0 0.0
  %4193 = vmatprep.subr.mxu0 0.0
  %4194 = vmatpush2.msra.mxu0 0.0
  %4195 = vmatprep.subr.mxu0 0.0
  %4196 = vmatpush2.msra.mxu0 0.0
  %4197 = vmatprep.subr.mxu0 0.0
  %4198 = vmatpush2.msra.mxu0 0.0
  %4199 = vmatprep.mubr.f32.mxu0 0.0
  %4200 = vmatmul.mubr.f32.gmra.mxu0 %v4121
  %v4201 = vpop.f32.mrf.mxu0
  %v4202 = vadd.f32 0.0, %v4201
  %v4203 = vpop.f32.mrf.mxu0
  %4204 = vmatprep.mubr.f32.mxu0 0.0
  %4205 = vmatmul.mubr.f32.gmra.mxu0 %v4124
  %v4206 = vpop.f32.mrf.mxu0
  %v4207 = vadd.f32 0.0, %v4206
  %v4208 = vpop.f32.mrf.mxu0
  %4209 = vmatprep.mubr.f32.mxu0 0.0
  %4210 = vmatmul.mubr.f32.gmra.mxu0 %v4127
  %v4211 = vpop.f32.mrf.mxu0
  %v4212 = vadd.f32 0.0, %v4211
  %v4213 = vpop.f32.mrf.mxu0
  %4214 = vmatprep.mubr.f32.mxu0 0.0
  %4215 = vmatmul.mubr.f32.gmra.mxu0 %v4130
  %v4216 = vpop.f32.mrf.mxu0
  %v4217 = vadd.f32 0.0, %v4216
  %v4218 = vpop.f32.mrf.mxu0
  %4219 = vdwg.mxu0
  %s4220 = scalar_lea.vmem %s5, 24
  %v4221 = vld [vmem:[%s4220] sm:$0xff]
  %v4222 = vld [vmem:[%s4220 + $0x8] sm:$0xff]
  %v4223 = vld [vmem:[%s4220 + $0x10] sm:$0x3]
  %v4225 = vsel %vm2916, %v4223, 0
  %4227 = vmatprep.subr.mxu0 0.0
  %4228 = vmatpush1.msra.mxu0 0.0
  %4229 = vmatprep.subr.mxu0 0.0
  %4230 = vmatpush1.msra.mxu0 0.0
  %4231 = vmatprep.subr.mxu0 0.0
  %4232 = vmatpush1.msra.mxu0 0.0
  %4233 = vmatprep.subr.mxu0 0.0
  %4234 = vmatpush1.msra.mxu0 0.0
  %4235 = vmatprep.subr.mxu0 0.0
  %4236 = vmatpush1.msra.mxu0 0.0
  %4237 = vmatprep.subr.mxu0 0.0
  %4238 = vmatpush1.msra.mxu0 0.0
  %4239 = vmatprep.subr.mxu0 0.0
  %4240 = vmatpush1.msra.mxu0 0.0
  %4241 = vmatprep.subr.mxu0 0.0
  %4242 = vmatpush1.msra.mxu0 0.0
  %4243 = vmatprep.subr.mxu0 0.0
  %4244 = vmatpush1.msra.mxu0 0.0
  %4245 = vmatprep.subr.mxu0 0.0
  %4246 = vmatpush1.msra.mxu0 0.0
  %4247 = vmatprep.subr.mxu0 0.0
  %4248 = vmatpush1.msra.mxu0 0.0
  %4249 = vmatprep.subr.mxu0 0.0
  %4250 = vmatpush1.msra.mxu0 0.0
  %4251 = vmatprep.subr.mxu0 0.0
  %4252 = vmatpush1.msra.mxu0 0.0
  %4253 = vmatprep.subr.mxu0 0.0
  %4254 = vmatpush1.msra.mxu0 %v4225
  %4255 = vmatprep.subr.mxu0 0.0
  %4256 = vmatpush1.msra.mxu0 %v4222
  %4257 = vmatprep.subr.mxu0 0.0
  %4258 = vmatpush1.msra.mxu0 %v4221
  %4259 = vmatprep.subr.mxu0 0.0
  %4260 = vmatpush2.msra.mxu0 0.0
  %4261 = vmatprep.subr.mxu0 0.0
  %4262 = vmatpush2.msra.mxu0 0.0
  %4263 = vmatprep.subr.mxu0 0.0
  %4264 = vmatpush2.msra.mxu0 0.0
  %4265 = vmatprep.subr.mxu0 0.0
  %4266 = vmatpush2.msra.mxu0 0.0
  %4267 = vmatprep.subr.mxu0 0.0
  %4268 = vmatpush2.msra.mxu0 0.0
  %4269 = vmatprep.subr.mxu0 0.0
  %4270 = vmatpush2.msra.mxu0 0.0
  %4271 = vmatprep.subr.mxu0 0.0
  %4272 = vmatpush2.msra.mxu0 0.0
  %4273 = vmatprep.subr.mxu0 0.0
  %4274 = vmatpush2.msra.mxu0 0.0
  %4275 = vmatprep.subr.mxu0 0.0
  %4276 = vmatpush2.msra.mxu0 0.0
  %4277 = vmatprep.subr.mxu0 0.0
  %4278 = vmatpush2.msra.mxu0 0.0
  %4279 = vmatprep.subr.mxu0 0.0
  %4280 = vmatpush2.msra.mxu0 0.0
  %4281 = vmatprep.subr.mxu0 0.0
  %4282 = vmatpush2.msra.mxu0 0.0
  %4283 = vmatprep.subr.mxu0 0.0
  %4284 = vmatpush2.msra.mxu0 0.0
  %4285 = vmatprep.subr.mxu0 0.0
  %4286 = vmatpush2.msra.mxu0 0.0
  %4287 = vmatprep.subr.mxu0 0.0
  %4288 = vmatpush2.msra.mxu0 0.0
  %4289 = vmatprep.subr.mxu0 0.0
  %4290 = vmatpush2.msra.mxu0 0.0
  %4291 = vmatprep.mubr.f32.mxu0 0.0
  %4292 = vmatmul.mubr.f32.gmra.mxu0 %v4121
  %v4293 = vpop.f32.mrf.mxu0
  %v4294 = vadd.f32 0.0, %v4293
  %v4295 = vpop.f32.mrf.mxu0
  %4296 = vmatprep.mubr.f32.mxu0 0.0
  %4297 = vmatmul.mubr.f32.gmra.mxu0 %v4124
  %v4298 = vpop.f32.mrf.mxu0
  %v4299 = vadd.f32 0.0, %v4298
  %v4300 = vpop.f32.mrf.mxu0
  %4301 = vmatprep.mubr.f32.mxu0 0.0
  %4302 = vmatmul.mubr.f32.gmra.mxu0 %v4127
  %v4303 = vpop.f32.mrf.mxu0
  %v4304 = vadd.f32 0.0, %v4303
  %v4305 = vpop.f32.mrf.mxu0
  %4306 = vmatprep.mubr.f32.mxu0 0.0
  %4307 = vmatmul.mubr.f32.gmra.mxu0 %v4130
  %v4308 = vpop.f32.mrf.mxu0
  %v4309 = vadd.f32 0.0, %v4308
  %v4310 = vpop.f32.mrf.mxu0
  %4311 = vdwg.mxu0
  %s4312 = scalar_lea.vmem %s5, 48
  %v4313 = vld [vmem:[%s4312] sm:$0xff]
  %v4314 = vld [vmem:[%s4312 + $0x8] sm:$0xff]
  %v4315 = vld [vmem:[%s4312 + $0x10] sm:$0x3]
  %v4317 = vsel %vm2916, %v4315, 0
  %4319 = vmatprep.subr.mxu0 0.0
  %4320 = vmatpush1.msra.mxu0 0.0
  %4321 = vmatprep.subr.mxu0 0.0
  %4322 = vmatpush1.msra.mxu0 0.0
  %4323 = vmatprep.subr.mxu0 0.0
  %4324 = vmatpush1.msra.mxu0 0.0
  %4325 = vmatprep.subr.mxu0 0.0
  %4326 = vmatpush1.msra.mxu0 0.0
  %4327 = vmatprep.subr.mxu0 0.0
  %4328 = vmatpush1.msra.mxu0 0.0
  %4329 = vmatprep.subr.mxu0 0.0
  %4330 = vmatpush1.msra.mxu0 0.0
  %4331 = vmatprep.subr.mxu0 0.0
  %4332 = vmatpush1.msra.mxu0 0.0
  %4333 = vmatprep.subr.mxu0 0.0
  %4334 = vmatpush1.msra.mxu0 0.0
  %4335 = vmatprep.subr.mxu0 0.0
  %4336 = vmatpush1.msra.mxu0 0.0
  %4337 = vmatprep.subr.mxu0 0.0
  %4338 = vmatpush1.msra.mxu0 0.0
  %4339 = vmatprep.subr.mxu0 0.0
  %4340 = vmatpush1.msra.mxu0 0.0
  %4341 = vmatprep.subr.mxu0 0.0
  %4342 = vmatpush1.msra.mxu0 0.0
  %4343 = vmatprep.subr.mxu0 0.0
  %4344 = vmatpush1.msra.mxu0 0.0
  %4345 = vmatprep.subr.mxu0 0.0
  %4346 = vmatpush1.msra.mxu0 %v4317
  %4347 = vmatprep.subr.mxu0 0.0
  %4348 = vmatpush1.msra.mxu0 %v4314
  %4349 = vmatprep.subr.mxu0 0.0
  %4350 = vmatpush1.msra.mxu0 %v4313
  %4351 = vmatprep.subr.mxu0 0.0
  %4352 = vmatpush2.msra.mxu0 0.0
  %4353 = vmatprep.subr.mxu0 0.0
  %4354 = vmatpush2.msra.mxu0 0.0
  %4355 = vmatprep.subr.mxu0 0.0
  %4356 = vmatpush2.msra.mxu0 0.0
  %4357 = vmatprep.subr.mxu0 0.0
  %4358 = vmatpush2.msra.mxu0 0.0
  %4359 = vmatprep.subr.mxu0 0.0
  %4360 = vmatpush2.msra.mxu0 0.0
  %4361 = vmatprep.subr.mxu0 0.0
  %4362 = vmatpush2.msra.mxu0 0.0
  %4363 = vmatprep.subr.mxu0 0.0
  %4364 = vmatpush2.msra.mxu0 0.0
  %4365 = vmatprep.subr.mxu0 0.0
  %4366 = vmatpush2.msra.mxu0 0.0
  %4367 = vmatprep.subr.mxu0 0.0
  %4368 = vmatpush2.msra.mxu0 0.0
  %4369 = vmatprep.subr.mxu0 0.0
  %4370 = vmatpush2.msra.mxu0 0.0
  %4371 = vmatprep.subr.mxu0 0.0
  %4372 = vmatpush2.msra.mxu0 0.0
  %4373 = vmatprep.subr.mxu0 0.0
  %4374 = vmatpush2.msra.mxu0 0.0
  %4375 = vmatprep.subr.mxu0 0.0
  %4376 = vmatpush2.msra.mxu0 0.0
  %4377 = vmatprep.subr.mxu0 0.0
  %4378 = vmatpush2.msra.mxu0 0.0
  %4379 = vmatprep.subr.mxu0 0.0
  %4380 = vmatpush2.msra.mxu0 0.0
  %4381 = vmatprep.subr.mxu0 0.0
  %4382 = vmatpush2.msra.mxu0 0.0
  %4383 = vmatprep.mubr.f32.mxu0 0.0
  %4384 = vmatmul.mubr.f32.gmra.mxu0 %v4121
  %v4385 = vpop.f32.mrf.mxu0
  %v4386 = vadd.f32 0.0, %v4385
  %v4387 = vpop.f32.mrf.mxu0
  %4388 = vmatprep.mubr.f32.mxu0 0.0
  %4389 = vmatmul.mubr.f32.gmra.mxu0 %v4124
  %v4390 = vpop.f32.mrf.mxu0
  %v4391 = vadd.f32 0.0, %v4390
  %v4392 = vpop.f32.mrf.mxu0
  %4393 = vmatprep.mubr.f32.mxu0 0.0
  %4394 = vmatmul.mubr.f32.gmra.mxu0 %v4127
  %v4395 = vpop.f32.mrf.mxu0
  %v4396 = vadd.f32 0.0, %v4395
  %v4397 = vpop.f32.mrf.mxu0
  %4398 = vmatprep.mubr.f32.mxu0 0.0
  %4399 = vmatmul.mubr.f32.gmra.mxu0 %v4130
  %v4400 = vpop.f32.mrf.mxu0
  %v4401 = vadd.f32 0.0, %v4400
  %v4402 = vpop.f32.mrf.mxu0
  %4403 = vdwg.mxu0
  %s4404 = scalar_lea.vmem %s5, 72
  %v4405 = vld [vmem:[%s4404] sm:$0xff]
  %v4406 = vld [vmem:[%s4404 + $0x8] sm:$0xff]
  %v4407 = vld [vmem:[%s4404 + $0x10] sm:$0x3]
  %v4409 = vsel %vm2916, %v4407, 0
  %4411 = vmatprep.subr.mxu0 0.0
  %4412 = vmatpush1.msra.mxu0 0.0
  %4413 = vmatprep.subr.mxu0 0.0
  %4414 = vmatpush1.msra.mxu0 0.0
  %4415 = vmatprep.subr.mxu0 0.0
  %4416 = vmatpush1.msra.mxu0 0.0
  %4417 = vmatprep.subr.mxu0 0.0
  %4418 = vmatpush1.msra.mxu0 0.0
  %4419 = vmatprep.subr.mxu0 0.0
  %4420 = vmatpush1.msra.mxu0 0.0
  %4421 = vmatprep.subr.mxu0 0.0
  %4422 = vmatpush1.msra.mxu0 0.0
  %4423 = vmatprep.subr.mxu0 0.0
  %4424 = vmatpush1.msra.mxu0 0.0
  %4425 = vmatprep.subr.mxu0 0.0
  %4426 = vmatpush1.msra.mxu0 0.0
  %4427 = vmatprep.subr.mxu0 0.0
  %4428 = vmatpush1.msra.mxu0 0.0
  %4429 = vmatprep.subr.mxu0 0.0
  %4430 = vmatpush1.msra.mxu0 0.0
  %4431 = vmatprep.subr.mxu0 0.0
  %4432 = vmatpush1.msra.mxu0 0.0
  %4433 = vmatprep.subr.mxu0 0.0
  %4434 = vmatpush1.msra.mxu0 0.0
  %4435 = vmatprep.subr.mxu0 0.0
  %4436 = vmatpush1.msra.mxu0 0.0
  %4437 = vmatprep.subr.mxu0 0.0
  %4438 = vmatpush1.msra.mxu0 %v4409
  %4439 = vmatprep.subr.mxu0 0.0
  %4440 = vmatpush1.msra.mxu0 %v4406
  %4441 = vmatprep.subr.mxu0 0.0
  %4442 = vmatpush1.msra.mxu0 %v4405
  %4443 = vmatprep.subr.mxu0 0.0
  %4444 = vmatpush2.msra.mxu0 0.0
  %4445 = vmatprep.subr.mxu0 0.0
  %4446 = vmatpush2.msra.mxu0 0.0
  %4447 = vmatprep.subr.mxu0 0.0
  %4448 = vmatpush2.msra.mxu0 0.0
  %4449 = vmatprep.subr.mxu0 0.0
  %4450 = vmatpush2.msra.mxu0 0.0
  %4451 = vmatprep.subr.mxu0 0.0
  %4452 = vmatpush2.msra.mxu0 0.0
  %4453 = vmatprep.subr.mxu0 0.0
  %4454 = vmatpush2.msra.mxu0 0.0
  %4455 = vmatprep.subr.mxu0 0.0
  %4456 = vmatpush2.msra.mxu0 0.0
  %4457 = vmatprep.subr.mxu0 0.0
  %4458 = vmatpush2.msra.mxu0 0.0
  %4459 = vmatprep.subr.mxu0 0.0
  %4460 = vmatpush2.msra.mxu0 0.0
  %4461 = vmatprep.subr.mxu0 0.0
  %4462 = vmatpush2.msra.mxu0 0.0
  %4463 = vmatprep.subr.mxu0 0.0
  %4464 = vmatpush2.msra.mxu0 0.0
  %4465 = vmatprep.subr.mxu0 0.0
  %4466 = vmatpush2.msra.mxu0 0.0
  %4467 = vmatprep.subr.mxu0 0.0
  %4468 = vmatpush2.msra.mxu0 0.0
  %4469 = vmatprep.subr.mxu0 0.0
  %4470 = vmatpush2.msra.mxu0 0.0
  %4471 = vmatprep.subr.mxu0 0.0
  %4472 = vmatpush2.msra.mxu0 0.0
  %4473 = vmatprep.subr.mxu0 0.0
  %4474 = vmatpush2.msra.mxu0 0.0
  %4475 = vmatprep.mubr.f32.mxu0 0.0
  %4476 = vmatmul.mubr.f32.gmra.mxu0 %v4121
  %v4477 = vpop.f32.mrf.mxu0
  %v4478 = vadd.f32 0.0, %v4477
  %v4479 = vpop.f32.mrf.mxu0
  %4480 = vmatprep.mubr.f32.mxu0 0.0
  %4481 = vmatmul.mubr.f32.gmra.mxu0 %v4124
  %v4482 = vpop.f32.mrf.mxu0
  %v4483 = vadd.f32 0.0, %v4482
  %v4484 = vpop.f32.mrf.mxu0
  %4485 = vmatprep.mubr.f32.mxu0 0.0
  %4486 = vmatmul.mubr.f32.gmra.mxu0 %v4127
  %v4487 = vpop.f32.mrf.mxu0
  %v4488 = vadd.f32 0.0, %v4487
  %v4489 = vpop.f32.mrf.mxu0
  %4490 = vmatprep.mubr.f32.mxu0 0.0
  %4491 = vmatmul.mubr.f32.gmra.mxu0 %v4130
  %v4492 = vpop.f32.mrf.mxu0
  %v4493 = vadd.f32 0.0, %v4492
  %v4494 = vpop.f32.mrf.mxu0
  %4495 = vdwg.mxu0
  %s4496 = scalar_lea.vmem %s5, 96
  %v4497 = vld [vmem:[%s4496] sm:$0xff]
  %v4498 = vld [vmem:[%s4496 + $0x8] sm:$0xff]
  %v4499 = vld [vmem:[%s4496 + $0x10] sm:$0x3]
  %v4501 = vsel %vm2916, %v4499, 0
  %4503 = vmatprep.subr.mxu0 0.0
  %4504 = vmatpush1.msra.mxu0 0.0
  %4505 = vmatprep.subr.mxu0 0.0
  %4506 = vmatpush1.msra.mxu0 0.0
  %4507 = vmatprep.subr.mxu0 0.0
  %4508 = vmatpush1.msra.mxu0 0.0
  %4509 = vmatprep.subr.mxu0 0.0
  %4510 = vmatpush1.msra.mxu0 0.0
  %4511 = vmatprep.subr.mxu0 0.0
  %4512 = vmatpush1.msra.mxu0 0.0
  %4513 = vmatprep.subr.mxu0 0.0
  %4514 = vmatpush1.msra.mxu0 0.0
  %4515 = vmatprep.subr.mxu0 0.0
  %4516 = vmatpush1.msra.mxu0 0.0
  %4517 = vmatprep.subr.mxu0 0.0
  %4518 = vmatpush1.msra.mxu0 0.0
  %4519 = vmatprep.subr.mxu0 0.0
  %4520 = vmatpush1.msra.mxu0 0.0
  %4521 = vmatprep.subr.mxu0 0.0
  %4522 = vmatpush1.msra.mxu0 0.0
  %4523 = vmatprep.subr.mxu0 0.0
  %4524 = vmatpush1.msra.mxu0 0.0
  %4525 = vmatprep.subr.mxu0 0.0
  %4526 = vmatpush1.msra.mxu0 0.0
  %4527 = vmatprep.subr.mxu0 0.0
  %4528 = vmatpush1.msra.mxu0 0.0
  %4529 = vmatprep.subr.mxu0 0.0
  %4530 = vmatpush1.msra.mxu0 %v4501
  %4531 = vmatprep.subr.mxu0 0.0
  %4532 = vmatpush1.msra.mxu0 %v4498
  %4533 = vmatprep.subr.mxu0 0.0
  %4534 = vmatpush1.msra.mxu0 %v4497
  %4535 = vmatprep.subr.mxu0 0.0
  %4536 = vmatpush2.msra.mxu0 0.0
  %4537 = vmatprep.subr.mxu0 0.0
  %4538 = vmatpush2.msra.mxu0 0.0
  %4539 = vmatprep.subr.mxu0 0.0
  %4540 = vmatpush2.msra.mxu0 0.0
  %4541 = vmatprep.subr.mxu0 0.0
  %4542 = vmatpush2.msra.mxu0 0.0
  %4543 = vmatprep.subr.mxu0 0.0
  %4544 = vmatpush2.msra.mxu0 0.0
  %4545 = vmatprep.subr.mxu0 0.0
  %4546 = vmatpush2.msra.mxu0 0.0
  %4547 = vmatprep.subr.mxu0 0.0
  %4548 = vmatpush2.msra.mxu0 0.0
  %4549 = vmatprep.subr.mxu0 0.0
  %4550 = vmatpush2.msra.mxu0 0.0
  %4551 = vmatprep.subr.mxu0 0.0
  %4552 = vmatpush2.msra.mxu0 0.0
  %4553 = vmatprep.subr.mxu0 0.0
  %4554 = vmatpush2.msra.mxu0 0.0
  %4555 = vmatprep.subr.mxu0 0.0
  %4556 = vmatpush2.msra.mxu0 0.0
  %4557 = vmatprep.subr.mxu0 0.0
  %4558 = vmatpush2.msra.mxu0 0.0
  %4559 = vmatprep.subr.mxu0 0.0
  %4560 = vmatpush2.msra.mxu0 0.0
  %4561 = vmatprep.subr.mxu0 0.0
  %4562 = vmatpush2.msra.mxu0 0.0
  %4563 = vmatprep.subr.mxu0 0.0
  %4564 = vmatpush2.msra.mxu0 0.0
  %4565 = vmatprep.subr.mxu0 0.0
  %4566 = vmatpush2.msra.mxu0 0.0
  %4567 = vmatprep.mubr.f32.mxu0 0.0
  %4568 = vmatmul.mubr.f32.gmra.mxu0 %v4121
  %v4569 = vpop.f32.mrf.mxu0
  %v4570 = vadd.f32 0.0, %v4569
  %v4571 = vpop.f32.mrf.mxu0
  %4572 = vmatprep.mubr.f32.mxu0 0.0
  %4573 = vmatmul.mubr.f32.gmra.mxu0 %v4124
  %v4574 = vpop.f32.mrf.mxu0
  %v4575 = vadd.f32 0.0, %v4574
  %v4576 = vpop.f32.mrf.mxu0
  %4577 = vmatprep.mubr.f32.mxu0 0.0
  %4578 = vmatmul.mubr.f32.gmra.mxu0 %v4127
  %v4579 = vpop.f32.mrf.mxu0
  %v4580 = vadd.f32 0.0, %v4579
  %v4581 = vpop.f32.mrf.mxu0
  %4582 = vmatprep.mubr.f32.mxu0 0.0
  %4583 = vmatmul.mubr.f32.gmra.mxu0 %v4130
  %v4584 = vpop.f32.mrf.mxu0
  %v4585 = vadd.f32 0.0, %v4584
  %v4586 = vpop.f32.mrf.mxu0
  %4587 = vdwg.mxu0
  %s4588 = scalar_lea.vmem %s5, 120
  %v4589 = vld [vmem:[%s4588] sm:$0xff]
  %v4590 = vld [vmem:[%s4588 + $0x8] sm:$0xff]
  %v4591 = vld [vmem:[%s4588 + $0x10] sm:$0x3]
  %v4593 = vsel %vm2916, %v4591, 0
  %4595 = vmatprep.subr.mxu0 0.0
  %4596 = vmatpush1.msra.mxu0 0.0
  %4597 = vmatprep.subr.mxu0 0.0
  %4598 = vmatpush1.msra.mxu0 0.0
  %4599 = vmatprep.subr.mxu0 0.0
  %4600 = vmatpush1.msra.mxu0 0.0
  %4601 = vmatprep.subr.mxu0 0.0
  %4602 = vmatpush1.msra.mxu0 0.0
  %4603 = vmatprep.subr.mxu0 0.0
  %4604 = vmatpush1.msra.mxu0 0.0
  %4605 = vmatprep.subr.mxu0 0.0
  %4606 = vmatpush1.msra.mxu0 0.0
  %4607 = vmatprep.subr.mxu0 0.0
  %4608 = vmatpush1.msra.mxu0 0.0
  %4609 = vmatprep.subr.mxu0 0.0
  %4610 = vmatpush1.msra.mxu0 0.0
  %4611 = vmatprep.subr.mxu0 0.0
  %4612 = vmatpush1.msra.mxu0 0.0
  %4613 = vmatprep.subr.mxu0 0.0
  %4614 = vmatpush1.msra.mxu0 0.0
  %4615 = vmatprep.subr.mxu0 0.0
  %4616 = vmatpush1.msra.mxu0 0.0
  %4617 = vmatprep.subr.mxu0 0.0
  %4618 = vmatpush1.msra.mxu0 0.0
  %4619 = vmatprep.subr.mxu0 0.0
  %4620 = vmatpush1.msra.mxu0 0.0
  %4621 = vmatprep.subr.mxu0 0.0
  %4622 = vmatpush1.msra.mxu0 %v4593
  %4623 = vmatprep.subr.mxu0 0.0
  %4624 = vmatpush1.msra.mxu0 %v4590
  %4625 = vmatprep.subr.mxu0 0.0
  %4626 = vmatpush1.msra.mxu0 %v4589
  %4627 = vmatprep.subr.mxu0 0.0
  %4628 = vmatpush2.msra.mxu0 0.0
  %4629 = vmatprep.subr.mxu0 0.0
  %4630 = vmatpush2.msra.mxu0 0.0
  %4631 = vmatprep.subr.mxu0 0.0
  %4632 = vmatpush2.msra.mxu0 0.0
  %4633 = vmatprep.subr.mxu0 0.0
  %4634 = vmatpush2.msra.mxu0 0.0
  %4635 = vmatprep.subr.mxu0 0.0
  %4636 = vmatpush2.msra.mxu0 0.0
  %4637 = vmatprep.subr.mxu0 0.0
  %4638 = vmatpush2.msra.mxu0 0.0
  %4639 = vmatprep.subr.mxu0 0.0
  %4640 = vmatpush2.msra.mxu0 0.0
  %4641 = vmatprep.subr.mxu0 0.0
  %4642 = vmatpush2.msra.mxu0 0.0
  %4643 = vmatprep.subr.mxu0 0.0
  %4644 = vmatpush2.msra.mxu0 0.0
  %4645 = vmatprep.subr.mxu0 0.0
  %4646 = vmatpush2.msra.mxu0 0.0
  %4647 = vmatprep.subr.mxu0 0.0
  %4648 = vmatpush2.msra.mxu0 0.0
  %4649 = vmatprep.subr.mxu0 0.0
  %4650 = vmatpush2.msra.mxu0 0.0
  %4651 = vmatprep.subr.mxu0 0.0
  %4652 = vmatpush2.msra.mxu0 0.0
  %4653 = vmatprep.subr.mxu0 0.0
  %4654 = vmatpush2.msra.mxu0 0.0
  %4655 = vmatprep.subr.mxu0 0.0
  %4656 = vmatpush2.msra.mxu0 0.0
  %4657 = vmatprep.subr.mxu0 0.0
  %4658 = vmatpush2.msra.mxu0 0.0
  %4659 = vmatprep.mubr.f32.mxu0 0.0
  %4660 = vmatmul.mubr.f32.gmra.mxu0 %v4121
  %v4661 = vpop.f32.mrf.mxu0
  %v4662 = vadd.f32 0.0, %v4661
  %v4663 = vpop.f32.mrf.mxu0
  %4664 = vmatprep.mubr.f32.mxu0 0.0
  %4665 = vmatmul.mubr.f32.gmra.mxu0 %v4124
  %v4666 = vpop.f32.mrf.mxu0
  %v4667 = vadd.f32 0.0, %v4666
  %v4668 = vpop.f32.mrf.mxu0
  %4669 = vmatprep.mubr.f32.mxu0 0.0
  %4670 = vmatmul.mubr.f32.gmra.mxu0 %v4127
  %v4671 = vpop.f32.mrf.mxu0
  %v4672 = vadd.f32 0.0, %v4671
  %v4673 = vpop.f32.mrf.mxu0
  %4674 = vmatprep.mubr.f32.mxu0 0.0
  %4675 = vmatmul.mubr.f32.gmra.mxu0 %v4130
  %v4676 = vpop.f32.mrf.mxu0
  %v4677 = vadd.f32 0.0, %v4676
  %v4678 = vpop.f32.mrf.mxu0
  %4679 = vdwg.mxu0
  %s4680 = scalar_lea.vmem %s5, 144
  %v4681 = vld [vmem:[%s4680] sm:$0xff]
  %v4682 = vld [vmem:[%s4680 + $0x8] sm:$0xff]
  %v4683 = vld [vmem:[%s4680 + $0x10] sm:$0x3]
  %v4685 = vsel %vm2916, %v4683, 0
  %4687 = vmatprep.subr.mxu0 0.0
  %4688 = vmatpush1.msra.mxu0 0.0
  %4689 = vmatprep.subr.mxu0 0.0
  %4690 = vmatpush1.msra.mxu0 0.0
  %4691 = vmatprep.subr.mxu0 0.0
  %4692 = vmatpush1.msra.mxu0 0.0
  %4693 = vmatprep.subr.mxu0 0.0
  %4694 = vmatpush1.msra.mxu0 0.0
  %4695 = vmatprep.subr.mxu0 0.0
  %4696 = vmatpush1.msra.mxu0 0.0
  %4697 = vmatprep.subr.mxu0 0.0
  %4698 = vmatpush1.msra.mxu0 0.0
  %4699 = vmatprep.subr.mxu0 0.0
  %4700 = vmatpush1.msra.mxu0 0.0
  %4701 = vmatprep.subr.mxu0 0.0
  %4702 = vmatpush1.msra.mxu0 0.0
  %4703 = vmatprep.subr.mxu0 0.0
  %4704 = vmatpush1.msra.mxu0 0.0
  %4705 = vmatprep.subr.mxu0 0.0
  %4706 = vmatpush1.msra.mxu0 0.0
  %4707 = vmatprep.subr.mxu0 0.0
  %4708 = vmatpush1.msra.mxu0 0.0
  %4709 = vmatprep.subr.mxu0 0.0
  %4710 = vmatpush1.msra.mxu0 0.0
  %4711 = vmatprep.subr.mxu0 0.0
  %4712 = vmatpush1.msra.mxu0 0.0
  %4713 = vmatprep.subr.mxu0 0.0
  %4714 = vmatpush1.msra.mxu0 %v4685
  %4715 = vmatprep.subr.mxu0 0.0
  %4716 = vmatpush1.msra.mxu0 %v4682
  %4717 = vmatprep.subr.mxu0 0.0
  %4718 = vmatpush1.msra.mxu0 %v4681
  %4719 = vmatprep.subr.mxu0 0.0
  %4720 = vmatpush2.msra.mxu0 0.0
  %4721 = vmatprep.subr.mxu0 0.0
  %4722 = vmatpush2.msra.mxu0 0.0
  %4723 = vmatprep.subr.mxu0 0.0
  %4724 = vmatpush2.msra.mxu0 0.0
  %4725 = vmatprep.subr.mxu0 0.0
  %4726 = vmatpush2.msra.mxu0 0.0
  %4727 = vmatprep.subr.mxu0 0.0
  %4728 = vmatpush2.msra.mxu0 0.0
  %4729 = vmatprep.subr.mxu0 0.0
  %4730 = vmatpush2.msra.mxu0 0.0
  %4731 = vmatprep.subr.mxu0 0.0
  %4732 = vmatpush2.msra.mxu0 0.0
  %4733 = vmatprep.subr.mxu0 0.0
  %4734 = vmatpush2.msra.mxu0 0.0
  %4735 = vmatprep.subr.mxu0 0.0
  %4736 = vmatpush2.msra.mxu0 0.0
  %4737 = vmatprep.subr.mxu0 0.0
  %4738 = vmatpush2.msra.mxu0 0.0
  %4739 = vmatprep.subr.mxu0 0.0
  %4740 = vmatpush2.msra.mxu0 0.0
  %4741 = vmatprep.subr.mxu0 0.0
  %4742 = vmatpush2.msra.mxu0 0.0
  %4743 = vmatprep.subr.mxu0 0.0
  %4744 = vmatpush2.msra.mxu0 0.0
  %4745 = vmatprep.subr.mxu0 0.0
  %4746 = vmatpush2.msra.mxu0 0.0
  %4747 = vmatprep.subr.mxu0 0.0
  %4748 = vmatpush2.msra.mxu0 0.0
  %4749 = vmatprep.subr.mxu0 0.0
  %4750 = vmatpush2.msra.mxu0 0.0
  %4751 = vmatprep.mubr.f32.mxu0 0.0
  %4752 = vmatmul.mubr.f32.gmra.mxu0 %v4121
  %v4753 = vpop.f32.mrf.mxu0
  %v4754 = vadd.f32 0.0, %v4753
  %v4755 = vpop.f32.mrf.mxu0
  %4756 = vmatprep.mubr.f32.mxu0 0.0
  %4757 = vmatmul.mubr.f32.gmra.mxu0 %v4124
  %v4758 = vpop.f32.mrf.mxu0
  %v4759 = vadd.f32 0.0, %v4758
  %v4760 = vpop.f32.mrf.mxu0
  %4761 = vmatprep.mubr.f32.mxu0 0.0
  %4762 = vmatmul.mubr.f32.gmra.mxu0 %v4127
  %v4763 = vpop.f32.mrf.mxu0
  %v4764 = vadd.f32 0.0, %v4763
  %v4765 = vpop.f32.mrf.mxu0
  %4766 = vmatprep.mubr.f32.mxu0 0.0
  %4767 = vmatmul.mubr.f32.gmra.mxu0 %v4130
  %v4768 = vpop.f32.mrf.mxu0
  %v4769 = vadd.f32 0.0, %v4768
  %v4770 = vpop.f32.mrf.mxu0
  %4771 = vdwg.mxu0
  %s4772 = scalar_lea.vmem %s5, 168
  %v4773 = vld [vmem:[%s4772] sm:$0xff]
  %v4774 = vld [vmem:[%s4772 + $0x8] sm:$0xff]
  %v4775 = vld [vmem:[%s4772 + $0x10] sm:$0x3]
  %v4777 = vsel %vm2916, %v4775, 0
  %4779 = vmatprep.subr.mxu0 0.0
  %4780 = vmatpush1.msra.mxu0 0.0
  %4781 = vmatprep.subr.mxu0 0.0
  %4782 = vmatpush1.msra.mxu0 0.0
  %4783 = vmatprep.subr.mxu0 0.0
  %4784 = vmatpush1.msra.mxu0 0.0
  %4785 = vmatprep.subr.mxu0 0.0
  %4786 = vmatpush1.msra.mxu0 0.0
  %4787 = vmatprep.subr.mxu0 0.0
  %4788 = vmatpush1.msra.mxu0 0.0
  %4789 = vmatprep.subr.mxu0 0.0
  %4790 = vmatpush1.msra.mxu0 0.0
  %4791 = vmatprep.subr.mxu0 0.0
  %4792 = vmatpush1.msra.mxu0 0.0
  %4793 = vmatprep.subr.mxu0 0.0
  %4794 = vmatpush1.msra.mxu0 0.0
  %4795 = vmatprep.subr.mxu0 0.0
  %4796 = vmatpush1.msra.mxu0 0.0
  %4797 = vmatprep.subr.mxu0 0.0
  %4798 = vmatpush1.msra.mxu0 0.0
  %4799 = vmatprep.subr.mxu0 0.0
  %4800 = vmatpush1.msra.mxu0 0.0
  %4801 = vmatprep.subr.mxu0 0.0
  %4802 = vmatpush1.msra.mxu0 0.0
  %4803 = vmatprep.subr.mxu0 0.0
  %4804 = vmatpush1.msra.mxu0 0.0
  %4805 = vmatprep.subr.mxu0 0.0
  %4806 = vmatpush1.msra.mxu0 %v4777
  %4807 = vmatprep.subr.mxu0 0.0
  %4808 = vmatpush1.msra.mxu0 %v4774
  %4809 = vmatprep.subr.mxu0 0.0
  %4810 = vmatpush1.msra.mxu0 %v4773
  %4811 = vmatprep.subr.mxu0 0.0
  %4812 = vmatpush2.msra.mxu0 0.0
  %4813 = vmatprep.subr.mxu0 0.0
  %4814 = vmatpush2.msra.mxu0 0.0
  %4815 = vmatprep.subr.mxu0 0.0
  %4816 = vmatpush2.msra.mxu0 0.0
  %4817 = vmatprep.subr.mxu0 0.0
  %4818 = vmatpush2.msra.mxu0 0.0
  %4819 = vmatprep.subr.mxu0 0.0
  %4820 = vmatpush2.msra.mxu0 0.0
  %4821 = vmatprep.subr.mxu0 0.0
  %4822 = vmatpush2.msra.mxu0 0.0
  %4823 = vmatprep.subr.mxu0 0.0
  %4824 = vmatpush2.msra.mxu0 0.0
  %4825 = vmatprep.subr.mxu0 0.0
  %4826 = vmatpush2.msra.mxu0 0.0
  %4827 = vmatprep.subr.mxu0 0.0
  %4828 = vmatpush2.msra.mxu0 0.0
  %4829 = vmatprep.subr.mxu0 0.0
  %4830 = vmatpush2.msra.mxu0 0.0
  %4831 = vmatprep.subr.mxu0 0.0
  %4832 = vmatpush2.msra.mxu0 0.0
  %4833 = vmatprep.subr.mxu0 0.0
  %4834 = vmatpush2.msra.mxu0 0.0
  %4835 = vmatprep.subr.mxu0 0.0
  %4836 = vmatpush2.msra.mxu0 0.0
  %4837 = vmatprep.subr.mxu0 0.0
  %4838 = vmatpush2.msra.mxu0 0.0
  %4839 = vmatprep.subr.mxu0 0.0
  %4840 = vmatpush2.msra.mxu0 0.0
  %4841 = vmatprep.subr.mxu0 0.0
  %4842 = vmatpush2.msra.mxu0 0.0
  %4843 = vmatprep.mubr.f32.mxu0 0.0
  %4844 = vmatmul.mubr.f32.gmra.mxu0 %v4121
  %v4845 = vpop.f32.mrf.mxu0
  %v4846 = vadd.f32 0.0, %v4845
  %v4847 = vpop.f32.mrf.mxu0
  %4848 = vmatprep.mubr.f32.mxu0 0.0
  %4849 = vmatmul.mubr.f32.gmra.mxu0 %v4124
  %v4850 = vpop.f32.mrf.mxu0
  %v4851 = vadd.f32 0.0, %v4850
  %v4852 = vpop.f32.mrf.mxu0
  %4853 = vmatprep.mubr.f32.mxu0 0.0
  %4854 = vmatmul.mubr.f32.gmra.mxu0 %v4127
  %v4855 = vpop.f32.mrf.mxu0
  %v4856 = vadd.f32 0.0, %v4855
  %v4857 = vpop.f32.mrf.mxu0
  %4858 = vmatprep.mubr.f32.mxu0 0.0
  %4859 = vmatmul.mubr.f32.gmra.mxu0 %v4130
  %v4860 = vpop.f32.mrf.mxu0
  %v4861 = vadd.f32 0.0, %v4860
  %v4862 = vpop.f32.mrf.mxu0
  %4863 = vdwg.mxu0
  %s4864 = scalar_lea.vmem %s5, 192
  %v4865 = vld [vmem:[%s4864] sm:$0xff]
  %v4866 = vld [vmem:[%s4864 + $0x8] sm:$0xff]
  %v4867 = vld [vmem:[%s4864 + $0x10] sm:$0x3]
  %v4869 = vsel %vm2916, %v4867, 0
  %4871 = vmatprep.subr.mxu0 0.0
  %4872 = vmatpush1.msra.mxu0 0.0
  %4873 = vmatprep.subr.mxu0 0.0
  %4874 = vmatpush1.msra.mxu0 0.0
  %4875 = vmatprep.subr.mxu0 0.0
  %4876 = vmatpush1.msra.mxu0 0.0
  %4877 = vmatprep.subr.mxu0 0.0
  %4878 = vmatpush1.msra.mxu0 0.0
  %4879 = vmatprep.subr.mxu0 0.0
  %4880 = vmatpush1.msra.mxu0 0.0
  %4881 = vmatprep.subr.mxu0 0.0
  %4882 = vmatpush1.msra.mxu0 0.0
  %4883 = vmatprep.subr.mxu0 0.0
  %4884 = vmatpush1.msra.mxu0 0.0
  %4885 = vmatprep.subr.mxu0 0.0
  %4886 = vmatpush1.msra.mxu0 0.0
  %4887 = vmatprep.subr.mxu0 0.0
  %4888 = vmatpush1.msra.mxu0 0.0
  %4889 = vmatprep.subr.mxu0 0.0
  %4890 = vmatpush1.msra.mxu0 0.0
  %4891 = vmatprep.subr.mxu0 0.0
  %4892 = vmatpush1.msra.mxu0 0.0
  %4893 = vmatprep.subr.mxu0 0.0
  %4894 = vmatpush1.msra.mxu0 0.0
  %4895 = vmatprep.subr.mxu0 0.0
  %4896 = vmatpush1.msra.mxu0 0.0
  %4897 = vmatprep.subr.mxu0 0.0
  %4898 = vmatpush1.msra.mxu0 %v4869
  %4899 = vmatprep.subr.mxu0 0.0
  %4900 = vmatpush1.msra.mxu0 %v4866
  %4901 = vmatprep.subr.mxu0 0.0
  %4902 = vmatpush1.msra.mxu0 %v4865
  %4903 = vmatprep.subr.mxu0 0.0
  %4904 = vmatpush2.msra.mxu0 0.0
  %4905 = vmatprep.subr.mxu0 0.0
  %4906 = vmatpush2.msra.mxu0 0.0
  %4907 = vmatprep.subr.mxu0 0.0
  %4908 = vmatpush2.msra.mxu0 0.0
  %4909 = vmatprep.subr.mxu0 0.0
  %4910 = vmatpush2.msra.mxu0 0.0
  %4911 = vmatprep.subr.mxu0 0.0
  %4912 = vmatpush2.msra.mxu0 0.0
  %4913 = vmatprep.subr.mxu0 0.0
  %4914 = vmatpush2.msra.mxu0 0.0
  %4915 = vmatprep.subr.mxu0 0.0
  %4916 = vmatpush2.msra.mxu0 0.0
  %4917 = vmatprep.subr.mxu0 0.0
  %4918 = vmatpush2.msra.mxu0 0.0
  %4919 = vmatprep.subr.mxu0 0.0
  %4920 = vmatpush2.msra.mxu0 0.0
  %4921 = vmatprep.subr.mxu0 0.0
  %4922 = vmatpush2.msra.mxu0 0.0
  %4923 = vmatprep.subr.mxu0 0.0
  %4924 = vmatpush2.msra.mxu0 0.0
  %4925 = vmatprep.subr.mxu0 0.0
  %4926 = vmatpush2.msra.mxu0 0.0
  %4927 = vmatprep.subr.mxu0 0.0
  %4928 = vmatpush2.msra.mxu0 0.0
  %4929 = vmatprep.subr.mxu0 0.0
  %4930 = vmatpush2.msra.mxu0 0.0
  %4931 = vmatprep.subr.mxu0 0.0
  %4932 = vmatpush2.msra.mxu0 0.0
  %4933 = vmatprep.subr.mxu0 0.0
  %4934 = vmatpush2.msra.mxu0 0.0
  %4935 = vmatprep.mubr.f32.mxu0 0.0
  %4936 = vmatmul.mubr.f32.gmra.mxu0 %v4121
  %v4937 = vpop.f32.mrf.mxu0
  %v4938 = vadd.f32 0.0, %v4937
  %v4939 = vpop.f32.mrf.mxu0
  %4940 = vmatprep.mubr.f32.mxu0 0.0
  %4941 = vmatmul.mubr.f32.gmra.mxu0 %v4124
  %v4942 = vpop.f32.mrf.mxu0
  %v4943 = vadd.f32 0.0, %v4942
  %v4944 = vpop.f32.mrf.mxu0
  %4945 = vmatprep.mubr.f32.mxu0 0.0
  %4946 = vmatmul.mubr.f32.gmra.mxu0 %v4127
  %v4947 = vpop.f32.mrf.mxu0
  %v4948 = vadd.f32 0.0, %v4947
  %v4949 = vpop.f32.mrf.mxu0
  %4950 = vmatprep.mubr.f32.mxu0 0.0
  %4951 = vmatmul.mubr.f32.gmra.mxu0 %v4130
  %v4952 = vpop.f32.mrf.mxu0
  %v4953 = vadd.f32 0.0, %v4952
  %v4954 = vpop.f32.mrf.mxu0
  %4955 = vdwg.mxu0
  %s4956 = scalar_lea.vmem %s2, 192
  %v4957 = vld [vmem:[%s4956] sm:$0xff]
  %v4958 = vld [vmem:[%s4956 + $0x8] sm:$0xff]
  %v4959 = vld [vmem:[%s4956 + $0x10] sm:$0xff]
  %v4960 = vld [vmem:[%s4956 + $0x18] sm:$0xff]
  %v4961 = vld [vmem:[%s4956 + $0x20] sm:$0xff]
  %v4962 = vld [vmem:[%s4956 + $0x28] sm:$0xff]
  %v4963 = vld [vmem:[%s4956 + $0x30] sm:$0xff]
  %v4964 = vld [vmem:[%s4956 + $0x38] sm:$0xff]
  %v4965 = vld [vmem:[%s4956 + $0x40] sm:$0xff]
  %v4966 = vld [vmem:[%s4956 + $0x48] sm:$0xff]
  %v4967 = vld [vmem:[%s4956 + $0x50] sm:$0xff]
  %v4968 = vld [vmem:[%s4956 + $0x58] sm:$0xff]
  %v4970 = vsel %vm2607, %v4959, 0
  %v4973 = vsel %vm2607, %v4962, 0
  %v4976 = vsel %vm2607, %v4965, 0
  %v4979 = vsel %vm2607, %v4968, 0
  %4981 = vmatprep.subr.mxu0 0.0
  %4982 = vmatpush1.msra.mxu0 %v4493
  %4983 = vmatprep.subr.mxu0 0.0
  %4984 = vmatpush1.msra.mxu0 %v4488
  %4985 = vmatprep.subr.mxu0 0.0
  %4986 = vmatpush1.msra.mxu0 %v4483
  %4987 = vmatprep.subr.mxu0 0.0
  %4988 = vmatpush1.msra.mxu0 %v4478
  %4989 = vmatprep.subr.mxu0 0.0
  %4990 = vmatpush1.msra.mxu0 %v4401
  %4991 = vmatprep.subr.mxu0 0.0
  %4992 = vmatpush1.msra.mxu0 %v4396
  %4993 = vmatprep.subr.mxu0 0.0
  %4994 = vmatpush1.msra.mxu0 %v4391
  %4995 = vmatprep.subr.mxu0 0.0
  %4996 = vmatpush1.msra.mxu0 %v4386
  %4997 = vmatprep.subr.mxu0 0.0
  %4998 = vmatpush1.msra.mxu0 %v4309
  %4999 = vmatprep.subr.mxu0 0.0
  %5000 = vmatpush1.msra.mxu0 %v4304
  %5001 = vmatprep.subr.mxu0 0.0
  %5002 = vmatpush1.msra.mxu0 %v4299
  %5003 = vmatprep.subr.mxu0 0.0
  %5004 = vmatpush1.msra.mxu0 %v4294
  %5005 = vmatprep.subr.mxu0 0.0
  %5006 = vmatpush1.msra.mxu0 %v4217
  %5007 = vmatprep.subr.mxu0 0.0
  %5008 = vmatpush1.msra.mxu0 %v4212
  %5009 = vmatprep.subr.mxu0 0.0
  %5010 = vmatpush1.msra.mxu0 %v4207
  %5011 = vmatprep.subr.mxu0 0.0
  %5012 = vmatpush1.msra.mxu0 %v4202
  %5013 = vmatprep.subr.mxu0 0.0
  %5014 = vmatpush2.msra.mxu0 %v4861
  %5015 = vmatprep.subr.mxu0 0.0
  %5016 = vmatpush2.msra.mxu0 %v4856
  %5017 = vmatprep.subr.mxu0 0.0
  %5018 = vmatpush2.msra.mxu0 %v4851
  %5019 = vmatprep.subr.mxu0 0.0
  %5020 = vmatpush2.msra.mxu0 %v4846
  %5021 = vmatprep.subr.mxu0 0.0
  %5022 = vmatpush2.msra.mxu0 %v4769
  %5023 = vmatprep.subr.mxu0 0.0
  %5024 = vmatpush2.msra.mxu0 %v4764
  %5025 = vmatprep.subr.mxu0 0.0
  %5026 = vmatpush2.msra.mxu0 %v4759
  %5027 = vmatprep.subr.mxu0 0.0
  %5028 = vmatpush2.msra.mxu0 %v4754
  %5029 = vmatprep.subr.mxu0 0.0
  %5030 = vmatpush2.msra.mxu0 %v4677
  %5031 = vmatprep.subr.mxu0 0.0
  %5032 = vmatpush2.msra.mxu0 %v4672
  %5033 = vmatprep.subr.mxu0 0.0
  %5034 = vmatpush2.msra.mxu0 %v4667
  %5035 = vmatprep.subr.mxu0 0.0
  %5036 = vmatpush2.msra.mxu0 %v4662
  %5037 = vmatprep.subr.mxu0 0.0
  %5038 = vmatpush2.msra.mxu0 %v4585
  %5039 = vmatprep.subr.mxu0 0.0
  %5040 = vmatpush2.msra.mxu0 %v4580
  %5041 = vmatprep.subr.mxu0 0.0
  %5042 = vmatpush2.msra.mxu0 %v4575
  %5043 = vmatprep.subr.mxu0 0.0
  %5044 = vmatpush2.msra.mxu0 %v4570
  %5045 = vmatprep.mubr.f32.mxu0 %v4958
  %5046 = vmatmul.mubr.f32.gmra.mxu0 %v4957
  %v5047 = vpop.f32.mrf.mxu0
  %v5048 = vadd.f32 0.0, %v5047
  %v5049 = vpop.f32.mrf.mxu0
  %5050 = vmatprep.mubr.f32.mxu0 %v4961
  %5051 = vmatmul.mubr.f32.gmra.mxu0 %v4960
  %v5052 = vpop.f32.mrf.mxu0
  %v5053 = vadd.f32 0.0, %v5052
  %v5054 = vpop.f32.mrf.mxu0
  %5055 = vmatprep.mubr.f32.mxu0 %v4964
  %5056 = vmatmul.mubr.f32.gmra.mxu0 %v4963
  %v5057 = vpop.f32.mrf.mxu0
  %v5058 = vadd.f32 0.0, %v5057
  %v5059 = vpop.f32.mrf.mxu0
  %5060 = vmatprep.mubr.f32.mxu0 %v4967
  %5061 = vmatmul.mubr.f32.gmra.mxu0 %v4966
  %v5062 = vpop.f32.mrf.mxu0
  %v5063 = vadd.f32 0.0, %v5062
  %v5064 = vpop.f32.mrf.mxu0
  %5065 = vdwg.mxu0
  %5066 = vmatprep.subr.mxu0 0.0
  %5067 = vmatpush1.msra.mxu0 0.0
  %5068 = vmatprep.subr.mxu0 0.0
  %5069 = vmatpush1.msra.mxu0 0.0
  %5070 = vmatprep.subr.mxu0 0.0
  %5071 = vmatpush1.msra.mxu0 0.0
  %5072 = vmatprep.subr.mxu0 0.0
  %5073 = vmatpush1.msra.mxu0 0.0
  %5074 = vmatprep.subr.mxu0 0.0
  %5075 = vmatpush1.msra.mxu0 0.0
  %5076 = vmatprep.subr.mxu0 0.0
  %5077 = vmatpush1.msra.mxu0 0.0
  %5078 = vmatprep.subr.mxu0 0.0
  %5079 = vmatpush1.msra.mxu0 0.0
  %5080 = vmatprep.subr.mxu0 0.0
  %5081 = vmatpush1.msra.mxu0 0.0
  %5082 = vmatprep.subr.mxu0 0.0
  %5083 = vmatpush1.msra.mxu0 0.0
  %5084 = vmatprep.subr.mxu0 0.0
  %5085 = vmatpush1.msra.mxu0 0.0
  %5086 = vmatprep.subr.mxu0 0.0
  %5087 = vmatpush1.msra.mxu0 0.0
  %5088 = vmatprep.subr.mxu0 0.0
  %5089 = vmatpush1.msra.mxu0 0.0
  %5090 = vmatprep.subr.mxu0 0.0
  %5091 = vmatpush1.msra.mxu0 %v4953
  %5092 = vmatprep.subr.mxu0 0.0
  %5093 = vmatpush1.msra.mxu0 %v4948
  %5094 = vmatprep.subr.mxu0 0.0
  %5095 = vmatpush1.msra.mxu0 %v4943
  %5096 = vmatprep.subr.mxu0 0.0
  %5097 = vmatpush1.msra.mxu0 %v4938
  %5098 = vmatprep.subr.mxu0 0.0
  %5099 = vmatpush2.msra.mxu0 0.0
  %5100 = vmatprep.subr.mxu0 0.0
  %5101 = vmatpush2.msra.mxu0 0.0
  %5102 = vmatprep.subr.mxu0 0.0
  %5103 = vmatpush2.msra.mxu0 0.0
  %5104 = vmatprep.subr.mxu0 0.0
  %5105 = vmatpush2.msra.mxu0 0.0
  %5106 = vmatprep.subr.mxu0 0.0
  %5107 = vmatpush2.msra.mxu0 0.0
  %5108 = vmatprep.subr.mxu0 0.0
  %5109 = vmatpush2.msra.mxu0 0.0
  %5110 = vmatprep.subr.mxu0 0.0
  %5111 = vmatpush2.msra.mxu0 0.0
  %5112 = vmatprep.subr.mxu0 0.0
  %5113 = vmatpush2.msra.mxu0 0.0
  %5114 = vmatprep.subr.mxu0 0.0
  %5115 = vmatpush2.msra.mxu0 0.0
  %5116 = vmatprep.subr.mxu0 0.0
  %5117 = vmatpush2.msra.mxu0 0.0
  %5118 = vmatprep.subr.mxu0 0.0
  %5119 = vmatpush2.msra.mxu0 0.0
  %5120 = vmatprep.subr.mxu0 0.0
  %5121 = vmatpush2.msra.mxu0 0.0
  %5122 = vmatprep.subr.mxu0 0.0
  %5123 = vmatpush2.msra.mxu0 0.0
  %5124 = vmatprep.subr.mxu0 0.0
  %5125 = vmatpush2.msra.mxu0 0.0
  %5126 = vmatprep.subr.mxu0 0.0
  %5127 = vmatpush2.msra.mxu0 0.0
  %5128 = vmatprep.subr.mxu0 0.0
  %5129 = vmatpush2.msra.mxu0 0.0
  %5130 = vmatprep.mubr.f32.mxu0 0.0
  %5131 = vmatmul.mubr.f32.gmra.mxu0 %v4970
  %v5132 = vpop.f32.mrf.mxu0
  %v5133 = vadd.f32 %v5048, %v5132
  %v5134 = vpop.f32.mrf.mxu0
  %5135 = vmatprep.mubr.f32.mxu0 0.0
  %5136 = vmatmul.mubr.f32.gmra.mxu0 %v4973
  %v5137 = vpop.f32.mrf.mxu0
  %v5138 = vadd.f32 %v5053, %v5137
  %v5139 = vpop.f32.mrf.mxu0
  %5140 = vmatprep.mubr.f32.mxu0 0.0
  %5141 = vmatmul.mubr.f32.gmra.mxu0 %v4976
  %v5142 = vpop.f32.mrf.mxu0
  %v5143 = vadd.f32 %v5058, %v5142
  %v5144 = vpop.f32.mrf.mxu0
  %5145 = vmatprep.mubr.f32.mxu0 0.0
  %5146 = vmatmul.mubr.f32.gmra.mxu0 %v4979
  %v5147 = vpop.f32.mrf.mxu0
  %v5148 = vadd.f32 %v5063, %v5147
  %v5149 = vpop.f32.mrf.mxu0
  %5150 = vdwg.mxu0
  %vm5151 = vcmask 15360
  %v5152 = vsel %vm5151, %v5133, 0.0
  %5153 = vadd.xlane.f32.xlu0 %v5152
  %v5154 = vpop.xlane.xlu0 %5153
  %v5155 = vsel %vm5151, %v5138, 0.0
  %5156 = vadd.xlane.f32.xlu0 %v5155
  %v5157 = vpop.xlane.xlu0 %5156
  %v5158 = vsel %vm5151, %v5143, 0.0
  %5159 = vadd.xlane.f32.xlu0 %v5158
  %v5160 = vpop.xlane.xlu0 %5159
  %v5161 = vsel %vm5151, %v5148, 0.0
  %5162 = vadd.xlane.f32.xlu0 %v5161
  %v5163 = vpop.xlane.xlu0 %5162
  %v5164 = vmul.f32 %v5154, 0.5
  %v5165 = vmul.f32 %v5157, 0.5
  %v5166 = vmul.f32 %v5160, 0.5
  %v5167 = vmul.f32 %v5163, 0.5
  %v5168 = vsub.f32 %v5133, %v5164
  %v5169 = vsub.f32 %v5138, %v5165
  %v5170 = vsub.f32 %v5143, %v5166
  %v5171 = vsub.f32 %v5148, %v5167
  %v5172 = vmul.f32 %v5168, %v5168
  %v5173 = vmul.f32 %v5169, %v5169
  %v5174 = vmul.f32 %v5170, %v5170
  %v5175 = vmul.f32 %v5171, %v5171
  %v5176 = vsel %vm5151, %v5172, 0.0
  %5177 = vadd.xlane.f32.xlu0 %v5176
  %v5178 = vpop.xlane.xlu0 %5177
  %v5179 = vsel %vm5151, %v5173, 0.0
  %5180 = vadd.xlane.f32.xlu0 %v5179
  %v5181 = vpop.xlane.xlu0 %5180
  %v5182 = vsel %vm5151, %v5174, 0.0
  %5183 = vadd.xlane.f32.xlu0 %v5182
  %v5184 = vpop.xlane.xlu0 %5183
  %v5185 = vsel %vm5151, %v5175, 0.0
  %5186 = vadd.xlane.f32.xlu0 %v5185
  %v5187 = vpop.xlane.xlu0 %5186
  %v5188 = vmul.f32 %v5178, 0.5
  %v5189 = vmul.f32 %v5181, 0.5
  %v5190 = vmul.f32 %v5184, 0.5
  %v5191 = vmul.f32 %v5187, 0.5
  %v5192 = vadd.f32 %v5188, 1e-05
  %v5193 = vadd.f32 %v5189, 1e-05
  %v5194 = vadd.f32 %v5190, 1e-05
  %v5195 = vadd.f32 %v5191, 1e-05
  %v5196 = vrsqrt.pop %v5192
  %v5197 = vrsqrt.pop %v5193
  %v5198 = vrsqrt.pop %v5194
  %v5199 = vrsqrt.pop %v5195
  %v5200 = vmul.f32 %v297, %v5196
  %v5201 = vmul.f32 %v298, %v5197
  %v5202 = vmul.f32 %v299, %v5198
  %v5203 = vmul.f32 %v300, %v5199
  %5205 = vset.pattern.permute.xlu0 6
  %5206 = vperm.xlu0 %5205, %v5200
  %v5207 = vpop.permute.xlu0 %5206
  %5210 = vset.pattern.permute.xlu0 6
  %5211 = vperm.xlu0 %5210, %v5201
  %v5212 = vpop.permute.xlu0 %5211
  %5215 = vset.pattern.permute.xlu0 6
  %5216 = vperm.xlu0 %5215, %v5202
  %v5217 = vpop.permute.xlu0 %5216
  %5220 = vset.pattern.permute.xlu0 6
  %5221 = vperm.xlu0 %5220, %v5203
  %v5222 = vpop.permute.xlu0 %5221
  %v5224 = vmul.f32 %v5168, %v5207
  %v5225 = vmul.f32 %v5169, %v5212
  %v5226 = vmul.f32 %v5170, %v5217
  %v5227 = vmul.f32 %v5171, %v5222
  %5228 = vset.pattern.permute.xlu0 7
  %5229 = vperm.xlu0 %5228, %v297
  %v5230 = vpop.permute.xlu0 %5229
  %5232 = vset.pattern.permute.xlu0 7
  %5233 = vperm.xlu0 %5232, %v298
  %v5234 = vpop.permute.xlu0 %5233
  %5236 = vset.pattern.permute.xlu0 7
  %5237 = vperm.xlu0 %5236, %v299
  %v5238 = vpop.permute.xlu0 %5237
  %5240 = vset.pattern.permute.xlu0 7
  %5241 = vperm.xlu0 %5240, %v300
  %v5242 = vpop.permute.xlu0 %5241
  %v5244 = vadd.f32 %v5224, %v5230
  %v5245 = vadd.f32 %v5225, %v5234
  %v5246 = vadd.f32 %v5226, %v5238
  %v5247 = vadd.f32 %v5227, %v5242
  %v5248 = vmax.f32 %v5244, 0.0
  %v5249 = vmax.f32 %v5245, 0.0
  %v5250 = vmax.f32 %v5246, 0.0
  %v5251 = vmax.f32 %v5247, 0.0
  %5252 = vst.msk [vmem:[%s7] sm:$0xff] %vm5151, %v5248
  %5253 = vst.msk [vmem:[%s7 + $0x8] sm:$0xff] %vm5151, %v5249
  %5254 = vst.msk [vmem:[%s7 + $0x10] sm:$0xff] %vm5151, %v5250
  %5255 = vst.msk [vmem:[%s7 + $0x18] sm:$0xff] %vm5151, %v5251
  // Predicated region
  $region30: #{conv_module_forward.1} parent=0 // pred_check
    _
  $region31: #{conv_module_forward.1} parent=0 // pred_check_branch
    %5257 = sbr.rel (0) target = $region33
  $region32: #{conv_module_forward.1} parent=0 // pred_region
    _
  $region33: #{conv_module_forward.1} parent=0 // pred_fallthru
    _
  // Predicated region
  $region34: #{conv_module_forward.1} parent=0 // pred_check
    _
  $region35: #{conv_module_forward.1} parent=0 // pred_check_branch
    %5259 = sbr.rel (0) target = $region37
  $region36: #{conv_module_forward.1} parent=0 // pred_region
    _
  $region37: #{conv_module_forward.1} parent=0 // pred_fallthru
    _

</llo_original>
